<compile_context>
chip_gen: v7x
topology: tpu7x:2x2x1
jax: 0.10.0
libtpu: 0.0.40
codegen_flags: <defaults>
</compile_context>

<pallas_src>
import functools

import jax
import jax.numpy as jnp
import numpy as np
from jax.experimental import pallas as pl
from jax.experimental.pallas import tpu as pltpu

LN_EPS = 1e-5
MAX_LENGTH = 16


# ----------------------------------------------------------------------------
# helpers
# ----------------------------------------------------------------------------
def _layer_norm(x, gamma, beta):
    mu = jnp.mean(x, axis=-1, keepdims=True)
    var = jnp.mean((x - mu) ** 2, axis=-1, keepdims=True)
    return (x - mu) * jax.lax.rsqrt(var + LN_EPS) * gamma + beta


def _pick_tile(n, target, align):
    """Largest divisor of n that is <= target and a multiple of `align`;
    fall back to the full dim (always legal as a block size)."""
    best = None
    d = 1
    while d * d <= n:
        if n % d == 0:
            for c in (d, n // d):
                if c <= target and c % align == 0 and (best is None or c > best):
                    best = c
        d += 1
    return best if best is not None else n


# ----------------------------------------------------------------------------
# Fused transformer stack kernel: grid=(num_layers,), activations VMEM-resident
# ----------------------------------------------------------------------------
def gpt_stack_kernel(
    x_ref,
    wq_ref, bq_ref, wk_ref, bk_ref, wv_ref, bv_ref, wo_ref, bo_ref,
    g1_ref, be1_ref, w1_ref, b1_ref, w2_ref, b2_ref, g2_ref, be2_ref,
    o_ref, h_scr, ctx_scr, *, num_heads, batch, seq,
):
    layer = pl.program_id(0)

    @pl.when(layer == 0)
    def _():
        h_scr[...] = x_ref[...].astype(jnp.float32)

    x = h_scr[...]                                     # (R, E) f32 resident slab
    R, E = x.shape
    H = num_heads
    D = E // H
    scale = 1.0 / float(np.sqrt(D))

    # ---- Multi-head self-attention -------------------------------------
    # QKV projections over all B*S rows at once (full-row MXU utilization).
    q = jnp.dot(x, wq_ref[0], preferred_element_type=jnp.float32) + bq_ref[0]
    k = jnp.dot(x, wk_ref[0], preferred_element_type=jnp.float32) + bk_ref[0]
    v = jnp.dot(x, wv_ref[0], preferred_element_type=jnp.float32) + bv_ref[0]
    q = q * scale                                      # fold 1/sqrt(D) into q

    # Per-batch scores/softmax/context; heads batched into one 3-D contraction.
    # Attention is intentionally unmasked (matches the reference forward()).
    # TODO(synk): for long sequences replace with a KV-tiled online-softmax
    # (flash-style) loop; the dense (H,S,S) f32 score tensor does not scale.
    for b in range(batch):
        lo = b * seq
        qb = q[lo:lo + seq].reshape(seq, H, D)
        kb = k[lo:lo + seq].reshape(seq, H, D)
        vb = v[lo:lo + seq].reshape(seq, H, D)
        s = jnp.einsum("qhd,khd->hqk", qb, kb, preferred_element_type=jnp.float32)
        s = s - jnp.max(s, axis=-1, keepdims=True)
        p = jnp.exp(s)
        p = p / jnp.sum(p, axis=-1, keepdims=True)      # exact divide (see review)
        cb = jnp.einsum("hqk,khd->qhd", p, vb, preferred_element_type=jnp.float32)
        ctx_scr[pl.ds(lo, seq), :] = cb.reshape(seq, E)

    attn = jnp.dot(ctx_scr[...], wo_ref[0], preferred_element_type=jnp.float32) + bo_ref[0]
    h1 = _layer_norm(x + attn, g1_ref[0], be1_ref[0])

    # ---- Feed-forward (ReLU MLP, hidden = 4E) ---------------------------
    ff = jnp.dot(h1, w1_ref[0], preferred_element_type=jnp.float32) + b1_ref[0]
    ff = jnp.maximum(ff, 0.0)
    ff = jnp.dot(ff, w2_ref[0], preferred_element_type=jnp.float32) + b2_ref[0]
    h2 = _layer_norm(h1 + ff, g2_ref[0], be2_ref[0])

    h_scr[...] = h2                                     # carry to next layer

    @pl.when(layer == pl.num_programs(0) - 1)
    def _():
        o_ref[...] = h2.astype(o_ref.dtype)             # single HBM writeback


def run_gpt_stack(x2, stacked, num_heads, batch, seq):
    """x2: (B*S, E) embeddings -> final block output (B*S, E)."""
    R, E = x2.shape
    names = ("wq", "bq", "wk", "bk", "wv", "bv", "wo", "bo",
             "g1", "be1", "w1", "b1", "w2", "b2", "g2", "be2")
    args = [stacked[n] for n in names]
    L = args[0].shape[0]

    in_specs = [pl.BlockSpec((R, E), lambda l: (0, 0))]
    for a in args:                                      # stacked [L, ...] weights
        in_specs.append(pl.BlockSpec((1,) + a.shape[1:], lambda l: (l, 0, 0)))

    kernel = functools.partial(gpt_stack_kernel, num_heads=num_heads,
                               batch=batch, seq=seq)
    return pl.pallas_call(
        kernel,
        out_shape=jax.ShapeDtypeStruct((R, E), x2.dtype),
        grid=(L,),
        in_specs=in_specs,
        out_specs=pl.BlockSpec((R, E), lambda l: (0, 0)),
        scratch_shapes=[pltpu.VMEM((R, E), jnp.float32),   # activation slab carry
                        pltpu.VMEM((R, E), jnp.float32)],  # attention context
        compiler_params=pltpu.CompilerParams(
            dimension_semantics=("arbitrary",),            # layers are sequential
            vmem_limit_bytes=32 * 1024 * 1024),
    )(x2, *args)


# ----------------------------------------------------------------------------
# LM head kernel: (rows, vocab)-tiled, lane-dense (padded) vocab axis
# ----------------------------------------------------------------------------
def lm_head_kernel(x_ref, w_ref, b_ref, o_ref):
    x = x_ref[...].astype(jnp.float32)
    y = jnp.dot(x, w_ref[...], preferred_element_type=jnp.float32) + b_ref[...]
    o_ref[...] = y.astype(o_ref.dtype)


def run_lm_head(x2, w_pad, b_pad):
    R, E = x2.shape
    Vp = w_pad.shape[1]
    tr = _pick_tile(R, 512, 8)
    tv = _pick_tile(Vp, 1024, 128)
    return pl.pallas_call(
        lm_head_kernel,
        out_shape=jax.ShapeDtypeStruct((R, Vp), x2.dtype),
        grid=(R // tr, Vp // tv),
        in_specs=[pl.BlockSpec((tr, E), lambda i, j: (i, 0)),
                  pl.BlockSpec((E, tv), lambda i, j: (0, j)),
                  pl.BlockSpec((1, tv), lambda i, j: (0, j))],
        out_specs=pl.BlockSpec((tr, tv), lambda i, j: (i, j)),
        compiler_params=pltpu.CompilerParams(
            dimension_semantics=("parallel", "parallel"),
            vmem_limit_bytes=32 * 1024 * 1024),
    )(x2, w_pad, b_pad)


# ----------------------------------------------------------------------------
# Full forward
# ----------------------------------------------------------------------------
def gpt_forward(token_ids, params, num_heads):
    """token_ids: (B, S) int32 -> logits (B, S, V)."""
    B, S = token_ids.shape
    E = params["tok_emb"].shape[1]
    V = params["fc_w"].shape[1]

    # Embedding lookups are glue (gathers) in plain JAX.
    x = params["tok_emb"][token_ids] + params["pos_emb"][jnp.arange(S)][None, :, :]
    x2 = x.reshape(B * S, E)

    x2 = run_gpt_stack(x2, params["stacked"], num_heads, B, S)

    # Pad vocab to a multiple of 128 so the LM-head output block is lane-dense.
    Vp = ((V + 127) // 128) * 128
    w_pad = jnp.pad(params["fc_w"], ((0, 0), (0, Vp - V)))
    b_pad = jnp.pad(params["fc_b"], ((0, 0), (0, Vp - V)))
    logits = run_lm_head(x2, w_pad, b_pad)[:, :V]
    return logits.reshape(B, S, V)


# ----------------------------------------------------------------------------
# Pure-JAX reference (for correctness check)
# ----------------------------------------------------------------------------
def gpt_reference(token_ids, params, num_heads):
    B, S = token_ids.shape
    st = params["stacked"]
    x = params["tok_emb"][token_ids] + params["pos_emb"][jnp.arange(S)][None, :, :]
    L = st["wq"].shape[0]
    for i in range(L):
        E = x.shape[-1]
        D = E // num_heads
        q = x @ st["wq"][i] + st["bq"][i]
        k = x @ st["wk"][i] + st["bk"][i]
        v = x @ st["wv"][i] + st["bv"][i]
        q = q.reshape(B, S, num_heads, D).transpose(0, 2, 1, 3)
        k = k.reshape(B, S, num_heads, D).transpose(0, 2, 1, 3)
        v = v.reshape(B, S, num_heads, D).transpose(0, 2, 1, 3)
        s = jnp.einsum("bhqd,bhkd->bhqk", q, k) / jnp.sqrt(jnp.float32(D))
        p = jax.nn.softmax(s, axis=-1)
        a = jnp.einsum("bhqk,bhkd->bhqd", p, v).transpose(0, 2, 1, 3).reshape(B, S, E)
        a = a @ st["wo"][i] + st["bo"][i]
        h1 = _layer_norm(x + a, st["g1"][i], st["be1"][i])
        ff = jnp.maximum(h1 @ st["w1"][i] + st["b1"][i], 0.0) @ st["w2"][i] + st["b2"][i]
        x = _layer_norm(h1 + ff, st["g2"][i], st["be2"][i])
    return x @ params["fc_w"] + params["fc_b"]


# ----------------------------------------------------------------------------
# Deterministic parameter init (per-layer weights stacked along axis 0)
# ----------------------------------------------------------------------------
def init_params(key, vocab_size, embed_size, num_layers):
    ff_size = 4 * embed_size
    keys = iter(jax.random.split(key, 4 + 6 * num_layers))
    nrm = lambda shape: 0.02 * jax.random.normal(next(keys), shape, jnp.float32)

    def stack_w(shape):
        return jnp.stack([nrm(shape) for _ in range(num_layers)], axis=0)

    zeros = lambda last: jnp.zeros((num_layers, 1, last), jnp.float32)
    ones = lambda last: jnp.ones((num_layers, 1, last), jnp.float32)

    params = {
        "tok_emb": nrm((vocab_size, embed_size)),
        "pos_emb": nrm((MAX_LENGTH, embed_size)),
        "fc_w": nrm((embed_size, vocab_size)),
        "fc_b": jnp.zeros((1, vocab_size), jnp.float32),
        "stacked": {
            "wq": stack_w((embed_size, embed_size)), "bq": zeros(embed_size),
            "wk": stack_w((embed_size, embed_size)), "bk": zeros(embed_size),
            "wv": stack_w((embed_size, embed_size)), "bv": zeros(embed_size),
            "wo": stack_w((embed_size, embed_size)), "bo": zeros(embed_size),
            "g1": ones(embed_size), "be1": zeros(embed_size),
            "w1": stack_w((embed_size, ff_size)), "b1": zeros(ff_size),
            "w2": stack_w((ff_size, embed_size)), "b2": zeros(embed_size),
            "g2": ones(embed_size), "be2": zeros(embed_size),
        },
    }
    return params


if __name__ == "__main__":
    VOCAB = 64
    EMBED = 32
    HEADS = 4
    LAYERS = 2
    B, S = 2, 8

    key = jax.random.PRNGKey(0)
    k_tok, k_param = jax.random.split(key)
    params = init_params(k_param, VOCAB, EMBED, LAYERS)
    token_ids = jax.random.randint(k_tok, (B, S), 0, VOCAB, dtype=jnp.int32)

    logits = jax.block_until_ready(gpt_forward(token_ids, params, HEADS))
    ref = jax.block_until_ready(gpt_reference(token_ids, params, HEADS))

    assert logits.shape == (B, S, VOCAB)
    assert bool(jnp.all(jnp.isfinite(logits)))
    np.testing.assert_allclose(np.asarray(logits), np.asarray(ref), rtol=5e-2, atol=5e-2)

    print("KERNEL_OK")
</pallas_src>

<mosaic_0001>
module attributes {stable_mosaic.version = 11 : i64} {
  func.func @gpt_stack_kernel(%arg0: i32, %arg1: memref<16x32xf32, #tpu.memory_space<vmem>>, %arg2: memref<1x32x32xf32, #tpu.memory_space<vmem>>, %arg3: memref<1x1x32xf32, #tpu.memory_space<vmem>>, %arg4: memref<1x32x32xf32, #tpu.memory_space<vmem>>, %arg5: memref<1x1x32xf32, #tpu.memory_space<vmem>>, %arg6: memref<1x32x32xf32, #tpu.memory_space<vmem>>, %arg7: memref<1x1x32xf32, #tpu.memory_space<vmem>>, %arg8: memref<1x32x32xf32, #tpu.memory_space<vmem>>, %arg9: memref<1x1x32xf32, #tpu.memory_space<vmem>>, %arg10: memref<1x1x32xf32, #tpu.memory_space<vmem>>, %arg11: memref<1x1x32xf32, #tpu.memory_space<vmem>>, %arg12: memref<1x32x128xf32, #tpu.memory_space<vmem>>, %arg13: memref<1x1x128xf32, #tpu.memory_space<vmem>>, %arg14: memref<1x128x32xf32, #tpu.memory_space<vmem>>, %arg15: memref<1x1x32xf32, #tpu.memory_space<vmem>>, %arg16: memref<1x1x32xf32, #tpu.memory_space<vmem>>, %arg17: memref<1x1x32xf32, #tpu.memory_space<vmem>>, %arg18: memref<16x32xf32, #tpu.memory_space<vmem>>, %arg19: memref<16x32xf32, #tpu.memory_space<vmem>>, %arg20: memref<16x32xf32, #tpu.memory_space<vmem>>) attributes {dimension_semantics = [#tpu.dimension_semantics<arbitrary>], iteration_bounds = array<i64: 2>, scalar_prefetch = 0 : i64, scratch_operands = 2 : i64, tpu.core_type = #tpu.core_type<tc>, window_params = [{pipeline_mode = #tpu.pipeline_mode<synchronous>, transform_indices = @transform_0, window_bounds = array<i64: 16, 32>}, {transform_indices = @transform_1, window_bounds = array<i64: 1, 32, 32>}, {transform_indices = @transform_2, window_bounds = array<i64: 1, 1, 32>}, {transform_indices = @transform_3, window_bounds = array<i64: 1, 32, 32>}, {transform_indices = @transform_4, window_bounds = array<i64: 1, 1, 32>}, {transform_indices = @transform_5, window_bounds = array<i64: 1, 32, 32>}, {transform_indices = @transform_6, window_bounds = array<i64: 1, 1, 32>}, {transform_indices = @transform_7, window_bounds = array<i64: 1, 32, 32>}, {transform_indices = @transform_8, window_bounds = array<i64: 1, 1, 32>}, {transform_indices = @transform_9, window_bounds = array<i64: 1, 1, 32>}, {transform_indices = @transform_10, window_bounds = array<i64: 1, 1, 32>}, {transform_indices = @transform_11, window_bounds = array<i64: 1, 32, 128>}, {transform_indices = @transform_12, window_bounds = array<i64: 1, 1, 128>}, {transform_indices = @transform_13, window_bounds = array<i64: 1, 128, 32>}, {transform_indices = @transform_14, window_bounds = array<i64: 1, 1, 32>}, {transform_indices = @transform_15, window_bounds = array<i64: 1, 1, 32>}, {transform_indices = @transform_16, window_bounds = array<i64: 1, 1, 32>}, {pipeline_mode = #tpu.pipeline_mode<synchronous>, transform_indices = @transform_17, window_bounds = array<i64: 16, 32>}]} {
    %c0_i32 = arith.constant 0 : i32
    %0 = arith.cmpi eq, %arg0, %c0_i32 : i32
    %1 = arith.extui %0 : i1 to i32
    %c0_i32_0 = arith.constant 0 : i32
    %2 = arith.cmpi ne, %1, %c0_i32_0 : i32
    scf.if %2 {
      %c0_83 = arith.constant 0 : index
      %c0_84 = arith.constant 0 : index
      %149 = vector.load %arg1[%c0_83, %c0_84] : memref<16x32xf32, #tpu.memory_space<vmem>>, vector<16x32xf32>
      %c0_85 = arith.constant 0 : index
      %c0_86 = arith.constant 0 : index
      %150 = vector.load %arg19[%c0_85, %c0_86] : memref<16x32xf32, #tpu.memory_space<vmem>>, vector<16x32xf32>
      tpu.vector_store %arg19[%c0_85, %c0_86], %149 {strides = array<i32>} : memref<16x32xf32, #tpu.memory_space<vmem>>, vector<16x32xf32>,
    } else {
    }
    %c0 = arith.constant 0 : index
    %c0_1 = arith.constant 0 : index
    %3 = vector.load %arg19[%c0, %c0_1] : memref<16x32xf32, #tpu.memory_space<vmem>>, vector<16x32xf32>
    %c0_2 = arith.constant 0 : index
    %c0_3 = arith.constant 0 : index
    %c0_4 = arith.constant 0 : index
    %4 = vector.load %arg2[%c0_2, %c0_3, %c0_4] : memref<1x32x32xf32, #tpu.memory_space<vmem>>, vector<1x32x32xf32>
    %5 = vector.shape_cast %4 : vector<1x32x32xf32> to vector<32x32xf32>
    %cst = arith.constant dense<0.000000e+00> : vector<16x32xf32>
    %6 = tpu.matmul %3, %5, %cst {dimension_numbers = #tpu.dot_dimension_numbers<[1], [0], [0], [1], [0, 0, 1, 1], [], []>} : vector<16x32xf32>, vector<32x32xf32>, vector<16x32xf32> -> vector<16x32xf32>
    %c0_5 = arith.constant 0 : index
    %c0_6 = arith.constant 0 : index
    %c0_7 = arith.constant 0 : index
    %7 = vector.load %arg3[%c0_5, %c0_6, %c0_7] : memref<1x1x32xf32, #tpu.memory_space<vmem>>, vector<1x1x32xf32>
    %8 = vector.shape_cast %7 : vector<1x1x32xf32> to vector<1x32xf32>
    %9 = vector.broadcast %8 : vector<1x32xf32> to vector<16x32xf32>
    %10 = arith.addf %6, %9 : vector<16x32xf32>
    %c0_8 = arith.constant 0 : index
    %c0_9 = arith.constant 0 : index
    %c0_10 = arith.constant 0 : index
    %11 = vector.load %arg4[%c0_8, %c0_9, %c0_10] : memref<1x32x32xf32, #tpu.memory_space<vmem>>, vector<1x32x32xf32>
    %12 = vector.shape_cast %11 : vector<1x32x32xf32> to vector<32x32xf32>
    %cst_11 = arith.constant dense<0.000000e+00> : vector<16x32xf32>
    %13 = tpu.matmul %3, %12, %cst_11 {dimension_numbers = #tpu.dot_dimension_numbers<[1], [0], [0], [1], [0, 0, 1, 1], [], []>} : vector<16x32xf32>, vector<32x32xf32>, vector<16x32xf32> -> vector<16x32xf32>
    %c0_12 = arith.constant 0 : index
    %c0_13 = arith.constant 0 : index
    %c0_14 = arith.constant 0 : index
    %14 = vector.load %arg5[%c0_12, %c0_13, %c0_14] : memref<1x1x32xf32, #tpu.memory_space<vmem>>, vector<1x1x32xf32>
    %15 = vector.shape_cast %14 : vector<1x1x32xf32> to vector<1x32xf32>
    %16 = vector.broadcast %15 : vector<1x32xf32> to vector<16x32xf32>
    %17 = arith.addf %13, %16 : vector<16x32xf32>
    %c0_15 = arith.constant 0 : index
    %c0_16 = arith.constant 0 : index
    %c0_17 = arith.constant 0 : index
    %18 = vector.load %arg6[%c0_15, %c0_16, %c0_17] : memref<1x32x32xf32, #tpu.memory_space<vmem>>, vector<1x32x32xf32>
    %19 = vector.shape_cast %18 : vector<1x32x32xf32> to vector<32x32xf32>
    %cst_18 = arith.constant dense<0.000000e+00> : vector<16x32xf32>
    %20 = tpu.matmul %3, %19, %cst_18 {dimension_numbers = #tpu.dot_dimension_numbers<[1], [0], [0], [1], [0, 0, 1, 1], [], []>} : vector<16x32xf32>, vector<32x32xf32>, vector<16x32xf32> -> vector<16x32xf32>
    %c0_19 = arith.constant 0 : index
    %c0_20 = arith.constant 0 : index
    %c0_21 = arith.constant 0 : index
    %21 = vector.load %arg7[%c0_19, %c0_20, %c0_21] : memref<1x1x32xf32, #tpu.memory_space<vmem>>, vector<1x1x32xf32>
    %22 = vector.shape_cast %21 : vector<1x1x32xf32> to vector<1x32xf32>
    %23 = vector.broadcast %22 : vector<1x32xf32> to vector<16x32xf32>
    %24 = arith.addf %20, %23 : vector<16x32xf32>
    %cst_22 = arith.constant 0.353553385 : f32
    %25 = vector.broadcast %cst_22 : f32 to vector<16x32xf32>
    %26 = arith.mulf %10, %25 : vector<16x32xf32>
    %27 = vector.extract_strided_slice %26 {offsets = [0, 0], sizes = [8, 32], strides = [1, 1]} : vector<16x32xf32> to vector<8x32xf32>
    %28 = vector.shape_cast %27 : vector<8x32xf32> to vector<8x4x8xf32>
    %29 = vector.extract_strided_slice %17 {offsets = [0, 0], sizes = [8, 32], strides = [1, 1]} : vector<16x32xf32> to vector<8x32xf32>
    %30 = vector.shape_cast %29 : vector<8x32xf32> to vector<8x4x8xf32>
    %31 = vector.extract_strided_slice %24 {offsets = [0, 0], sizes = [8, 32], strides = [1, 1]} : vector<16x32xf32> to vector<8x32xf32>
    %32 = vector.shape_cast %31 : vector<8x32xf32> to vector<8x4x8xf32>
    "tpu.trace_start"() <{level = 10 : i32, message = "qhd,khd->hqk"}> : () -> ()
    %cst_23 = arith.constant dense<0.000000e+00> : vector<4x8x8xf32>
    %33 = tpu.matmul %28, %30, %cst_23 {dimension_numbers = #tpu.dot_dimension_numbers<[2], [2], [0], [0], [0, 1, 0, 0, 1, 0], [1], [1]>} : vector<8x4x8xf32>, vector<8x4x8xf32>, vector<4x8x8xf32> -> vector<4x8x8xf32>
    "tpu.trace_stop"() : () -> ()
    %cst_24 = arith.constant dense<0xFF800000> : vector<4x8xf32>
    %34 = vector.multi_reduction <maximumf>, %33, %cst_24 [2] : vector<4x8x8xf32> to vector<4x8xf32>
    %35 = vector.shape_cast %34 : vector<4x8xf32> to vector<4x8x1xf32>
    %36 = vector.broadcast %35 : vector<4x8x1xf32> to vector<4x8x8xf32>
    %37 = arith.subf %33, %36 : vector<4x8x8xf32>
    %38 = math.exp %37 : vector<4x8x8xf32>
    %cst_25 = arith.constant dense<0.000000e+00> : vector<4x8xf32>
    %39 = vector.multi_reduction <add>, %38, %cst_25 [2] : vector<4x8x8xf32> to vector<4x8xf32>
    %40 = vector.shape_cast %39 : vector<4x8xf32> to vector<4x8x1xf32>
    %41 = vector.broadcast %40 : vector<4x8x1xf32> to vector<4x8x8xf32>
    %42 = arith.divf %38, %41 : vector<4x8x8xf32>
    "tpu.trace_start"() <{level = 10 : i32, message = "hqk,khd->qhd"}> : () -> ()
    %cst_26 = arith.constant dense<0.000000e+00> : vector<4x8x8xf32>
    %43 = tpu.matmul %32, %42, %cst_26 {dimension_numbers = #tpu.dot_dimension_numbers<[0], [2], [2], [1], [0, 1, 0, 2, 1, 1], [1], [0]>} : vector<8x4x8xf32>, vector<4x8x8xf32>, vector<4x8x8xf32> -> vector<4x8x8xf32>
    %44 = tpu.transpose %43, [2, 0, 1] : vector<4x8x8xf32> -> vector<8x4x8xf32>
    "tpu.trace_stop"() : () -> ()
    %45 = vector.shape_cast %44 : vector<8x4x8xf32> to vector<8x32xf32>
    %c0_27 = arith.constant 0 : index
    %c0_28 = arith.constant 0 : index
    %46 = vector.load %arg20[%c0_27, %c0_28] : memref<16x32xf32, #tpu.memory_space<vmem>>, vector<8x32xf32>
    tpu.vector_store %arg20[%c0_27, %c0_28], %45 {strides = array<i32>} : memref<16x32xf32, #tpu.memory_space<vmem>>, vector<8x32xf32>,
    %47 = vector.extract_strided_slice %26 {offsets = [8, 0], sizes = [8, 32], strides = [1, 1]} : vector<16x32xf32> to vector<8x32xf32>
    %48 = vector.shape_cast %47 : vector<8x32xf32> to vector<8x4x8xf32>
    %49 = vector.extract_strided_slice %17 {offsets = [8, 0], sizes = [8, 32], strides = [1, 1]} : vector<16x32xf32> to vector<8x32xf32>
    %50 = vector.shape_cast %49 : vector<8x32xf32> to vector<8x4x8xf32>
    %51 = vector.extract_strided_slice %24 {offsets = [8, 0], sizes = [8, 32], strides = [1, 1]} : vector<16x32xf32> to vector<8x32xf32>
    %52 = vector.shape_cast %51 : vector<8x32xf32> to vector<8x4x8xf32>
    "tpu.trace_start"() <{level = 10 : i32, message = "qhd,khd->hqk"}> : () -> ()
    %cst_29 = arith.constant dense<0.000000e+00> : vector<4x8x8xf32>
    %53 = tpu.matmul %48, %50, %cst_29 {dimension_numbers = #tpu.dot_dimension_numbers<[2], [2], [0], [0], [0, 1, 0, 0, 1, 0], [1], [1]>} : vector<8x4x8xf32>, vector<8x4x8xf32>, vector<4x8x8xf32> -> vector<4x8x8xf32>
    "tpu.trace_stop"() : () -> ()
    %cst_30 = arith.constant dense<0xFF800000> : vector<4x8xf32>
    %54 = vector.multi_reduction <maximumf>, %53, %cst_30 [2] : vector<4x8x8xf32> to vector<4x8xf32>
    %55 = vector.shape_cast %54 : vector<4x8xf32> to vector<4x8x1xf32>
    %56 = vector.broadcast %55 : vector<4x8x1xf32> to vector<4x8x8xf32>
    %57 = arith.subf %53, %56 : vector<4x8x8xf32>
    %58 = math.exp %57 : vector<4x8x8xf32>
    %cst_31 = arith.constant dense<0.000000e+00> : vector<4x8xf32>
    %59 = vector.multi_reduction <add>, %58, %cst_31 [2] : vector<4x8x8xf32> to vector<4x8xf32>
    %60 = vector.shape_cast %59 : vector<4x8xf32> to vector<4x8x1xf32>
    %61 = vector.broadcast %60 : vector<4x8x1xf32> to vector<4x8x8xf32>
    %62 = arith.divf %58, %61 : vector<4x8x8xf32>
    "tpu.trace_start"() <{level = 10 : i32, message = "hqk,khd->qhd"}> : () -> ()
    %cst_32 = arith.constant dense<0.000000e+00> : vector<4x8x8xf32>
    %63 = tpu.matmul %52, %62, %cst_32 {dimension_numbers = #tpu.dot_dimension_numbers<[0], [2], [2], [1], [0, 1, 0, 2, 1, 1], [1], [0]>} : vector<8x4x8xf32>, vector<4x8x8xf32>, vector<4x8x8xf32> -> vector<4x8x8xf32>
    %64 = tpu.transpose %63, [2, 0, 1] : vector<4x8x8xf32> -> vector<8x4x8xf32>
    "tpu.trace_stop"() : () -> ()
    %65 = vector.shape_cast %64 : vector<8x4x8xf32> to vector<8x32xf32>
    %c8 = arith.constant 8 : index
    %c0_33 = arith.constant 0 : index
    %66 = vector.load %arg20[%c8, %c0_33] : memref<16x32xf32, #tpu.memory_space<vmem>>, vector<8x32xf32>
    tpu.vector_store %arg20[%c8, %c0_33], %65 {strides = array<i32>} : memref<16x32xf32, #tpu.memory_space<vmem>>, vector<8x32xf32>,
    %c0_34 = arith.constant 0 : index
    %c0_35 = arith.constant 0 : index
    %67 = vector.load %arg20[%c0_34, %c0_35] : memref<16x32xf32, #tpu.memory_space<vmem>>, vector<16x32xf32>
    %c0_36 = arith.constant 0 : index
    %c0_37 = arith.constant 0 : index
    %c0_38 = arith.constant 0 : index
    %68 = vector.load %arg8[%c0_36, %c0_37, %c0_38] : memref<1x32x32xf32, #tpu.memory_space<vmem>>, vector<1x32x32xf32>
    %69 = vector.shape_cast %68 : vector<1x32x32xf32> to vector<32x32xf32>
    %cst_39 = arith.constant dense<0.000000e+00> : vector<16x32xf32>
    %70 = tpu.matmul %67, %69, %cst_39 {dimension_numbers = #tpu.dot_dimension_numbers<[1], [0], [0], [1], [0, 0, 1, 1], [], []>} : vector<16x32xf32>, vector<32x32xf32>, vector<16x32xf32> -> vector<16x32xf32>
    %c0_40 = arith.constant 0 : index
    %c0_41 = arith.constant 0 : index
    %c0_42 = arith.constant 0 : index
    %71 = vector.load %arg9[%c0_40, %c0_41, %c0_42] : memref<1x1x32xf32, #tpu.memory_space<vmem>>, vector<1x1x32xf32>
    %72 = vector.shape_cast %71 : vector<1x1x32xf32> to vector<1x32xf32>
    %73 = vector.broadcast %72 : vector<1x32xf32> to vector<16x32xf32>
    %74 = arith.addf %70, %73 : vector<16x32xf32>
    %75 = arith.addf %3, %74 : vector<16x32xf32>
    %c0_43 = arith.constant 0 : index
    %c0_44 = arith.constant 0 : index
    %c0_45 = arith.constant 0 : index
    %76 = vector.load %arg10[%c0_43, %c0_44, %c0_45] : memref<1x1x32xf32, #tpu.memory_space<vmem>>, vector<1x1x32xf32>
    %77 = vector.shape_cast %76 : vector<1x1x32xf32> to vector<1x32xf32>
    %c0_46 = arith.constant 0 : index
    %c0_47 = arith.constant 0 : index
    %c0_48 = arith.constant 0 : index
    %78 = vector.load %arg11[%c0_46, %c0_47, %c0_48] : memref<1x1x32xf32, #tpu.memory_space<vmem>>, vector<1x1x32xf32>
    %79 = vector.shape_cast %78 : vector<1x1x32xf32> to vector<1x32xf32>
    %cst_49 = arith.constant dense<0.000000e+00> : vector<16xf32>
    %80 = vector.multi_reduction <add>, %75, %cst_49 [1] : vector<16x32xf32> to vector<16xf32>
    %81 = vector.shape_cast %80 : vector<16xf32> to vector<16x1xf32>
    %cst_50 = arith.constant 3.200000e+01 : f32
    %82 = vector.broadcast %cst_50 : f32 to vector<16x1xf32>
    %83 = arith.divf %81, %82 : vector<16x1xf32>
    %84 = vector.broadcast %83 : vector<16x1xf32> to vector<16x32xf32>
    %85 = arith.subf %75, %84 : vector<16x32xf32>
    %86 = arith.mulf %85, %85 : vector<16x32xf32>
    %cst_51 = arith.constant dense<0.000000e+00> : vector<16xf32>
    %87 = vector.multi_reduction <add>, %86, %cst_51 [1] : vector<16x32xf32> to vector<16xf32>
    %88 = vector.shape_cast %87 : vector<16xf32> to vector<16x1xf32>
    %cst_52 = arith.constant 3.200000e+01 : f32
    %89 = vector.broadcast %cst_52 : f32 to vector<16x1xf32>
    %90 = arith.divf %88, %89 : vector<16x1xf32>
    %91 = vector.broadcast %83 : vector<16x1xf32> to vector<16x32xf32>
    %92 = arith.subf %75, %91 : vector<16x32xf32>
    %cst_53 = arith.constant 9.99999974E-6 : f32
    %93 = vector.broadcast %cst_53 : f32 to vector<16x1xf32>
    %94 = arith.addf %90, %93 : vector<16x1xf32>
    %95 = math.rsqrt %94 : vector<16x1xf32>
    %96 = vector.broadcast %95 : vector<16x1xf32> to vector<16x32xf32>
    %97 = arith.mulf %92, %96 : vector<16x32xf32>
    %98 = vector.broadcast %77 : vector<1x32xf32> to vector<16x32xf32>
    %99 = arith.mulf %97, %98 : vector<16x32xf32>
    %100 = vector.broadcast %79 : vector<1x32xf32> to vector<16x32xf32>
    %101 = arith.addf %99, %100 : vector<16x32xf32>
    %c0_54 = arith.constant 0 : index
    %c0_55 = arith.constant 0 : index
    %c0_56 = arith.constant 0 : index
    %102 = vector.load %arg12[%c0_54, %c0_55, %c0_56] : memref<1x32x128xf32, #tpu.memory_space<vmem>>, vector<1x32x128xf32>
    %103 = vector.shape_cast %102 : vector<1x32x128xf32> to vector<32x128xf32>
    %cst_57 = arith.constant dense<0.000000e+00> : vector<16x128xf32>
    %104 = tpu.matmul %101, %103, %cst_57 {dimension_numbers = #tpu.dot_dimension_numbers<[1], [0], [0], [1], [0, 0, 1, 1], [], []>} : vector<16x32xf32>, vector<32x128xf32>, vector<16x128xf32> -> vector<16x128xf32>
    %c0_58 = arith.constant 0 : index
    %c0_59 = arith.constant 0 : index
    %c0_60 = arith.constant 0 : index
    %105 = vector.load %arg13[%c0_58, %c0_59, %c0_60] : memref<1x1x128xf32, #tpu.memory_space<vmem>>, vector<1x1x128xf32>
    %106 = vector.shape_cast %105 : vector<1x1x128xf32> to vector<1x128xf32>
    %107 = vector.broadcast %106 : vector<1x128xf32> to vector<16x128xf32>
    %108 = arith.addf %104, %107 : vector<16x128xf32>
    %cst_61 = arith.constant 0.000000e+00 : f32
    %109 = vector.broadcast %cst_61 : f32 to vector<16x128xf32>
    %110 = arith.maximumf %108, %109 : vector<16x128xf32>
    %c0_62 = arith.constant 0 : index
    %c0_63 = arith.constant 0 : index
    %c0_64 = arith.constant 0 : index
    %111 = vector.load %arg14[%c0_62, %c0_63, %c0_64] : memref<1x128x32xf32, #tpu.memory_space<vmem>>, vector<1x128x32xf32>
    %112 = vector.shape_cast %111 : vector<1x128x32xf32> to vector<128x32xf32>
    %cst_65 = arith.constant dense<0.000000e+00> : vector<16x32xf32>
    %113 = tpu.matmul %110, %112, %cst_65 {dimension_numbers = #tpu.dot_dimension_numbers<[1], [0], [0], [1], [0, 0, 1, 1], [], []>} : vector<16x128xf32>, vector<128x32xf32>, vector<16x32xf32> -> vector<16x32xf32>
    %c0_66 = arith.constant 0 : index
    %c0_67 = arith.constant 0 : index
    %c0_68 = arith.constant 0 : index
    %114 = vector.load %arg15[%c0_66, %c0_67, %c0_68] : memref<1x1x32xf32, #tpu.memory_space<vmem>>, vector<1x1x32xf32>
    %115 = vector.shape_cast %114 : vector<1x1x32xf32> to vector<1x32xf32>
    %116 = vector.broadcast %115 : vector<1x32xf32> to vector<16x32xf32>
    %117 = arith.addf %113, %116 : vector<16x32xf32>
    %118 = arith.addf %101, %117 : vector<16x32xf32>
    %c0_69 = arith.constant 0 : index
    %c0_70 = arith.constant 0 : index
    %c0_71 = arith.constant 0 : index
    %119 = vector.load %arg16[%c0_69, %c0_70, %c0_71] : memref<1x1x32xf32, #tpu.memory_space<vmem>>, vector<1x1x32xf32>
    %120 = vector.shape_cast %119 : vector<1x1x32xf32> to vector<1x32xf32>
    %c0_72 = arith.constant 0 : index
    %c0_73 = arith.constant 0 : index
    %c0_74 = arith.constant 0 : index
    %121 = vector.load %arg17[%c0_72, %c0_73, %c0_74] : memref<1x1x32xf32, #tpu.memory_space<vmem>>, vector<1x1x32xf32>
    %122 = vector.shape_cast %121 : vector<1x1x32xf32> to vector<1x32xf32>
    %cst_75 = arith.constant dense<0.000000e+00> : vector<16xf32>
    %123 = vector.multi_reduction <add>, %118, %cst_75 [1] : vector<16x32xf32> to vector<16xf32>
    %124 = vector.shape_cast %123 : vector<16xf32> to vector<16x1xf32>
    %cst_76 = arith.constant 3.200000e+01 : f32
    %125 = vector.broadcast %cst_76 : f32 to vector<16x1xf32>
    %126 = arith.divf %124, %125 : vector<16x1xf32>
    %127 = vector.broadcast %126 : vector<16x1xf32> to vector<16x32xf32>
    %128 = arith.subf %118, %127 : vector<16x32xf32>
    %129 = arith.mulf %128, %128 : vector<16x32xf32>
    %cst_77 = arith.constant dense<0.000000e+00> : vector<16xf32>
    %130 = vector.multi_reduction <add>, %129, %cst_77 [1] : vector<16x32xf32> to vector<16xf32>
    %131 = vector.shape_cast %130 : vector<16xf32> to vector<16x1xf32>
    %cst_78 = arith.constant 3.200000e+01 : f32
    %132 = vector.broadcast %cst_78 : f32 to vector<16x1xf32>
    %133 = arith.divf %131, %132 : vector<16x1xf32>
    %134 = vector.broadcast %126 : vector<16x1xf32> to vector<16x32xf32>
    %135 = arith.subf %118, %134 : vector<16x32xf32>
    %cst_79 = arith.constant 9.99999974E-6 : f32
    %136 = vector.broadcast %cst_79 : f32 to vector<16x1xf32>
    %137 = arith.addf %133, %136 : vector<16x1xf32>
    %138 = math.rsqrt %137 : vector<16x1xf32>
    %139 = vector.broadcast %138 : vector<16x1xf32> to vector<16x32xf32>
    %140 = arith.mulf %135, %139 : vector<16x32xf32>
    %141 = vector.broadcast %120 : vector<1x32xf32> to vector<16x32xf32>
    %142 = arith.mulf %140, %141 : vector<16x32xf32>
    %143 = vector.broadcast %122 : vector<1x32xf32> to vector<16x32xf32>
    %144 = arith.addf %142, %143 : vector<16x32xf32>
    %c0_80 = arith.constant 0 : index
    %c0_81 = arith.constant 0 : index
    %145 = vector.load %arg19[%c0_80, %c0_81] : memref<16x32xf32, #tpu.memory_space<vmem>>, vector<16x32xf32>
    tpu.vector_store %arg19[%c0_80, %c0_81], %144 {strides = array<i32>} : memref<16x32xf32, #tpu.memory_space<vmem>>, vector<16x32xf32>,
    %c1_i32 = arith.constant 1 : i32
    %146 = arith.cmpi eq, %arg0, %c1_i32 : i32
    %147 = arith.extui %146 : i1 to i32
    %c0_i32_82 = arith.constant 0 : i32
    %148 = arith.cmpi ne, %147, %c0_i32_82 : i32
    scf.if %148 {
      %c0_83 = arith.constant 0 : index
      %c0_84 = arith.constant 0 : index
      %149 = vector.load %arg18[%c0_83, %c0_84] : memref<16x32xf32, #tpu.memory_space<vmem>>, vector<16x32xf32>
      tpu.vector_store %arg18[%c0_83, %c0_84], %144 {strides = array<i32>} : memref<16x32xf32, #tpu.memory_space<vmem>>, vector<16x32xf32>,
    } else {
    }
    return
  }
  func.func @transform_0(%arg0: i32) -> (i32, i32) {
    %c0_i32 = arith.constant 0 : i32
    %c0_i32_0 = arith.constant 0 : i32
    %c0_i32_1 = arith.constant 0 : i32
    return %c0_i32, %c0_i32_0 : i32, i32
  }
  func.func @transform_1(%arg0: i32) -> (i32, i32, i32) {
    %c0_i32 = arith.constant 0 : i32
    %c0_i32_0 = arith.constant 0 : i32
    %c0_i32_1 = arith.constant 0 : i32
    return %arg0, %c0_i32, %c0_i32_0 : i32, i32, i32
  }
  func.func @transform_2(%arg0: i32) -> (i32, i32, i32) {
    %c0_i32 = arith.constant 0 : i32
    %c0_i32_0 = arith.constant 0 : i32
    %c0_i32_1 = arith.constant 0 : i32
    return %arg0, %c0_i32, %c0_i32_0 : i32, i32, i32
  }
  func.func @transform_3(%arg0: i32) -> (i32, i32, i32) {
    %c0_i32 = arith.constant 0 : i32
    %c0_i32_0 = arith.constant 0 : i32
    %c0_i32_1 = arith.constant 0 : i32
    return %arg0, %c0_i32, %c0_i32_0 : i32, i32, i32
  }
  func.func @transform_4(%arg0: i32) -> (i32, i32, i32) {
    %c0_i32 = arith.constant 0 : i32
    %c0_i32_0 = arith.constant 0 : i32
    %c0_i32_1 = arith.constant 0 : i32
    return %arg0, %c0_i32, %c0_i32_0 : i32, i32, i32
  }
  func.func @transform_5(%arg0: i32) -> (i32, i32, i32) {
    %c0_i32 = arith.constant 0 : i32
    %c0_i32_0 = arith.constant 0 : i32
    %c0_i32_1 = arith.constant 0 : i32
    return %arg0, %c0_i32, %c0_i32_0 : i32, i32, i32
  }
  func.func @transform_6(%arg0: i32) -> (i32, i32, i32) {
    %c0_i32 = arith.constant 0 : i32
    %c0_i32_0 = arith.constant 0 : i32
    %c0_i32_1 = arith.constant 0 : i32
    return %arg0, %c0_i32, %c0_i32_0 : i32, i32, i32
  }
  func.func @transform_7(%arg0: i32) -> (i32, i32, i32) {
    %c0_i32 = arith.constant 0 : i32
    %c0_i32_0 = arith.constant 0 : i32
    %c0_i32_1 = arith.constant 0 : i32
    return %arg0, %c0_i32, %c0_i32_0 : i32, i32, i32
  }
  func.func @transform_8(%arg0: i32) -> (i32, i32, i32) {
    %c0_i32 = arith.constant 0 : i32
    %c0_i32_0 = arith.constant 0 : i32
    %c0_i32_1 = arith.constant 0 : i32
    return %arg0, %c0_i32, %c0_i32_0 : i32, i32, i32
  }
  func.func @transform_9(%arg0: i32) -> (i32, i32, i32) {
    %c0_i32 = arith.constant 0 : i32
    %c0_i32_0 = arith.constant 0 : i32
    %c0_i32_1 = arith.constant 0 : i32
    return %arg0, %c0_i32, %c0_i32_0 : i32, i32, i32
  }
  func.func @transform_10(%arg0: i32) -> (i32, i32, i32) {
    %c0_i32 = arith.constant 0 : i32
    %c0_i32_0 = arith.constant 0 : i32
    %c0_i32_1 = arith.constant 0 : i32
    return %arg0, %c0_i32, %c0_i32_0 : i32, i32, i32
  }
  func.func @transform_11(%arg0: i32) -> (i32, i32, i32) {
    %c0_i32 = arith.constant 0 : i32
    %c0_i32_0 = arith.constant 0 : i32
    %c0_i32_1 = arith.constant 0 : i32
    return %arg0, %c0_i32, %c0_i32_0 : i32, i32, i32
  }
  func.func @transform_12(%arg0: i32) -> (i32, i32, i32) {
    %c0_i32 = arith.constant 0 : i32
    %c0_i32_0 = arith.constant 0 : i32
    %c0_i32_1 = arith.constant 0 : i32
    return %arg0, %c0_i32, %c0_i32_0 : i32, i32, i32
  }
  func.func @transform_13(%arg0: i32) -> (i32, i32, i32) {
    %c0_i32 = arith.constant 0 : i32
    %c0_i32_0 = arith.constant 0 : i32
    %c0_i32_1 = arith.constant 0 : i32
    return %arg0, %c0_i32, %c0_i32_0 : i32, i32, i32
  }
  func.func @transform_14(%arg0: i32) -> (i32, i32, i32) {
    %c0_i32 = arith.constant 0 : i32
    %c0_i32_0 = arith.constant 0 : i32
    %c0_i32_1 = arith.constant 0 : i32
    return %arg0, %c0_i32, %c0_i32_0 : i32, i32, i32
  }
  func.func @transform_15(%arg0: i32) -> (i32, i32, i32) {
    %c0_i32 = arith.constant 0 : i32
    %c0_i32_0 = arith.constant 0 : i32
    %c0_i32_1 = arith.constant 0 : i32
    return %arg0, %c0_i32, %c0_i32_0 : i32, i32, i32
  }
  func.func @transform_16(%arg0: i32) -> (i32, i32, i32) {
    %c0_i32 = arith.constant 0 : i32
    %c0_i32_0 = arith.constant 0 : i32
    %c0_i32_1 = arith.constant 0 : i32
    return %arg0, %c0_i32, %c0_i32_0 : i32, i32, i32
  }
  func.func @transform_17(%arg0: i32) -> (i32, i32) {
    %c0_i32 = arith.constant 0 : i32
    %c0_i32_0 = arith.constant 0 : i32
    %c0_i32_1 = arith.constant 0 : i32
    return %c0_i32, %c0_i32_0 : i32, i32
  }
}

</mosaic_0001>

<llo_original>
// kernel: tpu_custom_call.1
$region0: #{tpu_custom_call.1}
  #allocation0 [shape = 'u32[]', space=smem, size = 0x4, offset = 0x4, fixed_abs, tag = 'smem constant byte address 0x4 - core index']
  #allocation1 [shape = 'u32[144,128]{1,0:T(1,128)}', space=vmem, size = 0x12000, scoped, tag = 'internal scratch']
  #allocation2 [shape = 'f32[16,32]{1,0:T(8,128)}', space=vmem, size = 0x2000, scoped, tag = 'scratch operand']
  #allocation3 [shape = 'f32[16,32]{1,0:T(8,128)}', space=vmem, size = 0x2000, scoped, tag = 'scratch operand']
  %s0 = inlined_call_operand.hbm [shape: f32[16,32], index: 0, kind: input, shape index: {}]
  %s1 = inlined_call_operand.vmem [shape: f32[2,32,32], index: 1, kind: input, shape index: {}]
  %s2 = inlined_call_operand.vmem [shape: f32[2,1,32], index: 2, kind: input, shape index: {}]
  %s3 = inlined_call_operand.vmem [shape: f32[2,32,32], index: 3, kind: input, shape index: {}]
  %s4 = inlined_call_operand.vmem [shape: f32[2,1,32], index: 4, kind: input, shape index: {}]
  %s5 = inlined_call_operand.vmem [shape: f32[2,32,32], index: 5, kind: input, shape index: {}]
  %s6 = inlined_call_operand.vmem [shape: f32[2,1,32], index: 6, kind: input, shape index: {}]
  %s7 = inlined_call_operand.vmem [shape: f32[2,32,32], index: 7, kind: input, shape index: {}]
  %s8 = inlined_call_operand.vmem [shape: f32[2,1,32], index: 8, kind: input, shape index: {}]
  %s9 = inlined_call_operand.vmem [shape: f32[2,1,32], index: 9, kind: input, shape index: {}]
  %s10 = inlined_call_operand.vmem [shape: f32[2,1,32], index: 10, kind: input, shape index: {}]
  %s11 = inlined_call_operand.vmem [shape: f32[2,32,128], index: 11, kind: input, shape index: {}]
  %s12 = inlined_call_operand.vmem [shape: f32[2,1,128], index: 12, kind: input, shape index: {}]
  %s13 = inlined_call_operand.vmem [shape: f32[2,128,32], index: 13, kind: input, shape index: {}]
  %s14 = inlined_call_operand.vmem [shape: f32[2,1,32], index: 14, kind: input, shape index: {}]
  %s15 = inlined_call_operand.vmem [shape: f32[2,1,32], index: 15, kind: input, shape index: {}]
  %s16 = inlined_call_operand.vmem [shape: f32[2,1,32], index: 16, kind: input, shape index: {}]
  %s17 = inlined_call_operand.hbm [shape: f32[16,32], index: 17, kind: output, shape index: {}]
  %s18 = sld [smem:[#allocation0]]
  $region113: #{tpu_custom_call.1} parent=0
    _
  %s20 = ssub.s32 1, %s18
  %s21 = scalar_select 0, %s20, %s18
  $region1: #{tpu_custom_call.1} parent=0
    #allocation4 [shape = 'u8[8192]{0}', space=vmem, size = 0x2000, scoped, tag = 'input window, operand 0, single buffered']
    #allocation5 [shape = 's32[2]{0}', space=sflag, size = 0x8, scoped, tag = 'scoped memory for tpu_custom_call.1']
    #allocation6 [shape = 's32[2]{0}', space=sflag, size = 0x8, scoped, tag = 'scoped memory for tpu_custom_call.1']
    #allocation7 [shape = 'u8[8192]{0}', space=vmem, size = 0x2000, scoped, tag = 'output window, operand 0, single buffered']
    %22 = vsyncpa [#allocation5], 0
    %23 = vsyncpa [#allocation6], 0
    loop: start=0, step=1, limit=4
    $region2: #{tpu_custom_call.1} parent=1 // loop_pre_header
      _
    $region3: #{tpu_custom_call.1} parent=1 // loop_header
      %s25 = sphi 0, %s29
      %p26 = scmp.ge.s32.totalorder %s25, 4
      %s33 = sphi 0, %s33
      %s35 = sphi 0, %s33
      %s36 = sphi 0, %s35
      %s50 = sphi 0, %s36
      %s56 = sphi 0, %s58
      %s59 = sphi 0, %s56
      %s60 = sphi 0, %s59
      %s76 = sphi 0, %s60
      %s82 = sphi 0, %s84
      %s85 = sphi 0, %s82
      %s86 = sphi 0, %s85
      %s102 = sphi 0, %s86
      %s108 = sphi 0, %s110
      %s111 = sphi 0, %s108
      %s112 = sphi 0, %s111
      %s128 = sphi 0, %s112
      %s134 = sphi 0, %s136
      %s137 = sphi 0, %s134
      %s138 = sphi 0, %s137
      %s154 = sphi 0, %s138
      %s160 = sphi 0, %s162
      %s163 = sphi 0, %s160
      %s164 = sphi 0, %s163
      %s180 = sphi 0, %s164
      %s186 = sphi 0, %s188
      %s189 = sphi 0, %s186
      %s190 = sphi 0, %s189
      %s206 = sphi 0, %s190
      %s212 = sphi 0, %s214
      %s215 = sphi 0, %s212
      %s216 = sphi 0, %s215
      %s232 = sphi 0, %s216
      %s238 = sphi 0, %s240
      %s241 = sphi 0, %s238
      %s242 = sphi 0, %s241
      %s258 = sphi 0, %s242
      %s264 = sphi 0, %s266
      %s267 = sphi 0, %s264
      %s268 = sphi 0, %s267
      %s284 = sphi 0, %s268
      %s290 = sphi 0, %s292
      %s293 = sphi 0, %s290
      %s294 = sphi 0, %s293
      %s310 = sphi 0, %s294
      %s316 = sphi 0, %s318
      %s319 = sphi 0, %s316
      %s320 = sphi 0, %s319
      %s336 = sphi 0, %s320
      %s342 = sphi 0, %s344
      %s345 = sphi 0, %s342
      %s346 = sphi 0, %s345
      %s362 = sphi 0, %s346
      %s368 = sphi 0, %s370
      %s371 = sphi 0, %s368
      %s372 = sphi 0, %s371
      %s388 = sphi 0, %s372
      %s394 = sphi 0, %s396
      %s397 = sphi 0, %s394
      %s398 = sphi 0, %s397
      %s414 = sphi 0, %s398
      %s420 = sphi 0, %s422
      %s423 = sphi 0, %s420
      %s424 = sphi 0, %s423
      %s440 = sphi 0, %s424
      %s446 = sphi 0, %s448
      %s449 = sphi 0, %s446
      %s450 = sphi 0, %s449
      %s466 = sphi 0, %s450
      %s470 = sphi 0, %s470
      %s472 = sphi 0, %s470
      %s473 = sphi 0, %s472
      %s487 = sphi 0, %s473
    $region4: #{tpu_custom_call.1} parent=1 // loop_header_branch
      %28 = sbr.rel (%p26) target = $region8
    $region5: #{tpu_custom_call.1} parent=1 // loop_body
      %s30 = ssub.s32 %s25, 1
      %s31 = ssub.s32 %s25, 2
      %s32 = sadd.s32 %s25, 1
      %s34 = sadd.s32 %s33, 1
      %p37 = scmp.eq.s32.totalorder %s25, 1
      %p38 = scmp.ne.s32.totalorder %s33, %s35
      %p39 = scmp.eq.s32.totalorder %s25, 0
      %p40 = por %p38, %p39
      %p41 = scmp.ne.s32.totalorder %s33, %s35
      %p42 = scmp.eq.s32.totalorder %s30, 1
      %p43 = por %p41, %p42
      %p44 = scmp.ne.s32.totalorder %s35, %s36
      %p45 = scmp.eq.s32.totalorder %s30, 0
      %p46 = por %p44, %p45
      %p47 = scmp.ne.s32.totalorder %s35, %s36
      %p48 = scmp.eq.s32.totalorder %s31, 1
      %p49 = por %p47, %p48
      %p51 = scmp.ne.s32.totalorder %s36, %s50
      %p52 = scmp.eq.s32.totalorder %s31, 0
      %p53 = por %p51, %p52
      %s54 = ssub.s32 %s25, %s32
      %p55 = scmp.eq.s32.totalorder %s54, 0
      %s57 = sadd.s32 %s56, 1
      %s58 = scalar_select %p55, %s56, %s57
      %p61 = pneg %p55
      %p62 = scmp.eq.s32.totalorder %s25, 1
      %p63 = por %p61, %p62
      %p64 = scmp.ne.s32.totalorder %s56, %s59
      %p65 = scmp.eq.s32.totalorder %s25, 0
      %p66 = por %p64, %p65
      %p67 = scmp.ne.s32.totalorder %s56, %s59
      %p68 = scmp.eq.s32.totalorder %s30, 1
      %p69 = por %p67, %p68
      %p70 = scmp.ne.s32.totalorder %s59, %s60
      %p71 = scmp.eq.s32.totalorder %s30, 0
      %p72 = por %p70, %p71
      %p73 = scmp.ne.s32.totalorder %s59, %s60
      %p74 = scmp.eq.s32.totalorder %s31, 1
      %p75 = por %p73, %p74
      %p77 = scmp.ne.s32.totalorder %s60, %s76
      %p78 = scmp.eq.s32.totalorder %s31, 0
      %p79 = por %p77, %p78
      %s80 = ssub.s32 %s25, %s32
      %p81 = scmp.eq.s32.totalorder %s80, 0
      %s83 = sadd.s32 %s82, 1
      %s84 = scalar_select %p81, %s82, %s83
      %p87 = pneg %p81
      %p88 = scmp.eq.s32.totalorder %s25, 1
      %p89 = por %p87, %p88
      %p90 = scmp.ne.s32.totalorder %s82, %s85
      %p91 = scmp.eq.s32.totalorder %s25, 0
      %p92 = por %p90, %p91
      %p93 = scmp.ne.s32.totalorder %s82, %s85
      %p94 = scmp.eq.s32.totalorder %s30, 1
      %p95 = por %p93, %p94
      %p96 = scmp.ne.s32.totalorder %s85, %s86
      %p97 = scmp.eq.s32.totalorder %s30, 0
      %p98 = por %p96, %p97
      %p99 = scmp.ne.s32.totalorder %s85, %s86
      %p100 = scmp.eq.s32.totalorder %s31, 1
      %p101 = por %p99, %p100
      %p103 = scmp.ne.s32.totalorder %s86, %s102
      %p104 = scmp.eq.s32.totalorder %s31, 0
      %p105 = por %p103, %p104
      %s106 = ssub.s32 %s25, %s32
      %p107 = scmp.eq.s32.totalorder %s106, 0
      %s109 = sadd.s32 %s108, 1
      %s110 = scalar_select %p107, %s108, %s109
      %p113 = pneg %p107
      %p114 = scmp.eq.s32.totalorder %s25, 1
      %p115 = por %p113, %p114
      %p116 = scmp.ne.s32.totalorder %s108, %s111
      %p117 = scmp.eq.s32.totalorder %s25, 0
      %p118 = por %p116, %p117
      %p119 = scmp.ne.s32.totalorder %s108, %s111
      %p120 = scmp.eq.s32.totalorder %s30, 1
      %p121 = por %p119, %p120
      %p122 = scmp.ne.s32.totalorder %s111, %s112
      %p123 = scmp.eq.s32.totalorder %s30, 0
      %p124 = por %p122, %p123
      %p125 = scmp.ne.s32.totalorder %s111, %s112
      %p126 = scmp.eq.s32.totalorder %s31, 1
      %p127 = por %p125, %p126
      %p129 = scmp.ne.s32.totalorder %s112, %s128
      %p130 = scmp.eq.s32.totalorder %s31, 0
      %p131 = por %p129, %p130
      %s132 = ssub.s32 %s25, %s32
      %p133 = scmp.eq.s32.totalorder %s132, 0
      %s135 = sadd.s32 %s134, 1
      %s136 = scalar_select %p133, %s134, %s135
      %p139 = pneg %p133
      %p140 = scmp.eq.s32.totalorder %s25, 1
      %p141 = por %p139, %p140
      %p142 = scmp.ne.s32.totalorder %s134, %s137
      %p143 = scmp.eq.s32.totalorder %s25, 0
      %p144 = por %p142, %p143
      %p145 = scmp.ne.s32.totalorder %s134, %s137
      %p146 = scmp.eq.s32.totalorder %s30, 1
      %p147 = por %p145, %p146
      %p148 = scmp.ne.s32.totalorder %s137, %s138
      %p149 = scmp.eq.s32.totalorder %s30, 0
      %p150 = por %p148, %p149
      %p151 = scmp.ne.s32.totalorder %s137, %s138
      %p152 = scmp.eq.s32.totalorder %s31, 1
      %p153 = por %p151, %p152
      %p155 = scmp.ne.s32.totalorder %s138, %s154
      %p156 = scmp.eq.s32.totalorder %s31, 0
      %p157 = por %p155, %p156
      %s158 = ssub.s32 %s25, %s32
      %p159 = scmp.eq.s32.totalorder %s158, 0
      %s161 = sadd.s32 %s160, 1
      %s162 = scalar_select %p159, %s160, %s161
      %p165 = pneg %p159
      %p166 = scmp.eq.s32.totalorder %s25, 1
      %p167 = por %p165, %p166
      %p168 = scmp.ne.s32.totalorder %s160, %s163
      %p169 = scmp.eq.s32.totalorder %s25, 0
      %p170 = por %p168, %p169
      %p171 = scmp.ne.s32.totalorder %s160, %s163
      %p172 = scmp.eq.s32.totalorder %s30, 1
      %p173 = por %p171, %p172
      %p174 = scmp.ne.s32.totalorder %s163, %s164
      %p175 = scmp.eq.s32.totalorder %s30, 0
      %p176 = por %p174, %p175
      %p177 = scmp.ne.s32.totalorder %s163, %s164
      %p178 = scmp.eq.s32.totalorder %s31, 1
      %p179 = por %p177, %p178
      %p181 = scmp.ne.s32.totalorder %s164, %s180
      %p182 = scmp.eq.s32.totalorder %s31, 0
      %p183 = por %p181, %p182
      %s184 = ssub.s32 %s25, %s32
      %p185 = scmp.eq.s32.totalorder %s184, 0
      %s187 = sadd.s32 %s186, 1
      %s188 = scalar_select %p185, %s186, %s187
      %p191 = pneg %p185
      %p192 = scmp.eq.s32.totalorder %s25, 1
      %p193 = por %p191, %p192
      %p194 = scmp.ne.s32.totalorder %s186, %s189
      %p195 = scmp.eq.s32.totalorder %s25, 0
      %p196 = por %p194, %p195
      %p197 = scmp.ne.s32.totalorder %s186, %s189
      %p198 = scmp.eq.s32.totalorder %s30, 1
      %p199 = por %p197, %p198
      %p200 = scmp.ne.s32.totalorder %s189, %s190
      %p201 = scmp.eq.s32.totalorder %s30, 0
      %p202 = por %p200, %p201
      %p203 = scmp.ne.s32.totalorder %s189, %s190
      %p204 = scmp.eq.s32.totalorder %s31, 1
      %p205 = por %p203, %p204
      %p207 = scmp.ne.s32.totalorder %s190, %s206
      %p208 = scmp.eq.s32.totalorder %s31, 0
      %p209 = por %p207, %p208
      %s210 = ssub.s32 %s25, %s32
      %p211 = scmp.eq.s32.totalorder %s210, 0
      %s213 = sadd.s32 %s212, 1
      %s214 = scalar_select %p211, %s212, %s213
      %p217 = pneg %p211
      %p218 = scmp.eq.s32.totalorder %s25, 1
      %p219 = por %p217, %p218
      %p220 = scmp.ne.s32.totalorder %s212, %s215
      %p221 = scmp.eq.s32.totalorder %s25, 0
      %p222 = por %p220, %p221
      %p223 = scmp.ne.s32.totalorder %s212, %s215
      %p224 = scmp.eq.s32.totalorder %s30, 1
      %p225 = por %p223, %p224
      %p226 = scmp.ne.s32.totalorder %s215, %s216
      %p227 = scmp.eq.s32.totalorder %s30, 0
      %p228 = por %p226, %p227
      %p229 = scmp.ne.s32.totalorder %s215, %s216
      %p230 = scmp.eq.s32.totalorder %s31, 1
      %p231 = por %p229, %p230
      %p233 = scmp.ne.s32.totalorder %s216, %s232
      %p234 = scmp.eq.s32.totalorder %s31, 0
      %p235 = por %p233, %p234
      %s236 = ssub.s32 %s25, %s32
      %p237 = scmp.eq.s32.totalorder %s236, 0
      %s239 = sadd.s32 %s238, 1
      %s240 = scalar_select %p237, %s238, %s239
      %p243 = pneg %p237
      %p244 = scmp.eq.s32.totalorder %s25, 1
      %p245 = por %p243, %p244
      %p246 = scmp.ne.s32.totalorder %s238, %s241
      %p247 = scmp.eq.s32.totalorder %s25, 0
      %p248 = por %p246, %p247
      %p249 = scmp.ne.s32.totalorder %s238, %s241
      %p250 = scmp.eq.s32.totalorder %s30, 1
      %p251 = por %p249, %p250
      %p252 = scmp.ne.s32.totalorder %s241, %s242
      %p253 = scmp.eq.s32.totalorder %s30, 0
      %p254 = por %p252, %p253
      %p255 = scmp.ne.s32.totalorder %s241, %s242
      %p256 = scmp.eq.s32.totalorder %s31, 1
      %p257 = por %p255, %p256
      %p259 = scmp.ne.s32.totalorder %s242, %s258
      %p260 = scmp.eq.s32.totalorder %s31, 0
      %p261 = por %p259, %p260
      %s262 = ssub.s32 %s25, %s32
      %p263 = scmp.eq.s32.totalorder %s262, 0
      %s265 = sadd.s32 %s264, 1
      %s266 = scalar_select %p263, %s264, %s265
      %p269 = pneg %p263
      %p270 = scmp.eq.s32.totalorder %s25, 1
      %p271 = por %p269, %p270
      %p272 = scmp.ne.s32.totalorder %s264, %s267
      %p273 = scmp.eq.s32.totalorder %s25, 0
      %p274 = por %p272, %p273
      %p275 = scmp.ne.s32.totalorder %s264, %s267
      %p276 = scmp.eq.s32.totalorder %s30, 1
      %p277 = por %p275, %p276
      %p278 = scmp.ne.s32.totalorder %s267, %s268
      %p279 = scmp.eq.s32.totalorder %s30, 0
      %p280 = por %p278, %p279
      %p281 = scmp.ne.s32.totalorder %s267, %s268
      %p282 = scmp.eq.s32.totalorder %s31, 1
      %p283 = por %p281, %p282
      %p285 = scmp.ne.s32.totalorder %s268, %s284
      %p286 = scmp.eq.s32.totalorder %s31, 0
      %p287 = por %p285, %p286
      %s288 = ssub.s32 %s25, %s32
      %p289 = scmp.eq.s32.totalorder %s288, 0
      %s291 = sadd.s32 %s290, 1
      %s292 = scalar_select %p289, %s290, %s291
      %p295 = pneg %p289
      %p296 = scmp.eq.s32.totalorder %s25, 1
      %p297 = por %p295, %p296
      %p298 = scmp.ne.s32.totalorder %s290, %s293
      %p299 = scmp.eq.s32.totalorder %s25, 0
      %p300 = por %p298, %p299
      %p301 = scmp.ne.s32.totalorder %s290, %s293
      %p302 = scmp.eq.s32.totalorder %s30, 1
      %p303 = por %p301, %p302
      %p304 = scmp.ne.s32.totalorder %s293, %s294
      %p305 = scmp.eq.s32.totalorder %s30, 0
      %p306 = por %p304, %p305
      %p307 = scmp.ne.s32.totalorder %s293, %s294
      %p308 = scmp.eq.s32.totalorder %s31, 1
      %p309 = por %p307, %p308
      %p311 = scmp.ne.s32.totalorder %s294, %s310
      %p312 = scmp.eq.s32.totalorder %s31, 0
      %p313 = por %p311, %p312
      %s314 = ssub.s32 %s25, %s32
      %p315 = scmp.eq.s32.totalorder %s314, 0
      %s317 = sadd.s32 %s316, 1
      %s318 = scalar_select %p315, %s316, %s317
      %p321 = pneg %p315
      %p322 = scmp.eq.s32.totalorder %s25, 1
      %p323 = por %p321, %p322
      %p324 = scmp.ne.s32.totalorder %s316, %s319
      %p325 = scmp.eq.s32.totalorder %s25, 0
      %p326 = por %p324, %p325
      %p327 = scmp.ne.s32.totalorder %s316, %s319
      %p328 = scmp.eq.s32.totalorder %s30, 1
      %p329 = por %p327, %p328
      %p330 = scmp.ne.s32.totalorder %s319, %s320
      %p331 = scmp.eq.s32.totalorder %s30, 0
      %p332 = por %p330, %p331
      %p333 = scmp.ne.s32.totalorder %s319, %s320
      %p334 = scmp.eq.s32.totalorder %s31, 1
      %p335 = por %p333, %p334
      %p337 = scmp.ne.s32.totalorder %s320, %s336
      %p338 = scmp.eq.s32.totalorder %s31, 0
      %p339 = por %p337, %p338
      %s340 = ssub.s32 %s25, %s32
      %p341 = scmp.eq.s32.totalorder %s340, 0
      %s343 = sadd.s32 %s342, 1
      %s344 = scalar_select %p341, %s342, %s343
      %p347 = pneg %p341
      %p348 = scmp.eq.s32.totalorder %s25, 1
      %p349 = por %p347, %p348
      %p350 = scmp.ne.s32.totalorder %s342, %s345
      %p351 = scmp.eq.s32.totalorder %s25, 0
      %p352 = por %p350, %p351
      %p353 = scmp.ne.s32.totalorder %s342, %s345
      %p354 = scmp.eq.s32.totalorder %s30, 1
      %p355 = por %p353, %p354
      %p356 = scmp.ne.s32.totalorder %s345, %s346
      %p357 = scmp.eq.s32.totalorder %s30, 0
      %p358 = por %p356, %p357
      %p359 = scmp.ne.s32.totalorder %s345, %s346
      %p360 = scmp.eq.s32.totalorder %s31, 1
      %p361 = por %p359, %p360
      %p363 = scmp.ne.s32.totalorder %s346, %s362
      %p364 = scmp.eq.s32.totalorder %s31, 0
      %p365 = por %p363, %p364
      %s366 = ssub.s32 %s25, %s32
      %p367 = scmp.eq.s32.totalorder %s366, 0
      %s369 = sadd.s32 %s368, 1
      %s370 = scalar_select %p367, %s368, %s369
      %p373 = pneg %p367
      %p374 = scmp.eq.s32.totalorder %s25, 1
      %p375 = por %p373, %p374
      %p376 = scmp.ne.s32.totalorder %s368, %s371
      %p377 = scmp.eq.s32.totalorder %s25, 0
      %p378 = por %p376, %p377
      %p379 = scmp.ne.s32.totalorder %s368, %s371
      %p380 = scmp.eq.s32.totalorder %s30, 1
      %p381 = por %p379, %p380
      %p382 = scmp.ne.s32.totalorder %s371, %s372
      %p383 = scmp.eq.s32.totalorder %s30, 0
      %p384 = por %p382, %p383
      %p385 = scmp.ne.s32.totalorder %s371, %s372
      %p386 = scmp.eq.s32.totalorder %s31, 1
      %p387 = por %p385, %p386
      %p389 = scmp.ne.s32.totalorder %s372, %s388
      %p390 = scmp.eq.s32.totalorder %s31, 0
      %p391 = por %p389, %p390
      %s392 = ssub.s32 %s25, %s32
      %p393 = scmp.eq.s32.totalorder %s392, 0
      %s395 = sadd.s32 %s394, 1
      %s396 = scalar_select %p393, %s394, %s395
      %p399 = pneg %p393
      %p400 = scmp.eq.s32.totalorder %s25, 1
      %p401 = por %p399, %p400
      %p402 = scmp.ne.s32.totalorder %s394, %s397
      %p403 = scmp.eq.s32.totalorder %s25, 0
      %p404 = por %p402, %p403
      %p405 = scmp.ne.s32.totalorder %s394, %s397
      %p406 = scmp.eq.s32.totalorder %s30, 1
      %p407 = por %p405, %p406
      %p408 = scmp.ne.s32.totalorder %s397, %s398
      %p409 = scmp.eq.s32.totalorder %s30, 0
      %p410 = por %p408, %p409
      %p411 = scmp.ne.s32.totalorder %s397, %s398
      %p412 = scmp.eq.s32.totalorder %s31, 1
      %p413 = por %p411, %p412
      %p415 = scmp.ne.s32.totalorder %s398, %s414
      %p416 = scmp.eq.s32.totalorder %s31, 0
      %p417 = por %p415, %p416
      %s418 = ssub.s32 %s25, %s32
      %p419 = scmp.eq.s32.totalorder %s418, 0
      %s421 = sadd.s32 %s420, 1
      %s422 = scalar_select %p419, %s420, %s421
      %p425 = pneg %p419
      %p426 = scmp.eq.s32.totalorder %s25, 1
      %p427 = por %p425, %p426
      %p428 = scmp.ne.s32.totalorder %s420, %s423
      %p429 = scmp.eq.s32.totalorder %s25, 0
      %p430 = por %p428, %p429
      %p431 = scmp.ne.s32.totalorder %s420, %s423
      %p432 = scmp.eq.s32.totalorder %s30, 1
      %p433 = por %p431, %p432
      %p434 = scmp.ne.s32.totalorder %s423, %s424
      %p435 = scmp.eq.s32.totalorder %s30, 0
      %p436 = por %p434, %p435
      %p437 = scmp.ne.s32.totalorder %s423, %s424
      %p438 = scmp.eq.s32.totalorder %s31, 1
      %p439 = por %p437, %p438
      %p441 = scmp.ne.s32.totalorder %s424, %s440
      %p442 = scmp.eq.s32.totalorder %s31, 0
      %p443 = por %p441, %p442
      %s444 = ssub.s32 %s25, %s32
      %p445 = scmp.eq.s32.totalorder %s444, 0
      %s447 = sadd.s32 %s446, 1
      %s448 = scalar_select %p445, %s446, %s447
      %p451 = pneg %p445
      %p452 = scmp.eq.s32.totalorder %s25, 1
      %p453 = por %p451, %p452
      %p454 = scmp.ne.s32.totalorder %s446, %s449
      %p455 = scmp.eq.s32.totalorder %s25, 0
      %p456 = por %p454, %p455
      %p457 = scmp.ne.s32.totalorder %s446, %s449
      %p458 = scmp.eq.s32.totalorder %s30, 1
      %p459 = por %p457, %p458
      %p460 = scmp.ne.s32.totalorder %s449, %s450
      %p461 = scmp.eq.s32.totalorder %s30, 0
      %p462 = por %p460, %p461
      %p463 = scmp.ne.s32.totalorder %s449, %s450
      %p464 = scmp.eq.s32.totalorder %s31, 1
      %p465 = por %p463, %p464
      %p467 = scmp.ne.s32.totalorder %s450, %s466
      %p468 = scmp.eq.s32.totalorder %s31, 0
      %p469 = por %p467, %p468
      %s471 = sadd.s32 %s470, 1
      %p474 = scmp.eq.s32.totalorder %s25, 1
      %p475 = scmp.ne.s32.totalorder %s470, %s472
      %p476 = scmp.eq.s32.totalorder %s25, 0
      %p477 = por %p475, %p476
      %p478 = scmp.ne.s32.totalorder %s470, %s472
      %p479 = scmp.eq.s32.totalorder %s30, 1
      %p480 = por %p478, %p479
      %p481 = scmp.ne.s32.totalorder %s472, %s473
      %p482 = scmp.eq.s32.totalorder %s30, 0
      %p483 = por %p481, %p482
      %p484 = scmp.ne.s32.totalorder %s472, %s473
      %p485 = scmp.eq.s32.totalorder %s31, 1
      %p486 = por %p484, %p485
      %p488 = scmp.ne.s32.totalorder %s473, %s487
      %p489 = scmp.eq.s32.totalorder %s31, 0
      %p490 = por %p488, %p489
      %p491 = scmp.le.s32.totalorder 1, %s25
      %p492 = scmp.lt.s32.totalorder %s25, 3
      %p493 = pnand %p491, %p492
      %p494 = pneg %p493
      // Predicated region
      $region9: #{tpu_custom_call.1} parent=5 // pred_check
        _
      $region10: #{tpu_custom_call.1} parent=5 // pred_check_branch
        %496 = sbr.rel (%p493) target = $region12
      $region11: #{tpu_custom_call.1} parent=5 // pred_region
        %s497 = ssub.s32 %s25, 1
        // Predicated region
        $region13: #{tpu_custom_call.1} parent=11 // pred_check
          %p498 = pneg %p46
        $region14: #{tpu_custom_call.1} parent=11 // pred_check_branch
          %500 = sbr.rel (%p498) target = $region16
        $region15: #{tpu_custom_call.1} parent=11 // pred_region
          %s502 = ssub.s32 256, 256
          %503 = vsyncadd [#allocation5], %s502
          %s504 = sshll.u32 [#allocation4], 4
          %s505 = int_to_ptr.vmem [resolvable:$true] %s504
          %510 = dma.hbm_to_vmem [thread:$0]  %s0, 256, %s505, [#allocation5], 128, 128, 8
        $region16: #{tpu_custom_call.1} parent=11 // pred_fallthru
          _
      $region12: #{tpu_custom_call.1} parent=5 // pred_fallthru
        _
      %p511 = scmp.lt.s32.totalorder %s25, 2
      // Predicated region
      $region17: #{tpu_custom_call.1} parent=5 // pred_check
        %p512 = pneg %p511
      $region18: #{tpu_custom_call.1} parent=5 // pred_check_branch
        %514 = sbr.rel (%p512) target = $region20
      $region19: #{tpu_custom_call.1} parent=5 // pred_region
        // Predicated region
        $region21: #{tpu_custom_call.1} parent=19 // pred_check
          %p515 = pneg %p66
        $region22: #{tpu_custom_call.1} parent=19 // pred_check_branch
          %517 = sbr.rel (%p515) target = $region24
        $region23: #{tpu_custom_call.1} parent=19 // pred_region
          %p518 = scmp.lt.s32.totalorder %s25, 1
          %s519 = scalar_select %p518, %s25, 1
          %s520 = smul.addr %s519, 4
          %s521 = smul.addr %s520, 8
          %s522 = scalar_lea.vmem %s1, %s521
        $region24: #{tpu_custom_call.1} parent=19 // pred_fallthru
          _
        // Predicated region
        $region25: #{tpu_custom_call.1} parent=19 // pred_check
          %p523 = pneg %p92
        $region26: #{tpu_custom_call.1} parent=19 // pred_check_branch
          %525 = sbr.rel (%p523) target = $region28
        $region27: #{tpu_custom_call.1} parent=19 // pred_region
          %p526 = scmp.lt.s32.totalorder %s25, 1
          %s527 = scalar_select %p526, %s25, 1
          %s528 = scalar_lea.vmem %s2, %s527
        $region28: #{tpu_custom_call.1} parent=19 // pred_fallthru
          _
        // Predicated region
        $region29: #{tpu_custom_call.1} parent=19 // pred_check
          %p529 = pneg %p118
        $region30: #{tpu_custom_call.1} parent=19 // pred_check_branch
          %531 = sbr.rel (%p529) target = $region32
        $region31: #{tpu_custom_call.1} parent=19 // pred_region
          %p532 = scmp.lt.s32.totalorder %s25, 1
          %s533 = scalar_select %p532, %s25, 1
          %s534 = smul.addr %s533, 4
          %s535 = smul.addr %s534, 8
          %s536 = scalar_lea.vmem %s3, %s535
        $region32: #{tpu_custom_call.1} parent=19 // pred_fallthru
          _
        // Predicated region
        $region33: #{tpu_custom_call.1} parent=19 // pred_check
          %p537 = pneg %p144
        $region34: #{tpu_custom_call.1} parent=19 // pred_check_branch
          %539 = sbr.rel (%p537) target = $region36
        $region35: #{tpu_custom_call.1} parent=19 // pred_region
          %p540 = scmp.lt.s32.totalorder %s25, 1
          %s541 = scalar_select %p540, %s25, 1
          %s542 = scalar_lea.vmem %s4, %s541
        $region36: #{tpu_custom_call.1} parent=19 // pred_fallthru
          _
        // Predicated region
        $region37: #{tpu_custom_call.1} parent=19 // pred_check
          %p543 = pneg %p170
        $region38: #{tpu_custom_call.1} parent=19 // pred_check_branch
          %545 = sbr.rel (%p543) target = $region40
        $region39: #{tpu_custom_call.1} parent=19 // pred_region
          %p546 = scmp.lt.s32.totalorder %s25, 1
          %s547 = scalar_select %p546, %s25, 1
          %s548 = smul.addr %s547, 4
          %s549 = smul.addr %s548, 8
          %s550 = scalar_lea.vmem %s5, %s549
        $region40: #{tpu_custom_call.1} parent=19 // pred_fallthru
          _
        // Predicated region
        $region41: #{tpu_custom_call.1} parent=19 // pred_check
          %p551 = pneg %p196
        $region42: #{tpu_custom_call.1} parent=19 // pred_check_branch
          %553 = sbr.rel (%p551) target = $region44
        $region43: #{tpu_custom_call.1} parent=19 // pred_region
          %p554 = scmp.lt.s32.totalorder %s25, 1
          %s555 = scalar_select %p554, %s25, 1
          %s556 = scalar_lea.vmem %s6, %s555
        $region44: #{tpu_custom_call.1} parent=19 // pred_fallthru
          _
        // Predicated region
        $region45: #{tpu_custom_call.1} parent=19 // pred_check
          %p557 = pneg %p222
        $region46: #{tpu_custom_call.1} parent=19 // pred_check_branch
          %559 = sbr.rel (%p557) target = $region48
        $region47: #{tpu_custom_call.1} parent=19 // pred_region
          %p560 = scmp.lt.s32.totalorder %s25, 1
          %s561 = scalar_select %p560, %s25, 1
          %s562 = smul.addr %s561, 4
          %s563 = smul.addr %s562, 8
          %s564 = scalar_lea.vmem %s7, %s563
        $region48: #{tpu_custom_call.1} parent=19 // pred_fallthru
          _
        // Predicated region
        $region49: #{tpu_custom_call.1} parent=19 // pred_check
          %p565 = pneg %p248
        $region50: #{tpu_custom_call.1} parent=19 // pred_check_branch
          %567 = sbr.rel (%p565) target = $region52
        $region51: #{tpu_custom_call.1} parent=19 // pred_region
          %p568 = scmp.lt.s32.totalorder %s25, 1
          %s569 = scalar_select %p568, %s25, 1
          %s570 = scalar_lea.vmem %s8, %s569
        $region52: #{tpu_custom_call.1} parent=19 // pred_fallthru
          _
        // Predicated region
        $region53: #{tpu_custom_call.1} parent=19 // pred_check
          %p571 = pneg %p274
        $region54: #{tpu_custom_call.1} parent=19 // pred_check_branch
          %573 = sbr.rel (%p571) target = $region56
        $region55: #{tpu_custom_call.1} parent=19 // pred_region
          %p574 = scmp.lt.s32.totalorder %s25, 1
          %s575 = scalar_select %p574, %s25, 1
          %s576 = scalar_lea.vmem %s9, %s575
        $region56: #{tpu_custom_call.1} parent=19 // pred_fallthru
          _
        // Predicated region
        $region57: #{tpu_custom_call.1} parent=19 // pred_check
          %p577 = pneg %p300
        $region58: #{tpu_custom_call.1} parent=19 // pred_check_branch
          %579 = sbr.rel (%p577) target = $region60
        $region59: #{tpu_custom_call.1} parent=19 // pred_region
          %p580 = scmp.lt.s32.totalorder %s25, 1
          %s581 = scalar_select %p580, %s25, 1
          %s582 = scalar_lea.vmem %s10, %s581
        $region60: #{tpu_custom_call.1} parent=19 // pred_fallthru
          _
        // Predicated region
        $region61: #{tpu_custom_call.1} parent=19 // pred_check
          %p583 = pneg %p326
        $region62: #{tpu_custom_call.1} parent=19 // pred_check_branch
          %585 = sbr.rel (%p583) target = $region64
        $region63: #{tpu_custom_call.1} parent=19 // pred_region
          %p586 = scmp.lt.s32.totalorder %s25, 1
          %s587 = scalar_select %p586, %s25, 1
          %s588 = smul.addr %s587, 4
          %s589 = smul.addr %s588, 8
          %s590 = scalar_lea.vmem %s11, %s589
        $region64: #{tpu_custom_call.1} parent=19 // pred_fallthru
          _
        // Predicated region
        $region65: #{tpu_custom_call.1} parent=19 // pred_check
          %p591 = pneg %p352
        $region66: #{tpu_custom_call.1} parent=19 // pred_check_branch
          %593 = sbr.rel (%p591) target = $region68
        $region67: #{tpu_custom_call.1} parent=19 // pred_region
          %p594 = scmp.lt.s32.totalorder %s25, 1
          %s595 = scalar_select %p594, %s25, 1
          %s596 = scalar_lea.vmem %s12, %s595
        $region68: #{tpu_custom_call.1} parent=19 // pred_fallthru
          _
        // Predicated region
        $region69: #{tpu_custom_call.1} parent=19 // pred_check
          %p597 = pneg %p378
        $region70: #{tpu_custom_call.1} parent=19 // pred_check_branch
          %599 = sbr.rel (%p597) target = $region72
        $region71: #{tpu_custom_call.1} parent=19 // pred_region
          %p600 = scmp.lt.s32.totalorder %s25, 1
          %s601 = scalar_select %p600, %s25, 1
          %s602 = smul.addr %s601, 16
          %s603 = smul.addr %s602, 8
          %s604 = scalar_lea.vmem %s13, %s603
        $region72: #{tpu_custom_call.1} parent=19 // pred_fallthru
          _
        // Predicated region
        $region73: #{tpu_custom_call.1} parent=19 // pred_check
          %p605 = pneg %p404
        $region74: #{tpu_custom_call.1} parent=19 // pred_check_branch
          %607 = sbr.rel (%p605) target = $region76
        $region75: #{tpu_custom_call.1} parent=19 // pred_region
          %p608 = scmp.lt.s32.totalorder %s25, 1
          %s609 = scalar_select %p608, %s25, 1
          %s610 = scalar_lea.vmem %s14, %s609
        $region76: #{tpu_custom_call.1} parent=19 // pred_fallthru
          _
        // Predicated region
        $region77: #{tpu_custom_call.1} parent=19 // pred_check
          %p611 = pneg %p430
        $region78: #{tpu_custom_call.1} parent=19 // pred_check_branch
          %613 = sbr.rel (%p611) target = $region80
        $region79: #{tpu_custom_call.1} parent=19 // pred_region
          %p614 = scmp.lt.s32.totalorder %s25, 1
          %s615 = scalar_select %p614, %s25, 1
          %s616 = scalar_lea.vmem %s15, %s615
        $region80: #{tpu_custom_call.1} parent=19 // pred_fallthru
          _
        // Predicated region
        $region81: #{tpu_custom_call.1} parent=19 // pred_check
          %p617 = pneg %p456
        $region82: #{tpu_custom_call.1} parent=19 // pred_check_branch
          %619 = sbr.rel (%p617) target = $region84
        $region83: #{tpu_custom_call.1} parent=19 // pred_region
          %p620 = scmp.lt.s32.totalorder %s25, 1
          %s621 = scalar_select %p620, %s25, 1
          %s622 = scalar_lea.vmem %s16, %s621
        $region84: #{tpu_custom_call.1} parent=19 // pred_fallthru
          _
      $region20: #{tpu_custom_call.1} parent=5 // pred_fallthru
        _
      %p623 = scmp.le.s32.totalorder 1, %s25
      %p624 = scmp.lt.s32.totalorder %s25, 3
      %p625 = pnand %p623, %p624
      %p626 = pneg %p625
      // Predicated region
      $region85: #{tpu_custom_call.1} parent=5 // pred_check
        _
      $region86: #{tpu_custom_call.1} parent=5 // pred_check_branch
        %628 = sbr.rel (%p625) target = $region88
      $region87: #{tpu_custom_call.1} parent=5 // pred_region
        %s629 = ssub.s32 %s25, 1
        // Predicated region
        $region89: #{tpu_custom_call.1} parent=87 // pred_check
          %p630 = pneg %p46
        $region90: #{tpu_custom_call.1} parent=87 // pred_check_branch
          %632 = sbr.rel (%p630) target = $region92
        $region91: #{tpu_custom_call.1} parent=87 // pred_region
          %633 = dma.done [#allocation5], 256
        $region92: #{tpu_custom_call.1} parent=87 // pred_fallthru
          _
        %p634 = pneg %p46
        %p635 = pneg %p43
        %p636 = scmp.lt.s32.totalorder %s30, 1
        %s637 = scalar_select %p636, %s30, 1
        %s638 = smul.addr %s637, 4
        %s639 = smul.addr %s638, 8
        %s640 = scalar_lea.vmem %s1, %s639
        %p641 = pneg %p72
        %p642 = pneg %p69
        %p643 = scmp.lt.s32.totalorder %s30, 1
        %s644 = scalar_select %p643, %s30, 1
        %s645 = scalar_lea.vmem %s2, %s644
        %p646 = pneg %p98
        %p647 = pneg %p95
        %p648 = scmp.lt.s32.totalorder %s30, 1
        %s649 = scalar_select %p648, %s30, 1
        %s650 = smul.addr %s649, 4
        %s651 = smul.addr %s650, 8
        %s652 = scalar_lea.vmem %s3, %s651
        %p653 = pneg %p124
        %p654 = pneg %p121
        %p655 = scmp.lt.s32.totalorder %s30, 1
        %s656 = scalar_select %p655, %s30, 1
        %s657 = scalar_lea.vmem %s4, %s656
        %p658 = pneg %p150
        %p659 = pneg %p147
        %p660 = scmp.lt.s32.totalorder %s30, 1
        %s661 = scalar_select %p660, %s30, 1
        %s662 = smul.addr %s661, 4
        %s663 = smul.addr %s662, 8
        %s664 = scalar_lea.vmem %s5, %s663
        %p665 = pneg %p176
        %p666 = pneg %p173
        %p667 = scmp.lt.s32.totalorder %s30, 1
        %s668 = scalar_select %p667, %s30, 1
        %s669 = scalar_lea.vmem %s6, %s668
        %p670 = pneg %p202
        %p671 = pneg %p199
        %p672 = scmp.lt.s32.totalorder %s30, 1
        %s673 = scalar_select %p672, %s30, 1
        %s674 = smul.addr %s673, 4
        %s675 = smul.addr %s674, 8
        %s676 = scalar_lea.vmem %s7, %s675
        %p677 = pneg %p228
        %p678 = pneg %p225
        %p679 = scmp.lt.s32.totalorder %s30, 1
        %s680 = scalar_select %p679, %s30, 1
        %s681 = scalar_lea.vmem %s8, %s680
        %p682 = pneg %p254
        %p683 = pneg %p251
        %p684 = scmp.lt.s32.totalorder %s30, 1
        %s685 = scalar_select %p684, %s30, 1
        %s686 = scalar_lea.vmem %s9, %s685
        %p687 = pneg %p280
        %p688 = pneg %p277
        %p689 = scmp.lt.s32.totalorder %s30, 1
        %s690 = scalar_select %p689, %s30, 1
        %s691 = scalar_lea.vmem %s10, %s690
        %p692 = pneg %p306
        %p693 = pneg %p303
        %p694 = scmp.lt.s32.totalorder %s30, 1
        %s695 = scalar_select %p694, %s30, 1
        %s696 = smul.addr %s695, 4
        %s697 = smul.addr %s696, 8
        %s698 = scalar_lea.vmem %s11, %s697
        %p699 = pneg %p332
        %p700 = pneg %p329
        %p701 = scmp.lt.s32.totalorder %s30, 1
        %s702 = scalar_select %p701, %s30, 1
        %s703 = scalar_lea.vmem %s12, %s702
        %p704 = pneg %p358
        %p705 = pneg %p355
        %p706 = scmp.lt.s32.totalorder %s30, 1
        %s707 = scalar_select %p706, %s30, 1
        %s708 = smul.addr %s707, 16
        %s709 = smul.addr %s708, 8
        %s710 = scalar_lea.vmem %s13, %s709
        %p711 = pneg %p384
        %p712 = pneg %p381
        %p713 = scmp.lt.s32.totalorder %s30, 1
        %s714 = scalar_select %p713, %s30, 1
        %s715 = scalar_lea.vmem %s14, %s714
        %p716 = pneg %p410
        %p717 = pneg %p407
        %p718 = scmp.lt.s32.totalorder %s30, 1
        %s719 = scalar_select %p718, %s30, 1
        %s720 = scalar_lea.vmem %s15, %s719
        %p721 = pneg %p436
        %p722 = pneg %p433
        %p723 = scmp.lt.s32.totalorder %s30, 1
        %s724 = scalar_select %p723, %s30, 1
        %s725 = scalar_lea.vmem %s16, %s724
        %p726 = pneg %p462
        %p727 = pneg %p459
        %p728 = pneg %p483
        %p729 = pneg %p480
        %p730 = scmp.lt.s32.totalorder %s30, 1
        %s731 = scalar_select %p730, %s30, 1
        %s732 = smul.addr %s731, 4
        %s733 = smul.addr %s732, 8
        %s734 = scalar_lea.vmem %s1, %s733
        %p735 = scmp.lt.s32.totalorder %s30, 1
        %s736 = scalar_select %p735, %s30, 1
        %s737 = scalar_lea.vmem %s2, %s736
        %p738 = scmp.lt.s32.totalorder %s30, 1
        %s739 = scalar_select %p738, %s30, 1
        %s740 = smul.addr %s739, 4
        %s741 = smul.addr %s740, 8
        %s742 = scalar_lea.vmem %s3, %s741
        %p743 = scmp.lt.s32.totalorder %s30, 1
        %s744 = scalar_select %p743, %s30, 1
        %s745 = scalar_lea.vmem %s4, %s744
        %p746 = scmp.lt.s32.totalorder %s30, 1
        %s747 = scalar_select %p746, %s30, 1
        %s748 = smul.addr %s747, 4
        %s749 = smul.addr %s748, 8
        %s750 = scalar_lea.vmem %s5, %s749
        %p751 = scmp.lt.s32.totalorder %s30, 1
        %s752 = scalar_select %p751, %s30, 1
        %s753 = scalar_lea.vmem %s6, %s752
        %p754 = scmp.lt.s32.totalorder %s30, 1
        %s755 = scalar_select %p754, %s30, 1
        %s756 = smul.addr %s755, 4
        %s757 = smul.addr %s756, 8
        %s758 = scalar_lea.vmem %s7, %s757
        %p759 = scmp.lt.s32.totalorder %s30, 1
        %s760 = scalar_select %p759, %s30, 1
        %s761 = scalar_lea.vmem %s8, %s760
        %p762 = scmp.lt.s32.totalorder %s30, 1
        %s763 = scalar_select %p762, %s30, 1
        %s764 = scalar_lea.vmem %s9, %s763
        %p765 = scmp.lt.s32.totalorder %s30, 1
        %s766 = scalar_select %p765, %s30, 1
        %s767 = scalar_lea.vmem %s10, %s766
        %p768 = scmp.lt.s32.totalorder %s30, 1
        %s769 = scalar_select %p768, %s30, 1
        %s770 = smul.addr %s769, 4
        %s771 = smul.addr %s770, 8
        %s772 = scalar_lea.vmem %s11, %s771
        %p773 = scmp.lt.s32.totalorder %s30, 1
        %s774 = scalar_select %p773, %s30, 1
        %s775 = scalar_lea.vmem %s12, %s774
        %p776 = scmp.lt.s32.totalorder %s30, 1
        %s777 = scalar_select %p776, %s30, 1
        %s778 = smul.addr %s777, 16
        %s779 = smul.addr %s778, 8
        %s780 = scalar_lea.vmem %s13, %s779
        %p781 = scmp.lt.s32.totalorder %s30, 1
        %s782 = scalar_select %p781, %s30, 1
        %s783 = scalar_lea.vmem %s14, %s782
        %p784 = scmp.lt.s32.totalorder %s30, 1
        %s785 = scalar_select %p784, %s30, 1
        %s786 = scalar_lea.vmem %s15, %s785
        %p787 = scmp.lt.s32.totalorder %s30, 1
        %s788 = scalar_select %p787, %s30, 1
        %s789 = scalar_lea.vmem %s16, %s788
        %p790 = scmp.eq.s32.totalorder %s30, 0
        // Predicated region
        $region93: #{tpu_custom_call.1} parent=87 // pred_check
          %p791 = pneg %p790
        $region94: #{tpu_custom_call.1} parent=87 // pred_check_branch
          %793 = sbr.rel (%p791) target = $region96
        $region95: #{tpu_custom_call.1} parent=87 // pred_region
          %v794 = vld [vmem:[#allocation4] sm:$0xff]
          %v795 = vld [vmem:[#allocation4 + $0x8] sm:$0xff]
          %vm796 = vcmask 261120
          %797 = vst.msk [vmem:[#allocation2] sm:$0xff] %vm796, %v794
          %798 = vst.msk [vmem:[#allocation2 + $0x8] sm:$0xff] %vm796, %v795
        $region96: #{tpu_custom_call.1} parent=87 // pred_fallthru
          _
        %v799 = vld [vmem:[#allocation2] sm:$0xff]
        %v800 = vld [vmem:[#allocation2 + $0x8] sm:$0xff]
        %v801 = vld [vmem:[%s734] sm:$0xff]
        %v802 = vld [vmem:[%s734 + $0x8] sm:$0xff]
        %v803 = vld [vmem:[%s734 + $0x10] sm:$0xff]
        %v804 = vld [vmem:[%s734 + $0x18] sm:$0xff]
        %v805 = vld [vmem:[%s737] sm:$0x1]
        %v807 = vlaneseq
        %v808 = vshrl.u32 %v807, 7
        %v809 = vsub.s32 0, %v808
        %v810 = vrot.slane %v805, %v809
        %vm812 = vcmask 261120
        %v814 = vsel %vm812, %v799, 0
        %v817 = vsel %vm812, %v800, 0
        %819 = vmatprep.subr.mxu0 0.0
        %820 = vmatpush1.msra.mxu0 %v801
        %821 = vmatprep.subr.mxu0 0.0
        %822 = vmatpush1.msra.mxu0 %v802
        %823 = vmatprep.subr.mxu0 0.0
        %824 = vmatpush1.msra.mxu0 %v803
        %825 = vmatprep.subr.mxu0 0.0
        %826 = vmatpush1.msra.mxu0 %v804
        %827 = vmatprep.subr.mxu0 0.0
        %828 = vmatpush1.msra.mxu0 0.0
        %829 = vmatprep.subr.mxu0 0.0
        %830 = vmatpush1.msra.mxu0 0.0
        %831 = vmatprep.subr.mxu0 0.0
        %832 = vmatpush1.msra.mxu0 0.0
        %833 = vmatprep.subr.mxu0 0.0
        %834 = vmatpush1.msra.mxu0 0.0
        %835 = vmatprep.subr.mxu0 0.0
        %836 = vmatpush1.msra.mxu0 0.0
        %837 = vmatprep.subr.mxu0 0.0
        %838 = vmatpush1.msra.mxu0 0.0
        %839 = vmatprep.subr.mxu0 0.0
        %840 = vmatpush1.msra.mxu0 0.0
        %841 = vmatprep.subr.mxu0 0.0
        %842 = vmatpush1.msra.mxu0 0.0
        %843 = vmatprep.subr.mxu0 0.0
        %844 = vmatpush1.msra.mxu0 0.0
        %845 = vmatprep.subr.mxu0 0.0
        %846 = vmatpush1.msra.mxu0 0.0
        %847 = vmatprep.subr.mxu0 0.0
        %848 = vmatpush1.msra.mxu0 0.0
        %849 = vmatprep.subr.mxu0 0.0
        %850 = vmatpush1.msra.mxu0 0.0
        %851 = vmatprep.subr.mxu0 0.0
        %852 = vmatpush1.msra.mxu0 0.0
        %853 = vmatprep.subr.mxu0 0.0
        %854 = vmatpush1.msra.mxu0 0.0
        %855 = vmatprep.subr.mxu0 0.0
        %856 = vmatpush1.msra.mxu0 0.0
        %857 = vmatprep.subr.mxu0 0.0
        %858 = vmatpush1.msra.mxu0 0.0
        %859 = vmatprep.subr.mxu0 0.0
        %860 = vmatpush1.msra.mxu0 0.0
        %861 = vmatprep.subr.mxu0 0.0
        %862 = vmatpush1.msra.mxu0 0.0
        %863 = vmatprep.subr.mxu0 0.0
        %864 = vmatpush1.msra.mxu0 0.0
        %865 = vmatprep.subr.mxu0 0.0
        %866 = vmatpush1.msra.mxu0 0.0
        %867 = vmatprep.subr.mxu0 0.0
        %868 = vmatpush1.msra.mxu0 0.0
        %869 = vmatprep.subr.mxu0 0.0
        %870 = vmatpush1.msra.mxu0 0.0
        %871 = vmatprep.subr.mxu0 0.0
        %872 = vmatpush1.msra.mxu0 0.0
        %873 = vmatprep.subr.mxu0 0.0
        %874 = vmatpush1.msra.mxu0 0.0
        %875 = vmatprep.subr.mxu0 0.0
        %876 = vmatpush1.msra.mxu0 0.0
        %877 = vmatprep.subr.mxu0 0.0
        %878 = vmatpush1.msra.mxu0 0.0
        %879 = vmatprep.subr.mxu0 0.0
        %880 = vmatpush1.msra.mxu0 0.0
        %881 = vmatprep.subr.mxu0 0.0
        %882 = vmatpush1.msra.mxu0 0.0
        %883 = vmatprep.mubr.f32.mxu0 0.0
        %884 = vmatmul.mubr.f32.gmra.mrb[0].mxu0 %v814
        %v885 = vpop.f32.mrb[0].mxu0
        %v886 = vadd.f32 %v810, %v885
        %v887 = vpop.f32.mrb[0].mxu0
        %888 = vmatprep.mubr.f32.mxu0 0.0
        %889 = vmatmul.mubr.f32.gmra.mrb[0].mxu0 %v817
        %v890 = vpop.f32.mrb[0].mxu0
        %v891 = vadd.f32 %v810, %v890
        %v892 = vpop.f32.mrb[0].mxu0
        %893 = vdwg.mxu0
        %v894 = vld [vmem:[%s742] sm:$0xff]
        %v895 = vld [vmem:[%s742 + $0x8] sm:$0xff]
        %v896 = vld [vmem:[%s742 + $0x10] sm:$0xff]
        %v897 = vld [vmem:[%s742 + $0x18] sm:$0xff]
        %v898 = vld [vmem:[%s745] sm:$0x1]
        %v900 = vlaneseq
        %v901 = vshrl.u32 %v900, 7
        %v902 = vsub.s32 0, %v901
        %v903 = vrot.slane %v898, %v902
        %905 = vmatprep.subr.mxu0 0.0
        %906 = vmatpush1.msra.mxu0 %v894
        %907 = vmatprep.subr.mxu0 0.0
        %908 = vmatpush1.msra.mxu0 %v895
        %909 = vmatprep.subr.mxu0 0.0
        %910 = vmatpush1.msra.mxu0 %v896
        %911 = vmatprep.subr.mxu0 0.0
        %912 = vmatpush1.msra.mxu0 %v897
        %913 = vmatprep.subr.mxu0 0.0
        %914 = vmatpush1.msra.mxu0 0.0
        %915 = vmatprep.subr.mxu0 0.0
        %916 = vmatpush1.msra.mxu0 0.0
        %917 = vmatprep.subr.mxu0 0.0
        %918 = vmatpush1.msra.mxu0 0.0
        %919 = vmatprep.subr.mxu0 0.0
        %920 = vmatpush1.msra.mxu0 0.0
        %921 = vmatprep.subr.mxu0 0.0
        %922 = vmatpush1.msra.mxu0 0.0
        %923 = vmatprep.subr.mxu0 0.0
        %924 = vmatpush1.msra.mxu0 0.0
        %925 = vmatprep.subr.mxu0 0.0
        %926 = vmatpush1.msra.mxu0 0.0
        %927 = vmatprep.subr.mxu0 0.0
        %928 = vmatpush1.msra.mxu0 0.0
        %929 = vmatprep.subr.mxu0 0.0
        %930 = vmatpush1.msra.mxu0 0.0
        %931 = vmatprep.subr.mxu0 0.0
        %932 = vmatpush1.msra.mxu0 0.0
        %933 = vmatprep.subr.mxu0 0.0
        %934 = vmatpush1.msra.mxu0 0.0
        %935 = vmatprep.subr.mxu0 0.0
        %936 = vmatpush1.msra.mxu0 0.0
        %937 = vmatprep.subr.mxu0 0.0
        %938 = vmatpush1.msra.mxu0 0.0
        %939 = vmatprep.subr.mxu0 0.0
        %940 = vmatpush1.msra.mxu0 0.0
        %941 = vmatprep.subr.mxu0 0.0
        %942 = vmatpush1.msra.mxu0 0.0
        %943 = vmatprep.subr.mxu0 0.0
        %944 = vmatpush1.msra.mxu0 0.0
        %945 = vmatprep.subr.mxu0 0.0
        %946 = vmatpush1.msra.mxu0 0.0
        %947 = vmatprep.subr.mxu0 0.0
        %948 = vmatpush1.msra.mxu0 0.0
        %949 = vmatprep.subr.mxu0 0.0
        %950 = vmatpush1.msra.mxu0 0.0
        %951 = vmatprep.subr.mxu0 0.0
        %952 = vmatpush1.msra.mxu0 0.0
        %953 = vmatprep.subr.mxu0 0.0
        %954 = vmatpush1.msra.mxu0 0.0
        %955 = vmatprep.subr.mxu0 0.0
        %956 = vmatpush1.msra.mxu0 0.0
        %957 = vmatprep.subr.mxu0 0.0
        %958 = vmatpush1.msra.mxu0 0.0
        %959 = vmatprep.subr.mxu0 0.0
        %960 = vmatpush1.msra.mxu0 0.0
        %961 = vmatprep.subr.mxu0 0.0
        %962 = vmatpush1.msra.mxu0 0.0
        %963 = vmatprep.subr.mxu0 0.0
        %964 = vmatpush1.msra.mxu0 0.0
        %965 = vmatprep.subr.mxu0 0.0
        %966 = vmatpush1.msra.mxu0 0.0
        %967 = vmatprep.subr.mxu0 0.0
        %968 = vmatpush1.msra.mxu0 0.0
        %969 = vmatprep.mubr.f32.mxu0 0.0
        %970 = vmatmul.mubr.f32.gmra.mrb[0].mxu0 %v814
        %v971 = vpop.f32.mrb[0].mxu0
        %v972 = vadd.f32 %v903, %v971
        %v973 = vpop.f32.mrb[0].mxu0
        %974 = vmatprep.mubr.f32.mxu0 0.0
        %975 = vmatmul.mubr.f32.gmra.mrb[0].mxu0 %v817
        %v976 = vpop.f32.mrb[0].mxu0
        %v977 = vadd.f32 %v903, %v976
        %v978 = vpop.f32.mrb[0].mxu0
        %979 = vdwg.mxu0
        %v980 = vld [vmem:[%s750] sm:$0xff]
        %v981 = vld [vmem:[%s750 + $0x8] sm:$0xff]
        %v982 = vld [vmem:[%s750 + $0x10] sm:$0xff]
        %v983 = vld [vmem:[%s750 + $0x18] sm:$0xff]
        %v984 = vld [vmem:[%s753] sm:$0x1]
        %v986 = vlaneseq
        %v987 = vshrl.u32 %v986, 7
        %v988 = vsub.s32 0, %v987
        %v989 = vrot.slane %v984, %v988
        %991 = vmatprep.subr.mxu0 0.0
        %992 = vmatpush1.msra.mxu0 %v980
        %993 = vmatprep.subr.mxu0 0.0
        %994 = vmatpush1.msra.mxu0 %v981
        %995 = vmatprep.subr.mxu0 0.0
        %996 = vmatpush1.msra.mxu0 %v982
        %997 = vmatprep.subr.mxu0 0.0
        %998 = vmatpush1.msra.mxu0 %v983
        %999 = vmatprep.subr.mxu0 0.0
        %1000 = vmatpush1.msra.mxu0 0.0
        %1001 = vmatprep.subr.mxu0 0.0
        %1002 = vmatpush1.msra.mxu0 0.0
        %1003 = vmatprep.subr.mxu0 0.0
        %1004 = vmatpush1.msra.mxu0 0.0
        %1005 = vmatprep.subr.mxu0 0.0
        %1006 = vmatpush1.msra.mxu0 0.0
        %1007 = vmatprep.subr.mxu0 0.0
        %1008 = vmatpush1.msra.mxu0 0.0
        %1009 = vmatprep.subr.mxu0 0.0
        %1010 = vmatpush1.msra.mxu0 0.0
        %1011 = vmatprep.subr.mxu0 0.0
        %1012 = vmatpush1.msra.mxu0 0.0
        %1013 = vmatprep.subr.mxu0 0.0
        %1014 = vmatpush1.msra.mxu0 0.0
        %1015 = vmatprep.subr.mxu0 0.0
        %1016 = vmatpush1.msra.mxu0 0.0
        %1017 = vmatprep.subr.mxu0 0.0
        %1018 = vmatpush1.msra.mxu0 0.0
        %1019 = vmatprep.subr.mxu0 0.0
        %1020 = vmatpush1.msra.mxu0 0.0
        %1021 = vmatprep.subr.mxu0 0.0
        %1022 = vmatpush1.msra.mxu0 0.0
        %1023 = vmatprep.subr.mxu0 0.0
        %1024 = vmatpush1.msra.mxu0 0.0
        %1025 = vmatprep.subr.mxu0 0.0
        %1026 = vmatpush1.msra.mxu0 0.0
        %1027 = vmatprep.subr.mxu0 0.0
        %1028 = vmatpush1.msra.mxu0 0.0
        %1029 = vmatprep.subr.mxu0 0.0
        %1030 = vmatpush1.msra.mxu0 0.0
        %1031 = vmatprep.subr.mxu0 0.0
        %1032 = vmatpush1.msra.mxu0 0.0
        %1033 = vmatprep.subr.mxu0 0.0
        %1034 = vmatpush1.msra.mxu0 0.0
        %1035 = vmatprep.subr.mxu0 0.0
        %1036 = vmatpush1.msra.mxu0 0.0
        %1037 = vmatprep.subr.mxu0 0.0
        %1038 = vmatpush1.msra.mxu0 0.0
        %1039 = vmatprep.subr.mxu0 0.0
        %1040 = vmatpush1.msra.mxu0 0.0
        %1041 = vmatprep.subr.mxu0 0.0
        %1042 = vmatpush1.msra.mxu0 0.0
        %1043 = vmatprep.subr.mxu0 0.0
        %1044 = vmatpush1.msra.mxu0 0.0
        %1045 = vmatprep.subr.mxu0 0.0
        %1046 = vmatpush1.msra.mxu0 0.0
        %1047 = vmatprep.subr.mxu0 0.0
        %1048 = vmatpush1.msra.mxu0 0.0
        %1049 = vmatprep.subr.mxu0 0.0
        %1050 = vmatpush1.msra.mxu0 0.0
        %1051 = vmatprep.subr.mxu0 0.0
        %1052 = vmatpush1.msra.mxu0 0.0
        %1053 = vmatprep.subr.mxu0 0.0
        %1054 = vmatpush1.msra.mxu0 0.0
        %1055 = vmatprep.mubr.f32.mxu0 0.0
        %1056 = vmatmul.mubr.f32.gmra.mrb[0].mxu0 %v814
        %v1057 = vpop.f32.mrb[0].mxu0
        %v1058 = vadd.f32 %v989, %v1057
        %v1059 = vpop.f32.mrb[0].mxu0
        %1060 = vmatprep.mubr.f32.mxu0 0.0
        %1061 = vmatmul.mubr.f32.gmra.mrb[0].mxu0 %v817
        %v1062 = vpop.f32.mrb[0].mxu0
        %v1063 = vadd.f32 %v989, %v1062
        %v1064 = vpop.f32.mrb[0].mxu0
        %1065 = vdwg.mxu0
        %v1066 = vmul.f32 %v886, 0.35355338
        %v1067 = vmul.f32 %v891, 0.35355338
        %1069 = vrot.lane.b32.xlu0 %v1066, 120
        %v1070 = vpop.permute.xlu0 %1069
        %1071 = vrot.lane.b32.xlu0 %v1066, 112
        %v1072 = vpop.permute.xlu0 %1071
        %1073 = vrot.lane.b32.xlu0 %v1066, 104
        %v1074 = vpop.permute.xlu0 %1073
        %1076 = vrot.lane.b32.xlu0 %v972, 120
        %v1077 = vpop.permute.xlu0 %1076
        %1079 = vrot.lane.b32.xlu0 %v972, 112
        %v1080 = vpop.permute.xlu0 %1079
        %1082 = vrot.lane.b32.xlu0 %v972, 104
        %v1083 = vpop.permute.xlu0 %1082
        %1086 = vrot.lane.b32.xlu0 %v1058, 120
        %v1087 = vpop.permute.xlu0 %1086
        %1089 = vrot.lane.b32.xlu0 %v1058, 112
        %v1090 = vpop.permute.xlu0 %1089
        %1092 = vrot.lane.b32.xlu0 %v1058, 104
        %v1093 = vpop.permute.xlu0 %1092
        %1095 = vxpose.xlu0.b32.start [1/16] %v972, 128
        %1096 = vxpose.xlu0.b32.cont [2/16] 0.0, 128
        %1097 = vxpose.xlu0.b32.cont [3/16] 0.0, 128
        %1098 = vxpose.xlu0.b32.cont [4/16] 0.0, 128
        %1099 = vxpose.xlu0.b32.cont [5/16] 0.0, 128
        %1100 = vxpose.xlu0.b32.cont [6/16] 0.0, 128
        %1101 = vxpose.xlu0.b32.cont [7/16] 0.0, 128
        %1102 = vxpose.xlu0.b32.cont [8/16] 0.0, 128
        %1103 = vxpose.xlu0.b32.cont [9/16] 0.0, 128
        %1104 = vxpose.xlu0.b32.cont [10/16] 0.0, 128
        %1105 = vxpose.xlu0.b32.cont [11/16] 0.0, 128
        %1106 = vxpose.xlu0.b32.cont [12/16] 0.0, 128
        %1107 = vxpose.xlu0.b32.cont [13/16] 0.0, 128
        %1108 = vxpose.xlu0.b32.cont [14/16] 0.0, 128
        %1109 = vxpose.xlu0.b32.cont [15/16] 0.0, 128
        %1110 = vxpose.xlu0.b32.end [16/16] 0.0, 128
        %v1111 = vpop.trf.xlu0
        %v1112 = vpop.trf.xlu0
        %v1113 = vpop.trf.xlu0
        %v1114 = vpop.trf.xlu0
        %v1115 = vpop.trf.xlu0
        %v1116 = vpop.trf.xlu0
        %v1117 = vpop.trf.xlu0
        %v1118 = vpop.trf.xlu0
        %v1119 = vpop.trf.xlu0
        %v1120 = vpop.trf.xlu0
        %v1121 = vpop.trf.xlu0
        %v1122 = vpop.trf.xlu0
        %v1123 = vpop.trf.xlu0
        %v1124 = vpop.trf.xlu0
        %v1125 = vpop.trf.xlu0
        %v1126 = vpop.trf.xlu0
        %1127 = vxpose.xlu0.b32.start [1/16] %v1077, 128
        %1128 = vxpose.xlu0.b32.cont [2/16] 0.0, 128
        %1129 = vxpose.xlu0.b32.cont [3/16] 0.0, 128
        %1130 = vxpose.xlu0.b32.cont [4/16] 0.0, 128
        %1131 = vxpose.xlu0.b32.cont [5/16] 0.0, 128
        %1132 = vxpose.xlu0.b32.cont [6/16] 0.0, 128
        %1133 = vxpose.xlu0.b32.cont [7/16] 0.0, 128
        %1134 = vxpose.xlu0.b32.cont [8/16] 0.0, 128
        %1135 = vxpose.xlu0.b32.cont [9/16] 0.0, 128
        %1136 = vxpose.xlu0.b32.cont [10/16] 0.0, 128
        %1137 = vxpose.xlu0.b32.cont [11/16] 0.0, 128
        %1138 = vxpose.xlu0.b32.cont [12/16] 0.0, 128
        %1139 = vxpose.xlu0.b32.cont [13/16] 0.0, 128
        %1140 = vxpose.xlu0.b32.cont [14/16] 0.0, 128
        %1141 = vxpose.xlu0.b32.cont [15/16] 0.0, 128
        %1142 = vxpose.xlu0.b32.end [16/16] 0.0, 128
        %v1143 = vpop.trf.xlu0
        %v1144 = vpop.trf.xlu0
        %v1145 = vpop.trf.xlu0
        %v1146 = vpop.trf.xlu0
        %v1147 = vpop.trf.xlu0
        %v1148 = vpop.trf.xlu0
        %v1149 = vpop.trf.xlu0
        %v1150 = vpop.trf.xlu0
        %v1151 = vpop.trf.xlu0
        %v1152 = vpop.trf.xlu0
        %v1153 = vpop.trf.xlu0
        %v1154 = vpop.trf.xlu0
        %v1155 = vpop.trf.xlu0
        %v1156 = vpop.trf.xlu0
        %v1157 = vpop.trf.xlu0
        %v1158 = vpop.trf.xlu0
        %1159 = vxpose.xlu0.b32.start [1/16] %v1080, 128
        %1160 = vxpose.xlu0.b32.cont [2/16] 0.0, 128
        %1161 = vxpose.xlu0.b32.cont [3/16] 0.0, 128
        %1162 = vxpose.xlu0.b32.cont [4/16] 0.0, 128
        %1163 = vxpose.xlu0.b32.cont [5/16] 0.0, 128
        %1164 = vxpose.xlu0.b32.cont [6/16] 0.0, 128
        %1165 = vxpose.xlu0.b32.cont [7/16] 0.0, 128
        %1166 = vxpose.xlu0.b32.cont [8/16] 0.0, 128
        %1167 = vxpose.xlu0.b32.cont [9/16] 0.0, 128
        %1168 = vxpose.xlu0.b32.cont [10/16] 0.0, 128
        %1169 = vxpose.xlu0.b32.cont [11/16] 0.0, 128
        %1170 = vxpose.xlu0.b32.cont [12/16] 0.0, 128
        %1171 = vxpose.xlu0.b32.cont [13/16] 0.0, 128
        %1172 = vxpose.xlu0.b32.cont [14/16] 0.0, 128
        %1173 = vxpose.xlu0.b32.cont [15/16] 0.0, 128
        %1174 = vxpose.xlu0.b32.end [16/16] 0.0, 128
        %v1175 = vpop.trf.xlu0
        %v1176 = vpop.trf.xlu0
        %v1177 = vpop.trf.xlu0
        %v1178 = vpop.trf.xlu0
        %v1179 = vpop.trf.xlu0
        %v1180 = vpop.trf.xlu0
        %v1181 = vpop.trf.xlu0
        %v1182 = vpop.trf.xlu0
        %v1183 = vpop.trf.xlu0
        %v1184 = vpop.trf.xlu0
        %v1185 = vpop.trf.xlu0
        %v1186 = vpop.trf.xlu0
        %v1187 = vpop.trf.xlu0
        %v1188 = vpop.trf.xlu0
        %v1189 = vpop.trf.xlu0
        %v1190 = vpop.trf.xlu0
        %1191 = vxpose.xlu0.b32.start [1/16] %v1083, 128
        %1192 = vxpose.xlu0.b32.cont [2/16] 0.0, 128
        %1193 = vxpose.xlu0.b32.cont [3/16] 0.0, 128
        %1194 = vxpose.xlu0.b32.cont [4/16] 0.0, 128
        %1195 = vxpose.xlu0.b32.cont [5/16] 0.0, 128
        %1196 = vxpose.xlu0.b32.cont [6/16] 0.0, 128
        %1197 = vxpose.xlu0.b32.cont [7/16] 0.0, 128
        %1198 = vxpose.xlu0.b32.cont [8/16] 0.0, 128
        %1199 = vxpose.xlu0.b32.cont [9/16] 0.0, 128
        %1200 = vxpose.xlu0.b32.cont [10/16] 0.0, 128
        %1201 = vxpose.xlu0.b32.cont [11/16] 0.0, 128
        %1202 = vxpose.xlu0.b32.cont [12/16] 0.0, 128
        %1203 = vxpose.xlu0.b32.cont [13/16] 0.0, 128
        %1204 = vxpose.xlu0.b32.cont [14/16] 0.0, 128
        %1205 = vxpose.xlu0.b32.cont [15/16] 0.0, 128
        %1206 = vxpose.xlu0.b32.end [16/16] 0.0, 128
        %v1207 = vpop.trf.xlu0
        %v1208 = vpop.trf.xlu0
        %v1209 = vpop.trf.xlu0
        %v1210 = vpop.trf.xlu0
        %v1211 = vpop.trf.xlu0
        %v1212 = vpop.trf.xlu0
        %v1213 = vpop.trf.xlu0
        %v1214 = vpop.trf.xlu0
        %v1215 = vpop.trf.xlu0
        %v1216 = vpop.trf.xlu0
        %v1217 = vpop.trf.xlu0
        %v1218 = vpop.trf.xlu0
        %v1219 = vpop.trf.xlu0
        %v1220 = vpop.trf.xlu0
        %v1221 = vpop.trf.xlu0
        %v1222 = vpop.trf.xlu0
        %vm1223 = vcmask 64512
        %v1224 = vsel %vm1223, %v1066, 0
        %1226 = vmatprep.subr.mxu0 0.0
        %1227 = vmatpush1.msra.mxu0 %v1111
        %1228 = vmatprep.subr.mxu0 0.0
        %1229 = vmatpush1.msra.mxu0 0.0
        %1230 = vmatprep.subr.mxu0 0.0
        %1231 = vmatpush1.msra.mxu0 0.0
        %1232 = vmatprep.subr.mxu0 0.0
        %1233 = vmatpush1.msra.mxu0 0.0
        %1234 = vmatprep.subr.mxu0 0.0
        %1235 = vmatpush1.msra.mxu0 0.0
        %1236 = vmatprep.subr.mxu0 0.0
        %1237 = vmatpush1.msra.mxu0 0.0
        %1238 = vmatprep.subr.mxu0 0.0
        %1239 = vmatpush1.msra.mxu0 0.0
        %1240 = vmatprep.subr.mxu0 0.0
        %1241 = vmatpush1.msra.mxu0 0.0
        %1242 = vmatprep.subr.mxu0 0.0
        %1243 = vmatpush1.msra.mxu0 0.0
        %1244 = vmatprep.subr.mxu0 0.0
        %1245 = vmatpush1.msra.mxu0 0.0
        %1246 = vmatprep.subr.mxu0 0.0
        %1247 = vmatpush1.msra.mxu0 0.0
        %1248 = vmatprep.subr.mxu0 0.0
        %1249 = vmatpush1.msra.mxu0 0.0
        %1250 = vmatprep.subr.mxu0 0.0
        %1251 = vmatpush1.msra.mxu0 0.0
        %1252 = vmatprep.subr.mxu0 0.0
        %1253 = vmatpush1.msra.mxu0 0.0
        %1254 = vmatprep.subr.mxu0 0.0
        %1255 = vmatpush1.msra.mxu0 0.0
        %1256 = vmatprep.subr.mxu0 0.0
        %1257 = vmatpush1.msra.mxu0 0.0
        %1258 = vmatprep.subr.mxu0 0.0
        %1259 = vmatpush1.msra.mxu0 0.0
        %1260 = vmatprep.subr.mxu0 0.0
        %1261 = vmatpush1.msra.mxu0 0.0
        %1262 = vmatprep.subr.mxu0 0.0
        %1263 = vmatpush1.msra.mxu0 0.0
        %1264 = vmatprep.subr.mxu0 0.0
        %1265 = vmatpush1.msra.mxu0 0.0
        %1266 = vmatprep.subr.mxu0 0.0
        %1267 = vmatpush1.msra.mxu0 0.0
        %1268 = vmatprep.subr.mxu0 0.0
        %1269 = vmatpush1.msra.mxu0 0.0
        %1270 = vmatprep.subr.mxu0 0.0
        %1271 = vmatpush1.msra.mxu0 0.0
        %1272 = vmatprep.subr.mxu0 0.0
        %1273 = vmatpush1.msra.mxu0 0.0
        %1274 = vmatprep.subr.mxu0 0.0
        %1275 = vmatpush1.msra.mxu0 0.0
        %1276 = vmatprep.subr.mxu0 0.0
        %1277 = vmatpush1.msra.mxu0 0.0
        %1278 = vmatprep.subr.mxu0 0.0
        %1279 = vmatpush1.msra.mxu0 0.0
        %1280 = vmatprep.subr.mxu0 0.0
        %1281 = vmatpush1.msra.mxu0 0.0
        %1282 = vmatprep.subr.mxu0 0.0
        %1283 = vmatpush1.msra.mxu0 0.0
        %1284 = vmatprep.subr.mxu0 0.0
        %1285 = vmatpush1.msra.mxu0 0.0
        %1286 = vmatprep.subr.mxu0 0.0
        %1287 = vmatpush1.msra.mxu0 0.0
        %1288 = vmatprep.subr.mxu0 0.0
        %1289 = vmatpush1.msra.mxu0 0.0
        %1290 = vmatprep.mubr.f32.mxu0 0.0
        %1291 = vmatmul.mubr.f32.gmra.mrb[0].mxu0 %v1224
        %v1292 = vpop.f32.mrb[0].mxu0
        %v1293 = vadd.f32 0.0, %v1292
        %v1294 = vpop.f32.mrb[0].mxu0
        %1295 = vdwg.mxu0
        %v1296 = vsel %vm1223, %v1070, 0
        %1298 = vmatprep.subr.mxu0 0.0
        %1299 = vmatpush1.msra.mxu0 %v1143
        %1300 = vmatprep.subr.mxu0 0.0
        %1301 = vmatpush1.msra.mxu0 0.0
        %1302 = vmatprep.subr.mxu0 0.0
        %1303 = vmatpush1.msra.mxu0 0.0
        %1304 = vmatprep.subr.mxu0 0.0
        %1305 = vmatpush1.msra.mxu0 0.0
        %1306 = vmatprep.subr.mxu0 0.0
        %1307 = vmatpush1.msra.mxu0 0.0
        %1308 = vmatprep.subr.mxu0 0.0
        %1309 = vmatpush1.msra.mxu0 0.0
        %1310 = vmatprep.subr.mxu0 0.0
        %1311 = vmatpush1.msra.mxu0 0.0
        %1312 = vmatprep.subr.mxu0 0.0
        %1313 = vmatpush1.msra.mxu0 0.0
        %1314 = vmatprep.subr.mxu0 0.0
        %1315 = vmatpush1.msra.mxu0 0.0
        %1316 = vmatprep.subr.mxu0 0.0
        %1317 = vmatpush1.msra.mxu0 0.0
        %1318 = vmatprep.subr.mxu0 0.0
        %1319 = vmatpush1.msra.mxu0 0.0
        %1320 = vmatprep.subr.mxu0 0.0
        %1321 = vmatpush1.msra.mxu0 0.0
        %1322 = vmatprep.subr.mxu0 0.0
        %1323 = vmatpush1.msra.mxu0 0.0
        %1324 = vmatprep.subr.mxu0 0.0
        %1325 = vmatpush1.msra.mxu0 0.0
        %1326 = vmatprep.subr.mxu0 0.0
        %1327 = vmatpush1.msra.mxu0 0.0
        %1328 = vmatprep.subr.mxu0 0.0
        %1329 = vmatpush1.msra.mxu0 0.0
        %1330 = vmatprep.subr.mxu0 0.0
        %1331 = vmatpush1.msra.mxu0 0.0
        %1332 = vmatprep.subr.mxu0 0.0
        %1333 = vmatpush1.msra.mxu0 0.0
        %1334 = vmatprep.subr.mxu0 0.0
        %1335 = vmatpush1.msra.mxu0 0.0
        %1336 = vmatprep.subr.mxu0 0.0
        %1337 = vmatpush1.msra.mxu0 0.0
        %1338 = vmatprep.subr.mxu0 0.0
        %1339 = vmatpush1.msra.mxu0 0.0
        %1340 = vmatprep.subr.mxu0 0.0
        %1341 = vmatpush1.msra.mxu0 0.0
        %1342 = vmatprep.subr.mxu0 0.0
        %1343 = vmatpush1.msra.mxu0 0.0
        %1344 = vmatprep.subr.mxu0 0.0
        %1345 = vmatpush1.msra.mxu0 0.0
        %1346 = vmatprep.subr.mxu0 0.0
        %1347 = vmatpush1.msra.mxu0 0.0
        %1348 = vmatprep.subr.mxu0 0.0
        %1349 = vmatpush1.msra.mxu0 0.0
        %1350 = vmatprep.subr.mxu0 0.0
        %1351 = vmatpush1.msra.mxu0 0.0
        %1352 = vmatprep.subr.mxu0 0.0
        %1353 = vmatpush1.msra.mxu0 0.0
        %1354 = vmatprep.subr.mxu0 0.0
        %1355 = vmatpush1.msra.mxu0 0.0
        %1356 = vmatprep.subr.mxu0 0.0
        %1357 = vmatpush1.msra.mxu0 0.0
        %1358 = vmatprep.subr.mxu0 0.0
        %1359 = vmatpush1.msra.mxu0 0.0
        %1360 = vmatprep.subr.mxu0 0.0
        %1361 = vmatpush1.msra.mxu0 0.0
        %1362 = vmatprep.mubr.f32.mxu0 0.0
        %1363 = vmatmul.mubr.f32.gmra.mrb[0].mxu0 %v1296
        %v1364 = vpop.f32.mrb[0].mxu0
        %v1365 = vadd.f32 0.0, %v1364
        %v1366 = vpop.f32.mrb[0].mxu0
        %1367 = vdwg.mxu0
        %v1368 = vsel %vm1223, %v1072, 0
        %1370 = vmatprep.subr.mxu0 0.0
        %1371 = vmatpush1.msra.mxu0 %v1175
        %1372 = vmatprep.subr.mxu0 0.0
        %1373 = vmatpush1.msra.mxu0 0.0
        %1374 = vmatprep.subr.mxu0 0.0
        %1375 = vmatpush1.msra.mxu0 0.0
        %1376 = vmatprep.subr.mxu0 0.0
        %1377 = vmatpush1.msra.mxu0 0.0
        %1378 = vmatprep.subr.mxu0 0.0
        %1379 = vmatpush1.msra.mxu0 0.0
        %1380 = vmatprep.subr.mxu0 0.0
        %1381 = vmatpush1.msra.mxu0 0.0
        %1382 = vmatprep.subr.mxu0 0.0
        %1383 = vmatpush1.msra.mxu0 0.0
        %1384 = vmatprep.subr.mxu0 0.0
        %1385 = vmatpush1.msra.mxu0 0.0
        %1386 = vmatprep.subr.mxu0 0.0
        %1387 = vmatpush1.msra.mxu0 0.0
        %1388 = vmatprep.subr.mxu0 0.0
        %1389 = vmatpush1.msra.mxu0 0.0
        %1390 = vmatprep.subr.mxu0 0.0
        %1391 = vmatpush1.msra.mxu0 0.0
        %1392 = vmatprep.subr.mxu0 0.0
        %1393 = vmatpush1.msra.mxu0 0.0
        %1394 = vmatprep.subr.mxu0 0.0
        %1395 = vmatpush1.msra.mxu0 0.0
        %1396 = vmatprep.subr.mxu0 0.0
        %1397 = vmatpush1.msra.mxu0 0.0
        %1398 = vmatprep.subr.mxu0 0.0
        %1399 = vmatpush1.msra.mxu0 0.0
        %1400 = vmatprep.subr.mxu0 0.0
        %1401 = vmatpush1.msra.mxu0 0.0
        %1402 = vmatprep.subr.mxu0 0.0
        %1403 = vmatpush1.msra.mxu0 0.0
        %1404 = vmatprep.subr.mxu0 0.0
        %1405 = vmatpush1.msra.mxu0 0.0
        %1406 = vmatprep.subr.mxu0 0.0
        %1407 = vmatpush1.msra.mxu0 0.0
        %1408 = vmatprep.subr.mxu0 0.0
        %1409 = vmatpush1.msra.mxu0 0.0
        %1410 = vmatprep.subr.mxu0 0.0
        %1411 = vmatpush1.msra.mxu0 0.0
        %1412 = vmatprep.subr.mxu0 0.0
        %1413 = vmatpush1.msra.mxu0 0.0
        %1414 = vmatprep.subr.mxu0 0.0
        %1415 = vmatpush1.msra.mxu0 0.0
        %1416 = vmatprep.subr.mxu0 0.0
        %1417 = vmatpush1.msra.mxu0 0.0
        %1418 = vmatprep.subr.mxu0 0.0
        %1419 = vmatpush1.msra.mxu0 0.0
        %1420 = vmatprep.subr.mxu0 0.0
        %1421 = vmatpush1.msra.mxu0 0.0
        %1422 = vmatprep.subr.mxu0 0.0
        %1423 = vmatpush1.msra.mxu0 0.0
        %1424 = vmatprep.subr.mxu0 0.0
        %1425 = vmatpush1.msra.mxu0 0.0
        %1426 = vmatprep.subr.mxu0 0.0
        %1427 = vmatpush1.msra.mxu0 0.0
        %1428 = vmatprep.subr.mxu0 0.0
        %1429 = vmatpush1.msra.mxu0 0.0
        %1430 = vmatprep.subr.mxu0 0.0
        %1431 = vmatpush1.msra.mxu0 0.0
        %1432 = vmatprep.subr.mxu0 0.0
        %1433 = vmatpush1.msra.mxu0 0.0
        %1434 = vmatprep.mubr.f32.mxu0 0.0
        %1435 = vmatmul.mubr.f32.gmra.mrb[0].mxu0 %v1368
        %v1436 = vpop.f32.mrb[0].mxu0
        %v1437 = vadd.f32 0.0, %v1436
        %v1438 = vpop.f32.mrb[0].mxu0
        %1439 = vdwg.mxu0
        %v1440 = vsel %vm1223, %v1074, 0
        %1442 = vmatprep.subr.mxu0 0.0
        %1443 = vmatpush1.msra.mxu0 %v1207
        %1444 = vmatprep.subr.mxu0 0.0
        %1445 = vmatpush1.msra.mxu0 0.0
        %1446 = vmatprep.subr.mxu0 0.0
        %1447 = vmatpush1.msra.mxu0 0.0
        %1448 = vmatprep.subr.mxu0 0.0
        %1449 = vmatpush1.msra.mxu0 0.0
        %1450 = vmatprep.subr.mxu0 0.0
        %1451 = vmatpush1.msra.mxu0 0.0
        %1452 = vmatprep.subr.mxu0 0.0
        %1453 = vmatpush1.msra.mxu0 0.0
        %1454 = vmatprep.subr.mxu0 0.0
        %1455 = vmatpush1.msra.mxu0 0.0
        %1456 = vmatprep.subr.mxu0 0.0
        %1457 = vmatpush1.msra.mxu0 0.0
        %1458 = vmatprep.subr.mxu0 0.0
        %1459 = vmatpush1.msra.mxu0 0.0
        %1460 = vmatprep.subr.mxu0 0.0
        %1461 = vmatpush1.msra.mxu0 0.0
        %1462 = vmatprep.subr.mxu0 0.0
        %1463 = vmatpush1.msra.mxu0 0.0
        %1464 = vmatprep.subr.mxu0 0.0
        %1465 = vmatpush1.msra.mxu0 0.0
        %1466 = vmatprep.subr.mxu0 0.0
        %1467 = vmatpush1.msra.mxu0 0.0
        %1468 = vmatprep.subr.mxu0 0.0
        %1469 = vmatpush1.msra.mxu0 0.0
        %1470 = vmatprep.subr.mxu0 0.0
        %1471 = vmatpush1.msra.mxu0 0.0
        %1472 = vmatprep.subr.mxu0 0.0
        %1473 = vmatpush1.msra.mxu0 0.0
        %1474 = vmatprep.subr.mxu0 0.0
        %1475 = vmatpush1.msra.mxu0 0.0
        %1476 = vmatprep.subr.mxu0 0.0
        %1477 = vmatpush1.msra.mxu0 0.0
        %1478 = vmatprep.subr.mxu0 0.0
        %1479 = vmatpush1.msra.mxu0 0.0
        %1480 = vmatprep.subr.mxu0 0.0
        %1481 = vmatpush1.msra.mxu0 0.0
        %1482 = vmatprep.subr.mxu0 0.0
        %1483 = vmatpush1.msra.mxu0 0.0
        %1484 = vmatprep.subr.mxu0 0.0
        %1485 = vmatpush1.msra.mxu0 0.0
        %1486 = vmatprep.subr.mxu0 0.0
        %1487 = vmatpush1.msra.mxu0 0.0
        %1488 = vmatprep.subr.mxu0 0.0
        %1489 = vmatpush1.msra.mxu0 0.0
        %1490 = vmatprep.subr.mxu0 0.0
        %1491 = vmatpush1.msra.mxu0 0.0
        %1492 = vmatprep.subr.mxu0 0.0
        %1493 = vmatpush1.msra.mxu0 0.0
        %1494 = vmatprep.subr.mxu0 0.0
        %1495 = vmatpush1.msra.mxu0 0.0
        %1496 = vmatprep.subr.mxu0 0.0
        %1497 = vmatpush1.msra.mxu0 0.0
        %1498 = vmatprep.subr.mxu0 0.0
        %1499 = vmatpush1.msra.mxu0 0.0
        %1500 = vmatprep.subr.mxu0 0.0
        %1501 = vmatpush1.msra.mxu0 0.0
        %1502 = vmatprep.subr.mxu0 0.0
        %1503 = vmatpush1.msra.mxu0 0.0
        %1504 = vmatprep.subr.mxu0 0.0
        %1505 = vmatpush1.msra.mxu0 0.0
        %1506 = vmatprep.mubr.f32.mxu0 0.0
        %1507 = vmatmul.mubr.f32.gmra.mrb[0].mxu0 %v1440
        %v1508 = vpop.f32.mrb[0].mxu0
        %v1509 = vadd.f32 0.0, %v1508
        %v1510 = vpop.f32.mrb[0].mxu0
        %1511 = vdwg.mxu0
        %v1512 = vsel %vm1223, %v1293, -inf
        %1513 = vmax.xlane.f32.xlu0 %v1512
        %v1514 = vpop.xlane.xlu0 %1513
        %v1515 = vsel %vm1223, %v1365, -inf
        %1516 = vmax.xlane.f32.xlu0 %v1515
        %v1517 = vpop.xlane.xlu0 %1516
        %v1518 = vsel %vm1223, %v1437, -inf
        %1519 = vmax.xlane.f32.xlu0 %v1518
        %v1520 = vpop.xlane.xlu0 %1519
        %v1521 = vsel %vm1223, %v1509, -inf
        %1522 = vmax.xlane.f32.xlu0 %v1521
        %v1523 = vpop.xlane.xlu0 %1522
        %v1524 = vsub.f32 %v1293, %v1514
        %v1525 = vsub.f32 %v1365, %v1517
        %v1526 = vsub.f32 %v1437, %v1520
        %v1527 = vsub.f32 %v1509, %v1523
        %v1528 = vmul.f32 %v1524, 1.442695
        %v1529 = vpow.pop %v1528
        %v1530 = vmul.f32 %v1525, 1.442695
        %v1531 = vpow.pop %v1530
        %v1532 = vmul.f32 %v1526, 1.442695
        %v1533 = vpow.pop %v1532
        %v1534 = vmul.f32 %v1527, 1.442695
        %v1535 = vpow.pop %v1534
        %v1536 = vsel %vm1223, %v1529, 0.0
        %1537 = vadd.xlane.f32.xlu0 %v1536
        %v1538 = vpop.xlane.xlu0 %1537
        %v1539 = vsel %vm1223, %v1531, 0.0
        %1540 = vadd.xlane.f32.xlu0 %v1539
        %v1541 = vpop.xlane.xlu0 %1540
        %v1542 = vsel %vm1223, %v1533, 0.0
        %1543 = vadd.xlane.f32.xlu0 %v1542
        %v1544 = vpop.xlane.xlu0 %1543
        %v1545 = vsel %vm1223, %v1535, 0.0
        %1546 = vadd.xlane.f32.xlu0 %v1545
        %v1547 = vpop.xlane.xlu0 %1546
        %v1548 = vrcp.pop %v1538
        %v1549 = vmul.f32 %v1529, %v1548
        %v1550 = vrcp.pop %v1541
        %v1551 = vmul.f32 %v1531, %v1550
        %v1552 = vrcp.pop %v1544
        %v1553 = vmul.f32 %v1533, %v1552
        %v1554 = vrcp.pop %v1547
        %v1555 = vmul.f32 %v1535, %v1554
        %1556 = vxpose.xlu0.b32.start [1/16] %v1058, 128
        %1557 = vxpose.xlu0.b32.cont [2/16] 0.0, 128
        %1558 = vxpose.xlu0.b32.cont [3/16] 0.0, 128
        %1559 = vxpose.xlu0.b32.cont [4/16] 0.0, 128
        %1560 = vxpose.xlu0.b32.cont [5/16] 0.0, 128
        %1561 = vxpose.xlu0.b32.cont [6/16] 0.0, 128
        %1562 = vxpose.xlu0.b32.cont [7/16] 0.0, 128
        %1563 = vxpose.xlu0.b32.cont [8/16] 0.0, 128
        %1564 = vxpose.xlu0.b32.cont [9/16] 0.0, 128
        %1565 = vxpose.xlu0.b32.cont [10/16] 0.0, 128
        %1566 = vxpose.xlu0.b32.cont [11/16] 0.0, 128
        %1567 = vxpose.xlu0.b32.cont [12/16] 0.0, 128
        %1568 = vxpose.xlu0.b32.cont [13/16] 0.0, 128
        %1569 = vxpose.xlu0.b32.cont [14/16] 0.0, 128
        %1570 = vxpose.xlu0.b32.cont [15/16] 0.0, 128
        %1571 = vxpose.xlu0.b32.end [16/16] 0.0, 128
        %v1572 = vpop.trf.xlu0
        %v1573 = vpop.trf.xlu0
        %v1574 = vpop.trf.xlu0
        %v1575 = vpop.trf.xlu0
        %v1576 = vpop.trf.xlu0
        %v1577 = vpop.trf.xlu0
        %v1578 = vpop.trf.xlu0
        %v1579 = vpop.trf.xlu0
        %v1580 = vpop.trf.xlu0
        %v1581 = vpop.trf.xlu0
        %v1582 = vpop.trf.xlu0
        %v1583 = vpop.trf.xlu0
        %v1584 = vpop.trf.xlu0
        %v1585 = vpop.trf.xlu0
        %v1586 = vpop.trf.xlu0
        %v1587 = vpop.trf.xlu0
        %1588 = vxpose.xlu0.b32.start [1/16] %v1087, 128
        %1589 = vxpose.xlu0.b32.cont [2/16] 0.0, 128
        %1590 = vxpose.xlu0.b32.cont [3/16] 0.0, 128
        %1591 = vxpose.xlu0.b32.cont [4/16] 0.0, 128
        %1592 = vxpose.xlu0.b32.cont [5/16] 0.0, 128
        %1593 = vxpose.xlu0.b32.cont [6/16] 0.0, 128
        %1594 = vxpose.xlu0.b32.cont [7/16] 0.0, 128
        %1595 = vxpose.xlu0.b32.cont [8/16] 0.0, 128
        %1596 = vxpose.xlu0.b32.cont [9/16] 0.0, 128
        %1597 = vxpose.xlu0.b32.cont [10/16] 0.0, 128
        %1598 = vxpose.xlu0.b32.cont [11/16] 0.0, 128
        %1599 = vxpose.xlu0.b32.cont [12/16] 0.0, 128
        %1600 = vxpose.xlu0.b32.cont [13/16] 0.0, 128
        %1601 = vxpose.xlu0.b32.cont [14/16] 0.0, 128
        %1602 = vxpose.xlu0.b32.cont [15/16] 0.0, 128
        %1603 = vxpose.xlu0.b32.end [16/16] 0.0, 128
        %v1604 = vpop.trf.xlu0
        %v1605 = vpop.trf.xlu0
        %v1606 = vpop.trf.xlu0
        %v1607 = vpop.trf.xlu0
        %v1608 = vpop.trf.xlu0
        %v1609 = vpop.trf.xlu0
        %v1610 = vpop.trf.xlu0
        %v1611 = vpop.trf.xlu0
        %v1612 = vpop.trf.xlu0
        %v1613 = vpop.trf.xlu0
        %v1614 = vpop.trf.xlu0
        %v1615 = vpop.trf.xlu0
        %v1616 = vpop.trf.xlu0
        %v1617 = vpop.trf.xlu0
        %v1618 = vpop.trf.xlu0
        %v1619 = vpop.trf.xlu0
        %1620 = vxpose.xlu0.b32.start [1/16] %v1090, 128
        %1621 = vxpose.xlu0.b32.cont [2/16] 0.0, 128
        %1622 = vxpose.xlu0.b32.cont [3/16] 0.0, 128
        %1623 = vxpose.xlu0.b32.cont [4/16] 0.0, 128
        %1624 = vxpose.xlu0.b32.cont [5/16] 0.0, 128
        %1625 = vxpose.xlu0.b32.cont [6/16] 0.0, 128
        %1626 = vxpose.xlu0.b32.cont [7/16] 0.0, 128
        %1627 = vxpose.xlu0.b32.cont [8/16] 0.0, 128
        %1628 = vxpose.xlu0.b32.cont [9/16] 0.0, 128
        %1629 = vxpose.xlu0.b32.cont [10/16] 0.0, 128
        %1630 = vxpose.xlu0.b32.cont [11/16] 0.0, 128
        %1631 = vxpose.xlu0.b32.cont [12/16] 0.0, 128
        %1632 = vxpose.xlu0.b32.cont [13/16] 0.0, 128
        %1633 = vxpose.xlu0.b32.cont [14/16] 0.0, 128
        %1634 = vxpose.xlu0.b32.cont [15/16] 0.0, 128
        %1635 = vxpose.xlu0.b32.end [16/16] 0.0, 128
        %v1636 = vpop.trf.xlu0
        %v1637 = vpop.trf.xlu0
        %v1638 = vpop.trf.xlu0
        %v1639 = vpop.trf.xlu0
        %v1640 = vpop.trf.xlu0
        %v1641 = vpop.trf.xlu0
        %v1642 = vpop.trf.xlu0
        %v1643 = vpop.trf.xlu0
        %v1644 = vpop.trf.xlu0
        %v1645 = vpop.trf.xlu0
        %v1646 = vpop.trf.xlu0
        %v1647 = vpop.trf.xlu0
        %v1648 = vpop.trf.xlu0
        %v1649 = vpop.trf.xlu0
        %v1650 = vpop.trf.xlu0
        %v1651 = vpop.trf.xlu0
        %1652 = vxpose.xlu0.b32.start [1/16] %v1093, 128
        %1653 = vxpose.xlu0.b32.cont [2/16] 0.0, 128
        %1654 = vxpose.xlu0.b32.cont [3/16] 0.0, 128
        %1655 = vxpose.xlu0.b32.cont [4/16] 0.0, 128
        %1656 = vxpose.xlu0.b32.cont [5/16] 0.0, 128
        %1657 = vxpose.xlu0.b32.cont [6/16] 0.0, 128
        %1658 = vxpose.xlu0.b32.cont [7/16] 0.0, 128
        %1659 = vxpose.xlu0.b32.cont [8/16] 0.0, 128
        %1660 = vxpose.xlu0.b32.cont [9/16] 0.0, 128
        %1661 = vxpose.xlu0.b32.cont [10/16] 0.0, 128
        %1662 = vxpose.xlu0.b32.cont [11/16] 0.0, 128
        %1663 = vxpose.xlu0.b32.cont [12/16] 0.0, 128
        %1664 = vxpose.xlu0.b32.cont [13/16] 0.0, 128
        %1665 = vxpose.xlu0.b32.cont [14/16] 0.0, 128
        %1666 = vxpose.xlu0.b32.cont [15/16] 0.0, 128
        %1667 = vxpose.xlu0.b32.end [16/16] 0.0, 128
        %v1668 = vpop.trf.xlu0
        %v1669 = vpop.trf.xlu0
        %v1670 = vpop.trf.xlu0
        %v1671 = vpop.trf.xlu0
        %v1672 = vpop.trf.xlu0
        %v1673 = vpop.trf.xlu0
        %v1674 = vpop.trf.xlu0
        %v1675 = vpop.trf.xlu0
        %v1676 = vpop.trf.xlu0
        %v1677 = vpop.trf.xlu0
        %v1678 = vpop.trf.xlu0
        %v1679 = vpop.trf.xlu0
        %v1680 = vpop.trf.xlu0
        %v1681 = vpop.trf.xlu0
        %v1682 = vpop.trf.xlu0
        %v1683 = vpop.trf.xlu0
        %v1685 = vsel %vm1223, %v1572, 0
        %v1688 = vsel %vm1223, %v1549, 0
        %1690 = vmatprep.subr.mxu0 0.0
        %1691 = vmatpush1.xpose.msra.mxu0 %v1688
        %1692 = vmatprep.subr.mxu0 0.0
        %1693 = vmatpush1.xpose.msra.mxu0 0.0
        %1694 = vmatprep.subr.mxu0 0.0
        %1695 = vmatpush1.xpose.msra.mxu0 0.0
        %1696 = vmatprep.subr.mxu0 0.0
        %1697 = vmatpush1.xpose.msra.mxu0 0.0
        %1698 = vmatprep.subr.mxu0 0.0
        %1699 = vmatpush1.xpose.msra.mxu0 0.0
        %1700 = vmatprep.subr.mxu0 0.0
        %1701 = vmatpush1.xpose.msra.mxu0 0.0
        %1702 = vmatprep.subr.mxu0 0.0
        %1703 = vmatpush1.xpose.msra.mxu0 0.0
        %1704 = vmatprep.subr.mxu0 0.0
        %1705 = vmatpush1.xpose.msra.mxu0 0.0
        %1706 = vmatprep.subr.mxu0 0.0
        %1707 = vmatpush1.xpose.msra.mxu0 0.0
        %1708 = vmatprep.subr.mxu0 0.0
        %1709 = vmatpush1.xpose.msra.mxu0 0.0
        %1710 = vmatprep.subr.mxu0 0.0
        %1711 = vmatpush1.xpose.msra.mxu0 0.0
        %1712 = vmatprep.subr.mxu0 0.0
        %1713 = vmatpush1.xpose.msra.mxu0 0.0
        %1714 = vmatprep.subr.mxu0 0.0
        %1715 = vmatpush1.xpose.msra.mxu0 0.0
        %1716 = vmatprep.subr.mxu0 0.0
        %1717 = vmatpush1.xpose.msra.mxu0 0.0
        %1718 = vmatprep.subr.mxu0 0.0
        %1719 = vmatpush1.xpose.msra.mxu0 0.0
        %1720 = vmatprep.subr.mxu0 0.0
        %1721 = vmatpush1.xpose.msra.mxu0 0.0
        %1722 = vmatprep.subr.mxu0 0.0
        %1723 = vmatpush1.xpose.msra.mxu0 0.0
        %1724 = vmatprep.subr.mxu0 0.0
        %1725 = vmatpush1.xpose.msra.mxu0 0.0
        %1726 = vmatprep.subr.mxu0 0.0
        %1727 = vmatpush1.xpose.msra.mxu0 0.0
        %1728 = vmatprep.subr.mxu0 0.0
        %1729 = vmatpush1.xpose.msra.mxu0 0.0
        %1730 = vmatprep.subr.mxu0 0.0
        %1731 = vmatpush1.xpose.msra.mxu0 0.0
        %1732 = vmatprep.subr.mxu0 0.0
        %1733 = vmatpush1.xpose.msra.mxu0 0.0
        %1734 = vmatprep.subr.mxu0 0.0
        %1735 = vmatpush1.xpose.msra.mxu0 0.0
        %1736 = vmatprep.subr.mxu0 0.0
        %1737 = vmatpush1.xpose.msra.mxu0 0.0
        %1738 = vmatprep.subr.mxu0 0.0
        %1739 = vmatpush1.xpose.msra.mxu0 0.0
        %1740 = vmatprep.subr.mxu0 0.0
        %1741 = vmatpush1.xpose.msra.mxu0 0.0
        %1742 = vmatprep.subr.mxu0 0.0
        %1743 = vmatpush1.xpose.msra.mxu0 0.0
        %1744 = vmatprep.subr.mxu0 0.0
        %1745 = vmatpush1.xpose.msra.mxu0 0.0
        %1746 = vmatprep.subr.mxu0 0.0
        %1747 = vmatpush1.xpose.msra.mxu0 0.0
        %1748 = vmatprep.subr.mxu0 0.0
        %1749 = vmatpush1.xpose.msra.mxu0 0.0
        %1750 = vmatprep.subr.mxu0 0.0
        %1751 = vmatpush1.xpose.msra.mxu0 0.0
        %1752 = vmatprep.subr.mxu0 0.0
        %1753 = vmatpush1.xpose.msra.mxu0 0.0
        %1754 = vmatprep.mubr.f32.mxu0 0.0
        %1755 = vmatmul.mubr.f32.gmra.mrb[0].mxu0 %v1685
        %v1756 = vpop.f32.mrb[0].mxu0
        %v1757 = vadd.f32 0.0, %v1756
        %v1758 = vpop.f32.mrb[0].mxu0
        %1759 = vdwg.mxu0
        %v1761 = vsel %vm1223, %v1604, 0
        %v1764 = vsel %vm1223, %v1551, 0
        %1766 = vmatprep.subr.mxu0 0.0
        %1767 = vmatpush1.xpose.msra.mxu0 %v1764
        %1768 = vmatprep.subr.mxu0 0.0
        %1769 = vmatpush1.xpose.msra.mxu0 0.0
        %1770 = vmatprep.subr.mxu0 0.0
        %1771 = vmatpush1.xpose.msra.mxu0 0.0
        %1772 = vmatprep.subr.mxu0 0.0
        %1773 = vmatpush1.xpose.msra.mxu0 0.0
        %1774 = vmatprep.subr.mxu0 0.0
        %1775 = vmatpush1.xpose.msra.mxu0 0.0
        %1776 = vmatprep.subr.mxu0 0.0
        %1777 = vmatpush1.xpose.msra.mxu0 0.0
        %1778 = vmatprep.subr.mxu0 0.0
        %1779 = vmatpush1.xpose.msra.mxu0 0.0
        %1780 = vmatprep.subr.mxu0 0.0
        %1781 = vmatpush1.xpose.msra.mxu0 0.0
        %1782 = vmatprep.subr.mxu0 0.0
        %1783 = vmatpush1.xpose.msra.mxu0 0.0
        %1784 = vmatprep.subr.mxu0 0.0
        %1785 = vmatpush1.xpose.msra.mxu0 0.0
        %1786 = vmatprep.subr.mxu0 0.0
        %1787 = vmatpush1.xpose.msra.mxu0 0.0
        %1788 = vmatprep.subr.mxu0 0.0
        %1789 = vmatpush1.xpose.msra.mxu0 0.0
        %1790 = vmatprep.subr.mxu0 0.0
        %1791 = vmatpush1.xpose.msra.mxu0 0.0
        %1792 = vmatprep.subr.mxu0 0.0
        %1793 = vmatpush1.xpose.msra.mxu0 0.0
        %1794 = vmatprep.subr.mxu0 0.0
        %1795 = vmatpush1.xpose.msra.mxu0 0.0
        %1796 = vmatprep.subr.mxu0 0.0
        %1797 = vmatpush1.xpose.msra.mxu0 0.0
        %1798 = vmatprep.subr.mxu0 0.0
        %1799 = vmatpush1.xpose.msra.mxu0 0.0
        %1800 = vmatprep.subr.mxu0 0.0
        %1801 = vmatpush1.xpose.msra.mxu0 0.0
        %1802 = vmatprep.subr.mxu0 0.0
        %1803 = vmatpush1.xpose.msra.mxu0 0.0
        %1804 = vmatprep.subr.mxu0 0.0
        %1805 = vmatpush1.xpose.msra.mxu0 0.0
        %1806 = vmatprep.subr.mxu0 0.0
        %1807 = vmatpush1.xpose.msra.mxu0 0.0
        %1808 = vmatprep.subr.mxu0 0.0
        %1809 = vmatpush1.xpose.msra.mxu0 0.0
        %1810 = vmatprep.subr.mxu0 0.0
        %1811 = vmatpush1.xpose.msra.mxu0 0.0
        %1812 = vmatprep.subr.mxu0 0.0
        %1813 = vmatpush1.xpose.msra.mxu0 0.0
        %1814 = vmatprep.subr.mxu0 0.0
        %1815 = vmatpush1.xpose.msra.mxu0 0.0
        %1816 = vmatprep.subr.mxu0 0.0
        %1817 = vmatpush1.xpose.msra.mxu0 0.0
        %1818 = vmatprep.subr.mxu0 0.0
        %1819 = vmatpush1.xpose.msra.mxu0 0.0
        %1820 = vmatprep.subr.mxu0 0.0
        %1821 = vmatpush1.xpose.msra.mxu0 0.0
        %1822 = vmatprep.subr.mxu0 0.0
        %1823 = vmatpush1.xpose.msra.mxu0 0.0
        %1824 = vmatprep.subr.mxu0 0.0
        %1825 = vmatpush1.xpose.msra.mxu0 0.0
        %1826 = vmatprep.subr.mxu0 0.0
        %1827 = vmatpush1.xpose.msra.mxu0 0.0
        %1828 = vmatprep.subr.mxu0 0.0
        %1829 = vmatpush1.xpose.msra.mxu0 0.0
        %1830 = vmatprep.mubr.f32.mxu0 0.0
        %1831 = vmatmul.mubr.f32.gmra.mrb[0].mxu0 %v1761
        %v1832 = vpop.f32.mrb[0].mxu0
        %v1833 = vadd.f32 0.0, %v1832
        %v1834 = vpop.f32.mrb[0].mxu0
        %1835 = vdwg.mxu0
        %v1837 = vsel %vm1223, %v1636, 0
        %v1840 = vsel %vm1223, %v1553, 0
        %1842 = vmatprep.subr.mxu0 0.0
        %1843 = vmatpush1.xpose.msra.mxu0 %v1840
        %1844 = vmatprep.subr.mxu0 0.0
        %1845 = vmatpush1.xpose.msra.mxu0 0.0
        %1846 = vmatprep.subr.mxu0 0.0
        %1847 = vmatpush1.xpose.msra.mxu0 0.0
        %1848 = vmatprep.subr.mxu0 0.0
        %1849 = vmatpush1.xpose.msra.mxu0 0.0
        %1850 = vmatprep.subr.mxu0 0.0
        %1851 = vmatpush1.xpose.msra.mxu0 0.0
        %1852 = vmatprep.subr.mxu0 0.0
        %1853 = vmatpush1.xpose.msra.mxu0 0.0
        %1854 = vmatprep.subr.mxu0 0.0
        %1855 = vmatpush1.xpose.msra.mxu0 0.0
        %1856 = vmatprep.subr.mxu0 0.0
        %1857 = vmatpush1.xpose.msra.mxu0 0.0
        %1858 = vmatprep.subr.mxu0 0.0
        %1859 = vmatpush1.xpose.msra.mxu0 0.0
        %1860 = vmatprep.subr.mxu0 0.0
        %1861 = vmatpush1.xpose.msra.mxu0 0.0
        %1862 = vmatprep.subr.mxu0 0.0
        %1863 = vmatpush1.xpose.msra.mxu0 0.0
        %1864 = vmatprep.subr.mxu0 0.0
        %1865 = vmatpush1.xpose.msra.mxu0 0.0
        %1866 = vmatprep.subr.mxu0 0.0
        %1867 = vmatpush1.xpose.msra.mxu0 0.0
        %1868 = vmatprep.subr.mxu0 0.0
        %1869 = vmatpush1.xpose.msra.mxu0 0.0
        %1870 = vmatprep.subr.mxu0 0.0
        %1871 = vmatpush1.xpose.msra.mxu0 0.0
        %1872 = vmatprep.subr.mxu0 0.0
        %1873 = vmatpush1.xpose.msra.mxu0 0.0
        %1874 = vmatprep.subr.mxu0 0.0
        %1875 = vmatpush1.xpose.msra.mxu0 0.0
        %1876 = vmatprep.subr.mxu0 0.0
        %1877 = vmatpush1.xpose.msra.mxu0 0.0
        %1878 = vmatprep.subr.mxu0 0.0
        %1879 = vmatpush1.xpose.msra.mxu0 0.0
        %1880 = vmatprep.subr.mxu0 0.0
        %1881 = vmatpush1.xpose.msra.mxu0 0.0
        %1882 = vmatprep.subr.mxu0 0.0
        %1883 = vmatpush1.xpose.msra.mxu0 0.0
        %1884 = vmatprep.subr.mxu0 0.0
        %1885 = vmatpush1.xpose.msra.mxu0 0.0
        %1886 = vmatprep.subr.mxu0 0.0
        %1887 = vmatpush1.xpose.msra.mxu0 0.0
        %1888 = vmatprep.subr.mxu0 0.0
        %1889 = vmatpush1.xpose.msra.mxu0 0.0
        %1890 = vmatprep.subr.mxu0 0.0
        %1891 = vmatpush1.xpose.msra.mxu0 0.0
        %1892 = vmatprep.subr.mxu0 0.0
        %1893 = vmatpush1.xpose.msra.mxu0 0.0
        %1894 = vmatprep.subr.mxu0 0.0
        %1895 = vmatpush1.xpose.msra.mxu0 0.0
        %1896 = vmatprep.subr.mxu0 0.0
        %1897 = vmatpush1.xpose.msra.mxu0 0.0
        %1898 = vmatprep.subr.mxu0 0.0
        %1899 = vmatpush1.xpose.msra.mxu0 0.0
        %1900 = vmatprep.subr.mxu0 0.0
        %1901 = vmatpush1.xpose.msra.mxu0 0.0
        %1902 = vmatprep.subr.mxu0 0.0
        %1903 = vmatpush1.xpose.msra.mxu0 0.0
        %1904 = vmatprep.subr.mxu0 0.0
        %1905 = vmatpush1.xpose.msra.mxu0 0.0
        %1906 = vmatprep.mubr.f32.mxu0 0.0
        %1907 = vmatmul.mubr.f32.gmra.mrb[0].mxu0 %v1837
        %v1908 = vpop.f32.mrb[0].mxu0
        %v1909 = vadd.f32 0.0, %v1908
        %v1910 = vpop.f32.mrb[0].mxu0
        %1911 = vdwg.mxu0
        %v1913 = vsel %vm1223, %v1668, 0
        %v1916 = vsel %vm1223, %v1555, 0
        %1918 = vmatprep.subr.mxu0 0.0
        %1919 = vmatpush1.xpose.msra.mxu0 %v1916
        %1920 = vmatprep.subr.mxu0 0.0
        %1921 = vmatpush1.xpose.msra.mxu0 0.0
        %1922 = vmatprep.subr.mxu0 0.0
        %1923 = vmatpush1.xpose.msra.mxu0 0.0
        %1924 = vmatprep.subr.mxu0 0.0
        %1925 = vmatpush1.xpose.msra.mxu0 0.0
        %1926 = vmatprep.subr.mxu0 0.0
        %1927 = vmatpush1.xpose.msra.mxu0 0.0
        %1928 = vmatprep.subr.mxu0 0.0
        %1929 = vmatpush1.xpose.msra.mxu0 0.0
        %1930 = vmatprep.subr.mxu0 0.0
        %1931 = vmatpush1.xpose.msra.mxu0 0.0
        %1932 = vmatprep.subr.mxu0 0.0
        %1933 = vmatpush1.xpose.msra.mxu0 0.0
        %1934 = vmatprep.subr.mxu0 0.0
        %1935 = vmatpush1.xpose.msra.mxu0 0.0
        %1936 = vmatprep.subr.mxu0 0.0
        %1937 = vmatpush1.xpose.msra.mxu0 0.0
        %1938 = vmatprep.subr.mxu0 0.0
        %1939 = vmatpush1.xpose.msra.mxu0 0.0
        %1940 = vmatprep.subr.mxu0 0.0
        %1941 = vmatpush1.xpose.msra.mxu0 0.0
        %1942 = vmatprep.subr.mxu0 0.0
        %1943 = vmatpush1.xpose.msra.mxu0 0.0
        %1944 = vmatprep.subr.mxu0 0.0
        %1945 = vmatpush1.xpose.msra.mxu0 0.0
        %1946 = vmatprep.subr.mxu0 0.0
        %1947 = vmatpush1.xpose.msra.mxu0 0.0
        %1948 = vmatprep.subr.mxu0 0.0
        %1949 = vmatpush1.xpose.msra.mxu0 0.0
        %1950 = vmatprep.subr.mxu0 0.0
        %1951 = vmatpush1.xpose.msra.mxu0 0.0
        %1952 = vmatprep.subr.mxu0 0.0
        %1953 = vmatpush1.xpose.msra.mxu0 0.0
        %1954 = vmatprep.subr.mxu0 0.0
        %1955 = vmatpush1.xpose.msra.mxu0 0.0
        %1956 = vmatprep.subr.mxu0 0.0
        %1957 = vmatpush1.xpose.msra.mxu0 0.0
        %1958 = vmatprep.subr.mxu0 0.0
        %1959 = vmatpush1.xpose.msra.mxu0 0.0
        %1960 = vmatprep.subr.mxu0 0.0
        %1961 = vmatpush1.xpose.msra.mxu0 0.0
        %1962 = vmatprep.subr.mxu0 0.0
        %1963 = vmatpush1.xpose.msra.mxu0 0.0
        %1964 = vmatprep.subr.mxu0 0.0
        %1965 = vmatpush1.xpose.msra.mxu0 0.0
        %1966 = vmatprep.subr.mxu0 0.0
        %1967 = vmatpush1.xpose.msra.mxu0 0.0
        %1968 = vmatprep.subr.mxu0 0.0
        %1969 = vmatpush1.xpose.msra.mxu0 0.0
        %1970 = vmatprep.subr.mxu0 0.0
        %1971 = vmatpush1.xpose.msra.mxu0 0.0
        %1972 = vmatprep.subr.mxu0 0.0
        %1973 = vmatpush1.xpose.msra.mxu0 0.0
        %1974 = vmatprep.subr.mxu0 0.0
        %1975 = vmatpush1.xpose.msra.mxu0 0.0
        %1976 = vmatprep.subr.mxu0 0.0
        %1977 = vmatpush1.xpose.msra.mxu0 0.0
        %1978 = vmatprep.subr.mxu0 0.0
        %1979 = vmatpush1.xpose.msra.mxu0 0.0
        %1980 = vmatprep.subr.mxu0 0.0
        %1981 = vmatpush1.xpose.msra.mxu0 0.0
        %1982 = vmatprep.mubr.f32.mxu0 0.0
        %1983 = vmatmul.mubr.f32.gmra.mrb[0].mxu0 %v1913
        %v1984 = vpop.f32.mrb[0].mxu0
        %v1985 = vadd.f32 0.0, %v1984
        %v1986 = vpop.f32.mrb[0].mxu0
        %1987 = vdwg.mxu0
        %1988 = vxpose.xlu0.b32.start [1/16] %v1757, 128
        %1989 = vxpose.xlu0.b32.cont [2/16] 0.0, 128
        %1990 = vxpose.xlu0.b32.cont [3/16] 0.0, 128
        %1991 = vxpose.xlu0.b32.cont [4/16] 0.0, 128
        %1992 = vxpose.xlu0.b32.cont [5/16] 0.0, 128
        %1993 = vxpose.xlu0.b32.cont [6/16] 0.0, 128
        %1994 = vxpose.xlu0.b32.cont [7/16] 0.0, 128
        %1995 = vxpose.xlu0.b32.cont [8/16] 0.0, 128
        %1996 = vxpose.xlu0.b32.cont [9/16] 0.0, 128
        %1997 = vxpose.xlu0.b32.cont [10/16] 0.0, 128
        %1998 = vxpose.xlu0.b32.cont [11/16] 0.0, 128
        %1999 = vxpose.xlu0.b32.cont [12/16] 0.0, 128
        %2000 = vxpose.xlu0.b32.cont [13/16] 0.0, 128
        %2001 = vxpose.xlu0.b32.cont [14/16] 0.0, 128
        %2002 = vxpose.xlu0.b32.cont [15/16] 0.0, 128
        %2003 = vxpose.xlu0.b32.end [16/16] 0.0, 128
        %v2004 = vpop.trf.xlu0
        %v2005 = vpop.trf.xlu0
        %v2006 = vpop.trf.xlu0
        %v2007 = vpop.trf.xlu0
        %v2008 = vpop.trf.xlu0
        %v2009 = vpop.trf.xlu0
        %v2010 = vpop.trf.xlu0
        %v2011 = vpop.trf.xlu0
        %v2012 = vpop.trf.xlu0
        %v2013 = vpop.trf.xlu0
        %v2014 = vpop.trf.xlu0
        %v2015 = vpop.trf.xlu0
        %v2016 = vpop.trf.xlu0
        %v2017 = vpop.trf.xlu0
        %v2018 = vpop.trf.xlu0
        %v2019 = vpop.trf.xlu0
        %2020 = vxpose.xlu0.b32.start [1/16] %v1833, 128
        %2021 = vxpose.xlu0.b32.cont [2/16] 0.0, 128
        %2022 = vxpose.xlu0.b32.cont [3/16] 0.0, 128
        %2023 = vxpose.xlu0.b32.cont [4/16] 0.0, 128
        %2024 = vxpose.xlu0.b32.cont [5/16] 0.0, 128
        %2025 = vxpose.xlu0.b32.cont [6/16] 0.0, 128
        %2026 = vxpose.xlu0.b32.cont [7/16] 0.0, 128
        %2027 = vxpose.xlu0.b32.cont [8/16] 0.0, 128
        %2028 = vxpose.xlu0.b32.cont [9/16] 0.0, 128
        %2029 = vxpose.xlu0.b32.cont [10/16] 0.0, 128
        %2030 = vxpose.xlu0.b32.cont [11/16] 0.0, 128
        %2031 = vxpose.xlu0.b32.cont [12/16] 0.0, 128
        %2032 = vxpose.xlu0.b32.cont [13/16] 0.0, 128
        %2033 = vxpose.xlu0.b32.cont [14/16] 0.0, 128
        %2034 = vxpose.xlu0.b32.cont [15/16] 0.0, 128
        %2035 = vxpose.xlu0.b32.end [16/16] 0.0, 128
        %v2036 = vpop.trf.xlu0
        %v2037 = vpop.trf.xlu0
        %v2038 = vpop.trf.xlu0
        %v2039 = vpop.trf.xlu0
        %v2040 = vpop.trf.xlu0
        %v2041 = vpop.trf.xlu0
        %v2042 = vpop.trf.xlu0
        %v2043 = vpop.trf.xlu0
        %v2044 = vpop.trf.xlu0
        %v2045 = vpop.trf.xlu0
        %v2046 = vpop.trf.xlu0
        %v2047 = vpop.trf.xlu0
        %v2048 = vpop.trf.xlu0
        %v2049 = vpop.trf.xlu0
        %v2050 = vpop.trf.xlu0
        %v2051 = vpop.trf.xlu0
        %2052 = vxpose.xlu0.b32.start [1/16] %v1909, 128
        %2053 = vxpose.xlu0.b32.cont [2/16] 0.0, 128
        %2054 = vxpose.xlu0.b32.cont [3/16] 0.0, 128
        %2055 = vxpose.xlu0.b32.cont [4/16] 0.0, 128
        %2056 = vxpose.xlu0.b32.cont [5/16] 0.0, 128
        %2057 = vxpose.xlu0.b32.cont [6/16] 0.0, 128
        %2058 = vxpose.xlu0.b32.cont [7/16] 0.0, 128
        %2059 = vxpose.xlu0.b32.cont [8/16] 0.0, 128
        %2060 = vxpose.xlu0.b32.cont [9/16] 0.0, 128
        %2061 = vxpose.xlu0.b32.cont [10/16] 0.0, 128
        %2062 = vxpose.xlu0.b32.cont [11/16] 0.0, 128
        %2063 = vxpose.xlu0.b32.cont [12/16] 0.0, 128
        %2064 = vxpose.xlu0.b32.cont [13/16] 0.0, 128
        %2065 = vxpose.xlu0.b32.cont [14/16] 0.0, 128
        %2066 = vxpose.xlu0.b32.cont [15/16] 0.0, 128
        %2067 = vxpose.xlu0.b32.end [16/16] 0.0, 128
        %v2068 = vpop.trf.xlu0
        %v2069 = vpop.trf.xlu0
        %v2070 = vpop.trf.xlu0
        %v2071 = vpop.trf.xlu0
        %v2072 = vpop.trf.xlu0
        %v2073 = vpop.trf.xlu0
        %v2074 = vpop.trf.xlu0
        %v2075 = vpop.trf.xlu0
        %v2076 = vpop.trf.xlu0
        %v2077 = vpop.trf.xlu0
        %v2078 = vpop.trf.xlu0
        %v2079 = vpop.trf.xlu0
        %v2080 = vpop.trf.xlu0
        %v2081 = vpop.trf.xlu0
        %v2082 = vpop.trf.xlu0
        %v2083 = vpop.trf.xlu0
        %2084 = vxpose.xlu0.b32.start [1/16] %v1985, 128
        %2085 = vxpose.xlu0.b32.cont [2/16] 0.0, 128
        %2086 = vxpose.xlu0.b32.cont [3/16] 0.0, 128
        %2087 = vxpose.xlu0.b32.cont [4/16] 0.0, 128
        %2088 = vxpose.xlu0.b32.cont [5/16] 0.0, 128
        %2089 = vxpose.xlu0.b32.cont [6/16] 0.0, 128
        %2090 = vxpose.xlu0.b32.cont [7/16] 0.0, 128
        %2091 = vxpose.xlu0.b32.cont [8/16] 0.0, 128
        %2092 = vxpose.xlu0.b32.cont [9/16] 0.0, 128
        %2093 = vxpose.xlu0.b32.cont [10/16] 0.0, 128
        %2094 = vxpose.xlu0.b32.cont [11/16] 0.0, 128
        %2095 = vxpose.xlu0.b32.cont [12/16] 0.0, 128
        %2096 = vxpose.xlu0.b32.cont [13/16] 0.0, 128
        %2097 = vxpose.xlu0.b32.cont [14/16] 0.0, 128
        %2098 = vxpose.xlu0.b32.cont [15/16] 0.0, 128
        %2099 = vxpose.xlu0.b32.end [16/16] 0.0, 128
        %v2100 = vpop.trf.xlu0
        %v2101 = vpop.trf.xlu0
        %v2102 = vpop.trf.xlu0
        %v2103 = vpop.trf.xlu0
        %v2104 = vpop.trf.xlu0
        %v2105 = vpop.trf.xlu0
        %v2106 = vpop.trf.xlu0
        %v2107 = vpop.trf.xlu0
        %v2108 = vpop.trf.xlu0
        %v2109 = vpop.trf.xlu0
        %v2110 = vpop.trf.xlu0
        %v2111 = vpop.trf.xlu0
        %v2112 = vpop.trf.xlu0
        %v2113 = vpop.trf.xlu0
        %v2114 = vpop.trf.xlu0
        %v2115 = vpop.trf.xlu0
        %v2116 = vcombine.low %v2004, %v2068
        %v2117 = vcombine.high %v2004, %v2068
        %v2119 = vunpack.c.l.s4 1983009808
        %v2120 = vunpack.c.0.s8 %v2119
        %v2121 = vlaneseq
        %v2122 = vshrl.u32 %v2121, 7
        %v2123 = vsub.s32 %v2120, %v2122
        %v2124 = vrot.slane %v2116, %v2123
        %v2126 = vunpack.c.l.s4 1983009808
        %v2127 = vunpack.c.0.s8 %v2126
        %v2128 = vlaneseq
        %v2129 = vshrl.u32 %v2128, 7
        %v2130 = vsub.s32 %v2127, %v2129
        %v2131 = vrot.slane %v2117, %v2130
        %v2132 = vcombine.low %v2036, %v2100
        %v2133 = vcombine.high %v2036, %v2100
        %v2135 = vunpack.c.l.s4 1983009808
        %v2136 = vunpack.c.0.s8 %v2135
        %v2137 = vlaneseq
        %v2138 = vshrl.u32 %v2137, 7
        %v2139 = vsub.s32 %v2136, %v2138
        %v2140 = vrot.slane %v2132, %v2139
        %v2142 = vunpack.c.l.s4 1983009808
        %v2143 = vunpack.c.0.s8 %v2142
        %v2144 = vlaneseq
        %v2145 = vshrl.u32 %v2144, 7
        %v2146 = vsub.s32 %v2143, %v2145
        %v2147 = vrot.slane %v2133, %v2146
        %v2148 = vcombine.low %v2124, %v2140
        %v2149 = vcombine.high %v2124, %v2140
        %v2151 = vunpack.c.l.s4 1934713408
        %v2152 = vunpack.c.0.s8 %v2151
        %v2153 = vlaneseq
        %v2154 = vshrl.u32 %v2153, 7
        %v2155 = vsub.s32 %v2152, %v2154
        %v2156 = vrot.slane %v2148, %v2155
        %v2158 = vunpack.c.l.s4 1934713408
        %v2159 = vunpack.c.0.s8 %v2158
        %v2160 = vlaneseq
        %v2161 = vshrl.u32 %v2160, 7
        %v2162 = vsub.s32 %v2159, %v2161
        %v2163 = vrot.slane %v2149, %v2162
        %v2164 = vcombine.low %v2131, %v2147
        %v2165 = vcombine.high %v2131, %v2147
        %v2167 = vunpack.c.l.s4 1934713408
        %v2168 = vunpack.c.0.s8 %v2167
        %v2169 = vlaneseq
        %v2170 = vshrl.u32 %v2169, 7
        %v2171 = vsub.s32 %v2168, %v2170
        %v2172 = vrot.slane %v2164, %v2171
        %v2174 = vunpack.c.l.s4 1934713408
        %v2175 = vunpack.c.0.s8 %v2174
        %v2176 = vlaneseq
        %v2177 = vshrl.u32 %v2176, 7
        %v2178 = vsub.s32 %v2175, %v2177
        %v2179 = vrot.slane %v2165, %v2178
        %v2180 = vcombine.high %v2156, 0.0
        %v2181 = vcombine.high %v2163, 0.0
        %v2182 = vcombine.high %v2172, 0.0
        %v2183 = vcombine.high %v2179, 0.0
        %v2184 = vcombine.low %v2156, %v2163
        %v2186 = vunpack.c.l.s4 1983009808
        %v2187 = vunpack.c.0.s8 %v2186
        %v2188 = vlaneseq
        %v2189 = vshrl.u32 %v2188, 7
        %v2190 = vsub.s32 %v2187, %v2189
        %v2191 = vrot.slane %v2184, %v2190
        %v2192 = vcombine.low %v2180, %v2181
        %v2194 = vunpack.c.l.s4 1983009808
        %v2195 = vunpack.c.0.s8 %v2194
        %v2196 = vlaneseq
        %v2197 = vshrl.u32 %v2196, 7
        %v2198 = vsub.s32 %v2195, %v2197
        %v2199 = vrot.slane %v2192, %v2198
        %v2200 = vcombine.low %v2172, %v2179
        %v2202 = vunpack.c.l.s4 1983009808
        %v2203 = vunpack.c.0.s8 %v2202
        %v2204 = vlaneseq
        %v2205 = vshrl.u32 %v2204, 7
        %v2206 = vsub.s32 %v2203, %v2205
        %v2207 = vrot.slane %v2200, %v2206
        %v2208 = vcombine.low %v2182, %v2183
        %v2210 = vunpack.c.l.s4 1983009808
        %v2211 = vunpack.c.0.s8 %v2210
        %v2212 = vlaneseq
        %v2213 = vshrl.u32 %v2212, 7
        %v2214 = vsub.s32 %v2211, %v2213
        %v2215 = vrot.slane %v2208, %v2214
        %v2216 = vcombine.low %v2191, %v2199
        %v2217 = vcombine.high %v2191, %v2199
        %v2219 = vunpack.c.l.s4 1934713408
        %v2220 = vunpack.c.0.s8 %v2219
        %v2221 = vlaneseq
        %v2222 = vshrl.u32 %v2221, 7
        %v2223 = vsub.s32 %v2220, %v2222
        %v2224 = vrot.slane %v2216, %v2223
        %v2226 = vunpack.c.l.s4 1934713408
        %v2227 = vunpack.c.0.s8 %v2226
        %v2228 = vlaneseq
        %v2229 = vshrl.u32 %v2228, 7
        %v2230 = vsub.s32 %v2227, %v2229
        %v2231 = vrot.slane %v2217, %v2230
        %v2232 = vcombine.low %v2207, %v2215
        %v2233 = vcombine.high %v2207, %v2215
        %v2235 = vunpack.c.l.s4 1934713408
        %v2236 = vunpack.c.0.s8 %v2235
        %v2237 = vlaneseq
        %v2238 = vshrl.u32 %v2237, 7
        %v2239 = vsub.s32 %v2236, %v2238
        %v2240 = vrot.slane %v2232, %v2239
        %v2242 = vunpack.c.l.s4 1934713408
        %v2243 = vunpack.c.0.s8 %v2242
        %v2244 = vlaneseq
        %v2245 = vshrl.u32 %v2244, 7
        %v2246 = vsub.s32 %v2243, %v2245
        %v2247 = vrot.slane %v2233, %v2246
        %v2248 = vcombine.low %v2224, %v2240
        %v2249 = vcombine.high %v2224, %v2240
        %v2250 = vcombine.low %v2231, %v2247
        %v2251 = vcombine.high %v2231, %v2247
        %2253 = vrot.lane.b32.xlu0 %v2249, 8
        %v2254 = vpop.permute.xlu0 %2253
        %2257 = vrot.lane.b32.xlu0 %v2250, 16
        %v2258 = vpop.permute.xlu0 %2257
        %2261 = vrot.lane.b32.xlu0 %v2251, 24
        %v2262 = vpop.permute.xlu0 %2261
        %v2264 = vsel %vm1223, %v2248, %v2254
        %vm2265 = vcmask 130048
        %v2266 = vsel %vm2265, %v2264, %v2258
        %vm2267 = vcmask 195584
        %v2268 = vsel %vm2267, %v2266, %v2262
        %2269 = vst.msk [vmem:[#allocation3] sm:$0xff] %vm812, %v2268
        %2271 = vrot.lane.b32.xlu0 %v1067, 120
        %v2272 = vpop.permute.xlu0 %2271
        %2273 = vrot.lane.b32.xlu0 %v1067, 112
        %v2274 = vpop.permute.xlu0 %2273
        %2275 = vrot.lane.b32.xlu0 %v1067, 104
        %v2276 = vpop.permute.xlu0 %2275
        %2278 = vrot.lane.b32.xlu0 %v977, 120
        %v2279 = vpop.permute.xlu0 %2278
        %2281 = vrot.lane.b32.xlu0 %v977, 112
        %v2282 = vpop.permute.xlu0 %2281
        %2284 = vrot.lane.b32.xlu0 %v977, 104
        %v2285 = vpop.permute.xlu0 %2284
        %2288 = vrot.lane.b32.xlu0 %v1063, 120
        %v2289 = vpop.permute.xlu0 %2288
        %2291 = vrot.lane.b32.xlu0 %v1063, 112
        %v2292 = vpop.permute.xlu0 %2291
        %2294 = vrot.lane.b32.xlu0 %v1063, 104
        %v2295 = vpop.permute.xlu0 %2294
        %2297 = vxpose.xlu0.b32.start [1/16] %v977, 128
        %2298 = vxpose.xlu0.b32.cont [2/16] 0.0, 128
        %2299 = vxpose.xlu0.b32.cont [3/16] 0.0, 128
        %2300 = vxpose.xlu0.b32.cont [4/16] 0.0, 128
        %2301 = vxpose.xlu0.b32.cont [5/16] 0.0, 128
        %2302 = vxpose.xlu0.b32.cont [6/16] 0.0, 128
        %2303 = vxpose.xlu0.b32.cont [7/16] 0.0, 128
        %2304 = vxpose.xlu0.b32.cont [8/16] 0.0, 128
        %2305 = vxpose.xlu0.b32.cont [9/16] 0.0, 128
        %2306 = vxpose.xlu0.b32.cont [10/16] 0.0, 128
        %2307 = vxpose.xlu0.b32.cont [11/16] 0.0, 128
        %2308 = vxpose.xlu0.b32.cont [12/16] 0.0, 128
        %2309 = vxpose.xlu0.b32.cont [13/16] 0.0, 128
        %2310 = vxpose.xlu0.b32.cont [14/16] 0.0, 128
        %2311 = vxpose.xlu0.b32.cont [15/16] 0.0, 128
        %2312 = vxpose.xlu0.b32.end [16/16] 0.0, 128
        %v2313 = vpop.trf.xlu0
        %v2314 = vpop.trf.xlu0
        %v2315 = vpop.trf.xlu0
        %v2316 = vpop.trf.xlu0
        %v2317 = vpop.trf.xlu0
        %v2318 = vpop.trf.xlu0
        %v2319 = vpop.trf.xlu0
        %v2320 = vpop.trf.xlu0
        %v2321 = vpop.trf.xlu0
        %v2322 = vpop.trf.xlu0
        %v2323 = vpop.trf.xlu0
        %v2324 = vpop.trf.xlu0
        %v2325 = vpop.trf.xlu0
        %v2326 = vpop.trf.xlu0
        %v2327 = vpop.trf.xlu0
        %v2328 = vpop.trf.xlu0
        %2329 = vxpose.xlu0.b32.start [1/16] %v2279, 128
        %2330 = vxpose.xlu0.b32.cont [2/16] 0.0, 128
        %2331 = vxpose.xlu0.b32.cont [3/16] 0.0, 128
        %2332 = vxpose.xlu0.b32.cont [4/16] 0.0, 128
        %2333 = vxpose.xlu0.b32.cont [5/16] 0.0, 128
        %2334 = vxpose.xlu0.b32.cont [6/16] 0.0, 128
        %2335 = vxpose.xlu0.b32.cont [7/16] 0.0, 128
        %2336 = vxpose.xlu0.b32.cont [8/16] 0.0, 128
        %2337 = vxpose.xlu0.b32.cont [9/16] 0.0, 128
        %2338 = vxpose.xlu0.b32.cont [10/16] 0.0, 128
        %2339 = vxpose.xlu0.b32.cont [11/16] 0.0, 128
        %2340 = vxpose.xlu0.b32.cont [12/16] 0.0, 128
        %2341 = vxpose.xlu0.b32.cont [13/16] 0.0, 128
        %2342 = vxpose.xlu0.b32.cont [14/16] 0.0, 128
        %2343 = vxpose.xlu0.b32.cont [15/16] 0.0, 128
        %2344 = vxpose.xlu0.b32.end [16/16] 0.0, 128
        %v2345 = vpop.trf.xlu0
        %v2346 = vpop.trf.xlu0
        %v2347 = vpop.trf.xlu0
        %v2348 = vpop.trf.xlu0
        %v2349 = vpop.trf.xlu0
        %v2350 = vpop.trf.xlu0
        %v2351 = vpop.trf.xlu0
        %v2352 = vpop.trf.xlu0
        %v2353 = vpop.trf.xlu0
        %v2354 = vpop.trf.xlu0
        %v2355 = vpop.trf.xlu0
        %v2356 = vpop.trf.xlu0
        %v2357 = vpop.trf.xlu0
        %v2358 = vpop.trf.xlu0
        %v2359 = vpop.trf.xlu0
        %v2360 = vpop.trf.xlu0
        %2361 = vxpose.xlu0.b32.start [1/16] %v2282, 128
        %2362 = vxpose.xlu0.b32.cont [2/16] 0.0, 128
        %2363 = vxpose.xlu0.b32.cont [3/16] 0.0, 128
        %2364 = vxpose.xlu0.b32.cont [4/16] 0.0, 128
        %2365 = vxpose.xlu0.b32.cont [5/16] 0.0, 128
        %2366 = vxpose.xlu0.b32.cont [6/16] 0.0, 128
        %2367 = vxpose.xlu0.b32.cont [7/16] 0.0, 128
        %2368 = vxpose.xlu0.b32.cont [8/16] 0.0, 128
        %2369 = vxpose.xlu0.b32.cont [9/16] 0.0, 128
        %2370 = vxpose.xlu0.b32.cont [10/16] 0.0, 128
        %2371 = vxpose.xlu0.b32.cont [11/16] 0.0, 128
        %2372 = vxpose.xlu0.b32.cont [12/16] 0.0, 128
        %2373 = vxpose.xlu0.b32.cont [13/16] 0.0, 128
        %2374 = vxpose.xlu0.b32.cont [14/16] 0.0, 128
        %2375 = vxpose.xlu0.b32.cont [15/16] 0.0, 128
        %2376 = vxpose.xlu0.b32.end [16/16] 0.0, 128
        %v2377 = vpop.trf.xlu0
        %v2378 = vpop.trf.xlu0
        %v2379 = vpop.trf.xlu0
        %v2380 = vpop.trf.xlu0
        %v2381 = vpop.trf.xlu0
        %v2382 = vpop.trf.xlu0
        %v2383 = vpop.trf.xlu0
        %v2384 = vpop.trf.xlu0
        %v2385 = vpop.trf.xlu0
        %v2386 = vpop.trf.xlu0
        %v2387 = vpop.trf.xlu0
        %v2388 = vpop.trf.xlu0
        %v2389 = vpop.trf.xlu0
        %v2390 = vpop.trf.xlu0
        %v2391 = vpop.trf.xlu0
        %v2392 = vpop.trf.xlu0
        %2393 = vxpose.xlu0.b32.start [1/16] %v2285, 128
        %2394 = vxpose.xlu0.b32.cont [2/16] 0.0, 128
        %2395 = vxpose.xlu0.b32.cont [3/16] 0.0, 128
        %2396 = vxpose.xlu0.b32.cont [4/16] 0.0, 128
        %2397 = vxpose.xlu0.b32.cont [5/16] 0.0, 128
        %2398 = vxpose.xlu0.b32.cont [6/16] 0.0, 128
        %2399 = vxpose.xlu0.b32.cont [7/16] 0.0, 128
        %2400 = vxpose.xlu0.b32.cont [8/16] 0.0, 128
        %2401 = vxpose.xlu0.b32.cont [9/16] 0.0, 128
        %2402 = vxpose.xlu0.b32.cont [10/16] 0.0, 128
        %2403 = vxpose.xlu0.b32.cont [11/16] 0.0, 128
        %2404 = vxpose.xlu0.b32.cont [12/16] 0.0, 128
        %2405 = vxpose.xlu0.b32.cont [13/16] 0.0, 128
        %2406 = vxpose.xlu0.b32.cont [14/16] 0.0, 128
        %2407 = vxpose.xlu0.b32.cont [15/16] 0.0, 128
        %2408 = vxpose.xlu0.b32.end [16/16] 0.0, 128
        %v2409 = vpop.trf.xlu0
        %v2410 = vpop.trf.xlu0
        %v2411 = vpop.trf.xlu0
        %v2412 = vpop.trf.xlu0
        %v2413 = vpop.trf.xlu0
        %v2414 = vpop.trf.xlu0
        %v2415 = vpop.trf.xlu0
        %v2416 = vpop.trf.xlu0
        %v2417 = vpop.trf.xlu0
        %v2418 = vpop.trf.xlu0
        %v2419 = vpop.trf.xlu0
        %v2420 = vpop.trf.xlu0
        %v2421 = vpop.trf.xlu0
        %v2422 = vpop.trf.xlu0
        %v2423 = vpop.trf.xlu0
        %v2424 = vpop.trf.xlu0
        %v2425 = vsel %vm1223, %v1067, 0
        %2427 = vmatprep.subr.mxu0 0.0
        %2428 = vmatpush1.msra.mxu0 %v2313
        %2429 = vmatprep.subr.mxu0 0.0
        %2430 = vmatpush1.msra.mxu0 0.0
        %2431 = vmatprep.subr.mxu0 0.0
        %2432 = vmatpush1.msra.mxu0 0.0
        %2433 = vmatprep.subr.mxu0 0.0
        %2434 = vmatpush1.msra.mxu0 0.0
        %2435 = vmatprep.subr.mxu0 0.0
        %2436 = vmatpush1.msra.mxu0 0.0
        %2437 = vmatprep.subr.mxu0 0.0
        %2438 = vmatpush1.msra.mxu0 0.0
        %2439 = vmatprep.subr.mxu0 0.0
        %2440 = vmatpush1.msra.mxu0 0.0
        %2441 = vmatprep.subr.mxu0 0.0
        %2442 = vmatpush1.msra.mxu0 0.0
        %2443 = vmatprep.subr.mxu0 0.0
        %2444 = vmatpush1.msra.mxu0 0.0
        %2445 = vmatprep.subr.mxu0 0.0
        %2446 = vmatpush1.msra.mxu0 0.0
        %2447 = vmatprep.subr.mxu0 0.0
        %2448 = vmatpush1.msra.mxu0 0.0
        %2449 = vmatprep.subr.mxu0 0.0
        %2450 = vmatpush1.msra.mxu0 0.0
        %2451 = vmatprep.subr.mxu0 0.0
        %2452 = vmatpush1.msra.mxu0 0.0
        %2453 = vmatprep.subr.mxu0 0.0
        %2454 = vmatpush1.msra.mxu0 0.0
        %2455 = vmatprep.subr.mxu0 0.0
        %2456 = vmatpush1.msra.mxu0 0.0
        %2457 = vmatprep.subr.mxu0 0.0
        %2458 = vmatpush1.msra.mxu0 0.0
        %2459 = vmatprep.subr.mxu0 0.0
        %2460 = vmatpush1.msra.mxu0 0.0
        %2461 = vmatprep.subr.mxu0 0.0
        %2462 = vmatpush1.msra.mxu0 0.0
        %2463 = vmatprep.subr.mxu0 0.0
        %2464 = vmatpush1.msra.mxu0 0.0
        %2465 = vmatprep.subr.mxu0 0.0
        %2466 = vmatpush1.msra.mxu0 0.0
        %2467 = vmatprep.subr.mxu0 0.0
        %2468 = vmatpush1.msra.mxu0 0.0
        %2469 = vmatprep.subr.mxu0 0.0
        %2470 = vmatpush1.msra.mxu0 0.0
        %2471 = vmatprep.subr.mxu0 0.0
        %2472 = vmatpush1.msra.mxu0 0.0
        %2473 = vmatprep.subr.mxu0 0.0
        %2474 = vmatpush1.msra.mxu0 0.0
        %2475 = vmatprep.subr.mxu0 0.0
        %2476 = vmatpush1.msra.mxu0 0.0
        %2477 = vmatprep.subr.mxu0 0.0
        %2478 = vmatpush1.msra.mxu0 0.0
        %2479 = vmatprep.subr.mxu0 0.0
        %2480 = vmatpush1.msra.mxu0 0.0
        %2481 = vmatprep.subr.mxu0 0.0
        %2482 = vmatpush1.msra.mxu0 0.0
        %2483 = vmatprep.subr.mxu0 0.0
        %2484 = vmatpush1.msra.mxu0 0.0
        %2485 = vmatprep.subr.mxu0 0.0
        %2486 = vmatpush1.msra.mxu0 0.0
        %2487 = vmatprep.subr.mxu0 0.0
        %2488 = vmatpush1.msra.mxu0 0.0
        %2489 = vmatprep.subr.mxu0 0.0
        %2490 = vmatpush1.msra.mxu0 0.0
        %2491 = vmatprep.mubr.f32.mxu0 0.0
        %2492 = vmatmul.mubr.f32.gmra.mrb[0].mxu0 %v2425
        %v2493 = vpop.f32.mrb[0].mxu0
        %v2494 = vadd.f32 0.0, %v2493
        %v2495 = vpop.f32.mrb[0].mxu0
        %2496 = vdwg.mxu0
        %v2497 = vsel %vm1223, %v2272, 0
        %2499 = vmatprep.subr.mxu0 0.0
        %2500 = vmatpush1.msra.mxu0 %v2345
        %2501 = vmatprep.subr.mxu0 0.0
        %2502 = vmatpush1.msra.mxu0 0.0
        %2503 = vmatprep.subr.mxu0 0.0
        %2504 = vmatpush1.msra.mxu0 0.0
        %2505 = vmatprep.subr.mxu0 0.0
        %2506 = vmatpush1.msra.mxu0 0.0
        %2507 = vmatprep.subr.mxu0 0.0
        %2508 = vmatpush1.msra.mxu0 0.0
        %2509 = vmatprep.subr.mxu0 0.0
        %2510 = vmatpush1.msra.mxu0 0.0
        %2511 = vmatprep.subr.mxu0 0.0
        %2512 = vmatpush1.msra.mxu0 0.0
        %2513 = vmatprep.subr.mxu0 0.0
        %2514 = vmatpush1.msra.mxu0 0.0
        %2515 = vmatprep.subr.mxu0 0.0
        %2516 = vmatpush1.msra.mxu0 0.0
        %2517 = vmatprep.subr.mxu0 0.0
        %2518 = vmatpush1.msra.mxu0 0.0
        %2519 = vmatprep.subr.mxu0 0.0
        %2520 = vmatpush1.msra.mxu0 0.0
        %2521 = vmatprep.subr.mxu0 0.0
        %2522 = vmatpush1.msra.mxu0 0.0
        %2523 = vmatprep.subr.mxu0 0.0
        %2524 = vmatpush1.msra.mxu0 0.0
        %2525 = vmatprep.subr.mxu0 0.0
        %2526 = vmatpush1.msra.mxu0 0.0
        %2527 = vmatprep.subr.mxu0 0.0
        %2528 = vmatpush1.msra.mxu0 0.0
        %2529 = vmatprep.subr.mxu0 0.0
        %2530 = vmatpush1.msra.mxu0 0.0
        %2531 = vmatprep.subr.mxu0 0.0
        %2532 = vmatpush1.msra.mxu0 0.0
        %2533 = vmatprep.subr.mxu0 0.0
        %2534 = vmatpush1.msra.mxu0 0.0
        %2535 = vmatprep.subr.mxu0 0.0
        %2536 = vmatpush1.msra.mxu0 0.0
        %2537 = vmatprep.subr.mxu0 0.0
        %2538 = vmatpush1.msra.mxu0 0.0
        %2539 = vmatprep.subr.mxu0 0.0
        %2540 = vmatpush1.msra.mxu0 0.0
        %2541 = vmatprep.subr.mxu0 0.0
        %2542 = vmatpush1.msra.mxu0 0.0
        %2543 = vmatprep.subr.mxu0 0.0
        %2544 = vmatpush1.msra.mxu0 0.0
        %2545 = vmatprep.subr.mxu0 0.0
        %2546 = vmatpush1.msra.mxu0 0.0
        %2547 = vmatprep.subr.mxu0 0.0
        %2548 = vmatpush1.msra.mxu0 0.0
        %2549 = vmatprep.subr.mxu0 0.0
        %2550 = vmatpush1.msra.mxu0 0.0
        %2551 = vmatprep.subr.mxu0 0.0
        %2552 = vmatpush1.msra.mxu0 0.0
        %2553 = vmatprep.subr.mxu0 0.0
        %2554 = vmatpush1.msra.mxu0 0.0
        %2555 = vmatprep.subr.mxu0 0.0
        %2556 = vmatpush1.msra.mxu0 0.0
        %2557 = vmatprep.subr.mxu0 0.0
        %2558 = vmatpush1.msra.mxu0 0.0
        %2559 = vmatprep.subr.mxu0 0.0
        %2560 = vmatpush1.msra.mxu0 0.0
        %2561 = vmatprep.subr.mxu0 0.0
        %2562 = vmatpush1.msra.mxu0 0.0
        %2563 = vmatprep.mubr.f32.mxu0 0.0
        %2564 = vmatmul.mubr.f32.gmra.mrb[0].mxu0 %v2497
        %v2565 = vpop.f32.mrb[0].mxu0
        %v2566 = vadd.f32 0.0, %v2565
        %v2567 = vpop.f32.mrb[0].mxu0
        %2568 = vdwg.mxu0
        %v2569 = vsel %vm1223, %v2274, 0
        %2571 = vmatprep.subr.mxu0 0.0
        %2572 = vmatpush1.msra.mxu0 %v2377
        %2573 = vmatprep.subr.mxu0 0.0
        %2574 = vmatpush1.msra.mxu0 0.0
        %2575 = vmatprep.subr.mxu0 0.0
        %2576 = vmatpush1.msra.mxu0 0.0
        %2577 = vmatprep.subr.mxu0 0.0
        %2578 = vmatpush1.msra.mxu0 0.0
        %2579 = vmatprep.subr.mxu0 0.0
        %2580 = vmatpush1.msra.mxu0 0.0
        %2581 = vmatprep.subr.mxu0 0.0
        %2582 = vmatpush1.msra.mxu0 0.0
        %2583 = vmatprep.subr.mxu0 0.0
        %2584 = vmatpush1.msra.mxu0 0.0
        %2585 = vmatprep.subr.mxu0 0.0
        %2586 = vmatpush1.msra.mxu0 0.0
        %2587 = vmatprep.subr.mxu0 0.0
        %2588 = vmatpush1.msra.mxu0 0.0
        %2589 = vmatprep.subr.mxu0 0.0
        %2590 = vmatpush1.msra.mxu0 0.0
        %2591 = vmatprep.subr.mxu0 0.0
        %2592 = vmatpush1.msra.mxu0 0.0
        %2593 = vmatprep.subr.mxu0 0.0
        %2594 = vmatpush1.msra.mxu0 0.0
        %2595 = vmatprep.subr.mxu0 0.0
        %2596 = vmatpush1.msra.mxu0 0.0
        %2597 = vmatprep.subr.mxu0 0.0
        %2598 = vmatpush1.msra.mxu0 0.0
        %2599 = vmatprep.subr.mxu0 0.0
        %2600 = vmatpush1.msra.mxu0 0.0
        %2601 = vmatprep.subr.mxu0 0.0
        %2602 = vmatpush1.msra.mxu0 0.0
        %2603 = vmatprep.subr.mxu0 0.0
        %2604 = vmatpush1.msra.mxu0 0.0
        %2605 = vmatprep.subr.mxu0 0.0
        %2606 = vmatpush1.msra.mxu0 0.0
        %2607 = vmatprep.subr.mxu0 0.0
        %2608 = vmatpush1.msra.mxu0 0.0
        %2609 = vmatprep.subr.mxu0 0.0
        %2610 = vmatpush1.msra.mxu0 0.0
        %2611 = vmatprep.subr.mxu0 0.0
        %2612 = vmatpush1.msra.mxu0 0.0
        %2613 = vmatprep.subr.mxu0 0.0
        %2614 = vmatpush1.msra.mxu0 0.0
        %2615 = vmatprep.subr.mxu0 0.0
        %2616 = vmatpush1.msra.mxu0 0.0
        %2617 = vmatprep.subr.mxu0 0.0
        %2618 = vmatpush1.msra.mxu0 0.0
        %2619 = vmatprep.subr.mxu0 0.0
        %2620 = vmatpush1.msra.mxu0 0.0
        %2621 = vmatprep.subr.mxu0 0.0
        %2622 = vmatpush1.msra.mxu0 0.0
        %2623 = vmatprep.subr.mxu0 0.0
        %2624 = vmatpush1.msra.mxu0 0.0
        %2625 = vmatprep.subr.mxu0 0.0
        %2626 = vmatpush1.msra.mxu0 0.0
        %2627 = vmatprep.subr.mxu0 0.0
        %2628 = vmatpush1.msra.mxu0 0.0
        %2629 = vmatprep.subr.mxu0 0.0
        %2630 = vmatpush1.msra.mxu0 0.0
        %2631 = vmatprep.subr.mxu0 0.0
        %2632 = vmatpush1.msra.mxu0 0.0
        %2633 = vmatprep.subr.mxu0 0.0
        %2634 = vmatpush1.msra.mxu0 0.0
        %2635 = vmatprep.mubr.f32.mxu0 0.0
        %2636 = vmatmul.mubr.f32.gmra.mrb[0].mxu0 %v2569
        %v2637 = vpop.f32.mrb[0].mxu0
        %v2638 = vadd.f32 0.0, %v2637
        %v2639 = vpop.f32.mrb[0].mxu0
        %2640 = vdwg.mxu0
        %v2641 = vsel %vm1223, %v2276, 0
        %2643 = vmatprep.subr.mxu0 0.0
        %2644 = vmatpush1.msra.mxu0 %v2409
        %2645 = vmatprep.subr.mxu0 0.0
        %2646 = vmatpush1.msra.mxu0 0.0
        %2647 = vmatprep.subr.mxu0 0.0
        %2648 = vmatpush1.msra.mxu0 0.0
        %2649 = vmatprep.subr.mxu0 0.0
        %2650 = vmatpush1.msra.mxu0 0.0
        %2651 = vmatprep.subr.mxu0 0.0
        %2652 = vmatpush1.msra.mxu0 0.0
        %2653 = vmatprep.subr.mxu0 0.0
        %2654 = vmatpush1.msra.mxu0 0.0
        %2655 = vmatprep.subr.mxu0 0.0
        %2656 = vmatpush1.msra.mxu0 0.0
        %2657 = vmatprep.subr.mxu0 0.0
        %2658 = vmatpush1.msra.mxu0 0.0
        %2659 = vmatprep.subr.mxu0 0.0
        %2660 = vmatpush1.msra.mxu0 0.0
        %2661 = vmatprep.subr.mxu0 0.0
        %2662 = vmatpush1.msra.mxu0 0.0
        %2663 = vmatprep.subr.mxu0 0.0
        %2664 = vmatpush1.msra.mxu0 0.0
        %2665 = vmatprep.subr.mxu0 0.0
        %2666 = vmatpush1.msra.mxu0 0.0
        %2667 = vmatprep.subr.mxu0 0.0
        %2668 = vmatpush1.msra.mxu0 0.0
        %2669 = vmatprep.subr.mxu0 0.0
        %2670 = vmatpush1.msra.mxu0 0.0
        %2671 = vmatprep.subr.mxu0 0.0
        %2672 = vmatpush1.msra.mxu0 0.0
        %2673 = vmatprep.subr.mxu0 0.0
        %2674 = vmatpush1.msra.mxu0 0.0
        %2675 = vmatprep.subr.mxu0 0.0
        %2676 = vmatpush1.msra.mxu0 0.0
        %2677 = vmatprep.subr.mxu0 0.0
        %2678 = vmatpush1.msra.mxu0 0.0
        %2679 = vmatprep.subr.mxu0 0.0
        %2680 = vmatpush1.msra.mxu0 0.0
        %2681 = vmatprep.subr.mxu0 0.0
        %2682 = vmatpush1.msra.mxu0 0.0
        %2683 = vmatprep.subr.mxu0 0.0
        %2684 = vmatpush1.msra.mxu0 0.0
        %2685 = vmatprep.subr.mxu0 0.0
        %2686 = vmatpush1.msra.mxu0 0.0
        %2687 = vmatprep.subr.mxu0 0.0
        %2688 = vmatpush1.msra.mxu0 0.0
        %2689 = vmatprep.subr.mxu0 0.0
        %2690 = vmatpush1.msra.mxu0 0.0
        %2691 = vmatprep.subr.mxu0 0.0
        %2692 = vmatpush1.msra.mxu0 0.0
        %2693 = vmatprep.subr.mxu0 0.0
        %2694 = vmatpush1.msra.mxu0 0.0
        %2695 = vmatprep.subr.mxu0 0.0
        %2696 = vmatpush1.msra.mxu0 0.0
        %2697 = vmatprep.subr.mxu0 0.0
        %2698 = vmatpush1.msra.mxu0 0.0
        %2699 = vmatprep.subr.mxu0 0.0
        %2700 = vmatpush1.msra.mxu0 0.0
        %2701 = vmatprep.subr.mxu0 0.0
        %2702 = vmatpush1.msra.mxu0 0.0
        %2703 = vmatprep.subr.mxu0 0.0
        %2704 = vmatpush1.msra.mxu0 0.0
        %2705 = vmatprep.subr.mxu0 0.0
        %2706 = vmatpush1.msra.mxu0 0.0
        %2707 = vmatprep.mubr.f32.mxu0 0.0
        %2708 = vmatmul.mubr.f32.gmra.mrb[0].mxu0 %v2641
        %v2709 = vpop.f32.mrb[0].mxu0
        %v2710 = vadd.f32 0.0, %v2709
        %v2711 = vpop.f32.mrb[0].mxu0
        %2712 = vdwg.mxu0
        %v2713 = vsel %vm1223, %v2494, -inf
        %2714 = vmax.xlane.f32.xlu0 %v2713
        %v2715 = vpop.xlane.xlu0 %2714
        %v2716 = vsel %vm1223, %v2566, -inf
        %2717 = vmax.xlane.f32.xlu0 %v2716
        %v2718 = vpop.xlane.xlu0 %2717
        %v2719 = vsel %vm1223, %v2638, -inf
        %2720 = vmax.xlane.f32.xlu0 %v2719
        %v2721 = vpop.xlane.xlu0 %2720
        %v2722 = vsel %vm1223, %v2710, -inf
        %2723 = vmax.xlane.f32.xlu0 %v2722
        %v2724 = vpop.xlane.xlu0 %2723
        %v2725 = vsub.f32 %v2494, %v2715
        %v2726 = vsub.f32 %v2566, %v2718
        %v2727 = vsub.f32 %v2638, %v2721
        %v2728 = vsub.f32 %v2710, %v2724
        %v2729 = vmul.f32 %v2725, 1.442695
        %v2730 = vpow.pop %v2729
        %v2731 = vmul.f32 %v2726, 1.442695
        %v2732 = vpow.pop %v2731
        %v2733 = vmul.f32 %v2727, 1.442695
        %v2734 = vpow.pop %v2733
        %v2735 = vmul.f32 %v2728, 1.442695
        %v2736 = vpow.pop %v2735
        %v2737 = vsel %vm1223, %v2730, 0.0
        %2738 = vadd.xlane.f32.xlu0 %v2737
        %v2739 = vpop.xlane.xlu0 %2738
        %v2740 = vsel %vm1223, %v2732, 0.0
        %2741 = vadd.xlane.f32.xlu0 %v2740
        %v2742 = vpop.xlane.xlu0 %2741
        %v2743 = vsel %vm1223, %v2734, 0.0
        %2744 = vadd.xlane.f32.xlu0 %v2743
        %v2745 = vpop.xlane.xlu0 %2744
        %v2746 = vsel %vm1223, %v2736, 0.0
        %2747 = vadd.xlane.f32.xlu0 %v2746
        %v2748 = vpop.xlane.xlu0 %2747
        %v2749 = vrcp.pop %v2739
        %v2750 = vmul.f32 %v2730, %v2749
        %v2751 = vrcp.pop %v2742
        %v2752 = vmul.f32 %v2732, %v2751
        %v2753 = vrcp.pop %v2745
        %v2754 = vmul.f32 %v2734, %v2753
        %v2755 = vrcp.pop %v2748
        %v2756 = vmul.f32 %v2736, %v2755
        %2757 = vxpose.xlu0.b32.start [1/16] %v1063, 128
        %2758 = vxpose.xlu0.b32.cont [2/16] 0.0, 128
        %2759 = vxpose.xlu0.b32.cont [3/16] 0.0, 128
        %2760 = vxpose.xlu0.b32.cont [4/16] 0.0, 128
        %2761 = vxpose.xlu0.b32.cont [5/16] 0.0, 128
        %2762 = vxpose.xlu0.b32.cont [6/16] 0.0, 128
        %2763 = vxpose.xlu0.b32.cont [7/16] 0.0, 128
        %2764 = vxpose.xlu0.b32.cont [8/16] 0.0, 128
        %2765 = vxpose.xlu0.b32.cont [9/16] 0.0, 128
        %2766 = vxpose.xlu0.b32.cont [10/16] 0.0, 128
        %2767 = vxpose.xlu0.b32.cont [11/16] 0.0, 128
        %2768 = vxpose.xlu0.b32.cont [12/16] 0.0, 128
        %2769 = vxpose.xlu0.b32.cont [13/16] 0.0, 128
        %2770 = vxpose.xlu0.b32.cont [14/16] 0.0, 128
        %2771 = vxpose.xlu0.b32.cont [15/16] 0.0, 128
        %2772 = vxpose.xlu0.b32.end [16/16] 0.0, 128
        %v2773 = vpop.trf.xlu0
        %v2774 = vpop.trf.xlu0
        %v2775 = vpop.trf.xlu0
        %v2776 = vpop.trf.xlu0
        %v2777 = vpop.trf.xlu0
        %v2778 = vpop.trf.xlu0
        %v2779 = vpop.trf.xlu0
        %v2780 = vpop.trf.xlu0
        %v2781 = vpop.trf.xlu0
        %v2782 = vpop.trf.xlu0
        %v2783 = vpop.trf.xlu0
        %v2784 = vpop.trf.xlu0
        %v2785 = vpop.trf.xlu0
        %v2786 = vpop.trf.xlu0
        %v2787 = vpop.trf.xlu0
        %v2788 = vpop.trf.xlu0
        %2789 = vxpose.xlu0.b32.start [1/16] %v2289, 128
        %2790 = vxpose.xlu0.b32.cont [2/16] 0.0, 128
        %2791 = vxpose.xlu0.b32.cont [3/16] 0.0, 128
        %2792 = vxpose.xlu0.b32.cont [4/16] 0.0, 128
        %2793 = vxpose.xlu0.b32.cont [5/16] 0.0, 128
        %2794 = vxpose.xlu0.b32.cont [6/16] 0.0, 128
        %2795 = vxpose.xlu0.b32.cont [7/16] 0.0, 128
        %2796 = vxpose.xlu0.b32.cont [8/16] 0.0, 128
        %2797 = vxpose.xlu0.b32.cont [9/16] 0.0, 128
        %2798 = vxpose.xlu0.b32.cont [10/16] 0.0, 128
        %2799 = vxpose.xlu0.b32.cont [11/16] 0.0, 128
        %2800 = vxpose.xlu0.b32.cont [12/16] 0.0, 128
        %2801 = vxpose.xlu0.b32.cont [13/16] 0.0, 128
        %2802 = vxpose.xlu0.b32.cont [14/16] 0.0, 128
        %2803 = vxpose.xlu0.b32.cont [15/16] 0.0, 128
        %2804 = vxpose.xlu0.b32.end [16/16] 0.0, 128
        %v2805 = vpop.trf.xlu0
        %v2806 = vpop.trf.xlu0
        %v2807 = vpop.trf.xlu0
        %v2808 = vpop.trf.xlu0
        %v2809 = vpop.trf.xlu0
        %v2810 = vpop.trf.xlu0
        %v2811 = vpop.trf.xlu0
        %v2812 = vpop.trf.xlu0
        %v2813 = vpop.trf.xlu0
        %v2814 = vpop.trf.xlu0
        %v2815 = vpop.trf.xlu0
        %v2816 = vpop.trf.xlu0
        %v2817 = vpop.trf.xlu0
        %v2818 = vpop.trf.xlu0
        %v2819 = vpop.trf.xlu0
        %v2820 = vpop.trf.xlu0
        %2821 = vxpose.xlu0.b32.start [1/16] %v2292, 128
        %2822 = vxpose.xlu0.b32.cont [2/16] 0.0, 128
        %2823 = vxpose.xlu0.b32.cont [3/16] 0.0, 128
        %2824 = vxpose.xlu0.b32.cont [4/16] 0.0, 128
        %2825 = vxpose.xlu0.b32.cont [5/16] 0.0, 128
        %2826 = vxpose.xlu0.b32.cont [6/16] 0.0, 128
        %2827 = vxpose.xlu0.b32.cont [7/16] 0.0, 128
        %2828 = vxpose.xlu0.b32.cont [8/16] 0.0, 128
        %2829 = vxpose.xlu0.b32.cont [9/16] 0.0, 128
        %2830 = vxpose.xlu0.b32.cont [10/16] 0.0, 128
        %2831 = vxpose.xlu0.b32.cont [11/16] 0.0, 128
        %2832 = vxpose.xlu0.b32.cont [12/16] 0.0, 128
        %2833 = vxpose.xlu0.b32.cont [13/16] 0.0, 128
        %2834 = vxpose.xlu0.b32.cont [14/16] 0.0, 128
        %2835 = vxpose.xlu0.b32.cont [15/16] 0.0, 128
        %2836 = vxpose.xlu0.b32.end [16/16] 0.0, 128
        %v2837 = vpop.trf.xlu0
        %v2838 = vpop.trf.xlu0
        %v2839 = vpop.trf.xlu0
        %v2840 = vpop.trf.xlu0
        %v2841 = vpop.trf.xlu0
        %v2842 = vpop.trf.xlu0
        %v2843 = vpop.trf.xlu0
        %v2844 = vpop.trf.xlu0
        %v2845 = vpop.trf.xlu0
        %v2846 = vpop.trf.xlu0
        %v2847 = vpop.trf.xlu0
        %v2848 = vpop.trf.xlu0
        %v2849 = vpop.trf.xlu0
        %v2850 = vpop.trf.xlu0
        %v2851 = vpop.trf.xlu0
        %v2852 = vpop.trf.xlu0
        %2853 = vxpose.xlu0.b32.start [1/16] %v2295, 128
        %2854 = vxpose.xlu0.b32.cont [2/16] 0.0, 128
        %2855 = vxpose.xlu0.b32.cont [3/16] 0.0, 128
        %2856 = vxpose.xlu0.b32.cont [4/16] 0.0, 128
        %2857 = vxpose.xlu0.b32.cont [5/16] 0.0, 128
        %2858 = vxpose.xlu0.b32.cont [6/16] 0.0, 128
        %2859 = vxpose.xlu0.b32.cont [7/16] 0.0, 128
        %2860 = vxpose.xlu0.b32.cont [8/16] 0.0, 128
        %2861 = vxpose.xlu0.b32.cont [9/16] 0.0, 128
        %2862 = vxpose.xlu0.b32.cont [10/16] 0.0, 128
        %2863 = vxpose.xlu0.b32.cont [11/16] 0.0, 128
        %2864 = vxpose.xlu0.b32.cont [12/16] 0.0, 128
        %2865 = vxpose.xlu0.b32.cont [13/16] 0.0, 128
        %2866 = vxpose.xlu0.b32.cont [14/16] 0.0, 128
        %2867 = vxpose.xlu0.b32.cont [15/16] 0.0, 128
        %2868 = vxpose.xlu0.b32.end [16/16] 0.0, 128
        %v2869 = vpop.trf.xlu0
        %v2870 = vpop.trf.xlu0
        %v2871 = vpop.trf.xlu0
        %v2872 = vpop.trf.xlu0
        %v2873 = vpop.trf.xlu0
        %v2874 = vpop.trf.xlu0
        %v2875 = vpop.trf.xlu0
        %v2876 = vpop.trf.xlu0
        %v2877 = vpop.trf.xlu0
        %v2878 = vpop.trf.xlu0
        %v2879 = vpop.trf.xlu0
        %v2880 = vpop.trf.xlu0
        %v2881 = vpop.trf.xlu0
        %v2882 = vpop.trf.xlu0
        %v2883 = vpop.trf.xlu0
        %v2884 = vpop.trf.xlu0
        %v2886 = vsel %vm1223, %v2773, 0
        %v2889 = vsel %vm1223, %v2750, 0
        %2891 = vmatprep.subr.mxu0 0.0
        %2892 = vmatpush1.xpose.msra.mxu0 %v2889
        %2893 = vmatprep.subr.mxu0 0.0
        %2894 = vmatpush1.xpose.msra.mxu0 0.0
        %2895 = vmatprep.subr.mxu0 0.0
        %2896 = vmatpush1.xpose.msra.mxu0 0.0
        %2897 = vmatprep.subr.mxu0 0.0
        %2898 = vmatpush1.xpose.msra.mxu0 0.0
        %2899 = vmatprep.subr.mxu0 0.0
        %2900 = vmatpush1.xpose.msra.mxu0 0.0
        %2901 = vmatprep.subr.mxu0 0.0
        %2902 = vmatpush1.xpose.msra.mxu0 0.0
        %2903 = vmatprep.subr.mxu0 0.0
        %2904 = vmatpush1.xpose.msra.mxu0 0.0
        %2905 = vmatprep.subr.mxu0 0.0
        %2906 = vmatpush1.xpose.msra.mxu0 0.0
        %2907 = vmatprep.subr.mxu0 0.0
        %2908 = vmatpush1.xpose.msra.mxu0 0.0
        %2909 = vmatprep.subr.mxu0 0.0
        %2910 = vmatpush1.xpose.msra.mxu0 0.0
        %2911 = vmatprep.subr.mxu0 0.0
        %2912 = vmatpush1.xpose.msra.mxu0 0.0
        %2913 = vmatprep.subr.mxu0 0.0
        %2914 = vmatpush1.xpose.msra.mxu0 0.0
        %2915 = vmatprep.subr.mxu0 0.0
        %2916 = vmatpush1.xpose.msra.mxu0 0.0
        %2917 = vmatprep.subr.mxu0 0.0
        %2918 = vmatpush1.xpose.msra.mxu0 0.0
        %2919 = vmatprep.subr.mxu0 0.0
        %2920 = vmatpush1.xpose.msra.mxu0 0.0
        %2921 = vmatprep.subr.mxu0 0.0
        %2922 = vmatpush1.xpose.msra.mxu0 0.0
        %2923 = vmatprep.subr.mxu0 0.0
        %2924 = vmatpush1.xpose.msra.mxu0 0.0
        %2925 = vmatprep.subr.mxu0 0.0
        %2926 = vmatpush1.xpose.msra.mxu0 0.0
        %2927 = vmatprep.subr.mxu0 0.0
        %2928 = vmatpush1.xpose.msra.mxu0 0.0
        %2929 = vmatprep.subr.mxu0 0.0
        %2930 = vmatpush1.xpose.msra.mxu0 0.0
        %2931 = vmatprep.subr.mxu0 0.0
        %2932 = vmatpush1.xpose.msra.mxu0 0.0
        %2933 = vmatprep.subr.mxu0 0.0
        %2934 = vmatpush1.xpose.msra.mxu0 0.0
        %2935 = vmatprep.subr.mxu0 0.0
        %2936 = vmatpush1.xpose.msra.mxu0 0.0
        %2937 = vmatprep.subr.mxu0 0.0
        %2938 = vmatpush1.xpose.msra.mxu0 0.0
        %2939 = vmatprep.subr.mxu0 0.0
        %2940 = vmatpush1.xpose.msra.mxu0 0.0
        %2941 = vmatprep.subr.mxu0 0.0
        %2942 = vmatpush1.xpose.msra.mxu0 0.0
        %2943 = vmatprep.subr.mxu0 0.0
        %2944 = vmatpush1.xpose.msra.mxu0 0.0
        %2945 = vmatprep.subr.mxu0 0.0
        %2946 = vmatpush1.xpose.msra.mxu0 0.0
        %2947 = vmatprep.subr.mxu0 0.0
        %2948 = vmatpush1.xpose.msra.mxu0 0.0
        %2949 = vmatprep.subr.mxu0 0.0
        %2950 = vmatpush1.xpose.msra.mxu0 0.0
        %2951 = vmatprep.subr.mxu0 0.0
        %2952 = vmatpush1.xpose.msra.mxu0 0.0
        %2953 = vmatprep.subr.mxu0 0.0
        %2954 = vmatpush1.xpose.msra.mxu0 0.0
        %2955 = vmatprep.mubr.f32.mxu0 0.0
        %2956 = vmatmul.mubr.f32.gmra.mrb[0].mxu0 %v2886
        %v2957 = vpop.f32.mrb[0].mxu0
        %v2958 = vadd.f32 0.0, %v2957
        %v2959 = vpop.f32.mrb[0].mxu0
        %2960 = vdwg.mxu0
        %v2962 = vsel %vm1223, %v2805, 0
        %v2965 = vsel %vm1223, %v2752, 0
        %2967 = vmatprep.subr.mxu0 0.0
        %2968 = vmatpush1.xpose.msra.mxu0 %v2965
        %2969 = vmatprep.subr.mxu0 0.0
        %2970 = vmatpush1.xpose.msra.mxu0 0.0
        %2971 = vmatprep.subr.mxu0 0.0
        %2972 = vmatpush1.xpose.msra.mxu0 0.0
        %2973 = vmatprep.subr.mxu0 0.0
        %2974 = vmatpush1.xpose.msra.mxu0 0.0
        %2975 = vmatprep.subr.mxu0 0.0
        %2976 = vmatpush1.xpose.msra.mxu0 0.0
        %2977 = vmatprep.subr.mxu0 0.0
        %2978 = vmatpush1.xpose.msra.mxu0 0.0
        %2979 = vmatprep.subr.mxu0 0.0
        %2980 = vmatpush1.xpose.msra.mxu0 0.0
        %2981 = vmatprep.subr.mxu0 0.0
        %2982 = vmatpush1.xpose.msra.mxu0 0.0
        %2983 = vmatprep.subr.mxu0 0.0
        %2984 = vmatpush1.xpose.msra.mxu0 0.0
        %2985 = vmatprep.subr.mxu0 0.0
        %2986 = vmatpush1.xpose.msra.mxu0 0.0
        %2987 = vmatprep.subr.mxu0 0.0
        %2988 = vmatpush1.xpose.msra.mxu0 0.0
        %2989 = vmatprep.subr.mxu0 0.0
        %2990 = vmatpush1.xpose.msra.mxu0 0.0
        %2991 = vmatprep.subr.mxu0 0.0
        %2992 = vmatpush1.xpose.msra.mxu0 0.0
        %2993 = vmatprep.subr.mxu0 0.0
        %2994 = vmatpush1.xpose.msra.mxu0 0.0
        %2995 = vmatprep.subr.mxu0 0.0
        %2996 = vmatpush1.xpose.msra.mxu0 0.0
        %2997 = vmatprep.subr.mxu0 0.0
        %2998 = vmatpush1.xpose.msra.mxu0 0.0
        %2999 = vmatprep.subr.mxu0 0.0
        %3000 = vmatpush1.xpose.msra.mxu0 0.0
        %3001 = vmatprep.subr.mxu0 0.0
        %3002 = vmatpush1.xpose.msra.mxu0 0.0
        %3003 = vmatprep.subr.mxu0 0.0
        %3004 = vmatpush1.xpose.msra.mxu0 0.0
        %3005 = vmatprep.subr.mxu0 0.0
        %3006 = vmatpush1.xpose.msra.mxu0 0.0
        %3007 = vmatprep.subr.mxu0 0.0
        %3008 = vmatpush1.xpose.msra.mxu0 0.0
        %3009 = vmatprep.subr.mxu0 0.0
        %3010 = vmatpush1.xpose.msra.mxu0 0.0
        %3011 = vmatprep.subr.mxu0 0.0
        %3012 = vmatpush1.xpose.msra.mxu0 0.0
        %3013 = vmatprep.subr.mxu0 0.0
        %3014 = vmatpush1.xpose.msra.mxu0 0.0
        %3015 = vmatprep.subr.mxu0 0.0
        %3016 = vmatpush1.xpose.msra.mxu0 0.0
        %3017 = vmatprep.subr.mxu0 0.0
        %3018 = vmatpush1.xpose.msra.mxu0 0.0
        %3019 = vmatprep.subr.mxu0 0.0
        %3020 = vmatpush1.xpose.msra.mxu0 0.0
        %3021 = vmatprep.subr.mxu0 0.0
        %3022 = vmatpush1.xpose.msra.mxu0 0.0
        %3023 = vmatprep.subr.mxu0 0.0
        %3024 = vmatpush1.xpose.msra.mxu0 0.0
        %3025 = vmatprep.subr.mxu0 0.0
        %3026 = vmatpush1.xpose.msra.mxu0 0.0
        %3027 = vmatprep.subr.mxu0 0.0
        %3028 = vmatpush1.xpose.msra.mxu0 0.0
        %3029 = vmatprep.subr.mxu0 0.0
        %3030 = vmatpush1.xpose.msra.mxu0 0.0
        %3031 = vmatprep.mubr.f32.mxu0 0.0
        %3032 = vmatmul.mubr.f32.gmra.mrb[0].mxu0 %v2962
        %v3033 = vpop.f32.mrb[0].mxu0
        %v3034 = vadd.f32 0.0, %v3033
        %v3035 = vpop.f32.mrb[0].mxu0
        %3036 = vdwg.mxu0
        %v3038 = vsel %vm1223, %v2837, 0
        %v3041 = vsel %vm1223, %v2754, 0
        %3043 = vmatprep.subr.mxu0 0.0
        %3044 = vmatpush1.xpose.msra.mxu0 %v3041
        %3045 = vmatprep.subr.mxu0 0.0
        %3046 = vmatpush1.xpose.msra.mxu0 0.0
        %3047 = vmatprep.subr.mxu0 0.0
        %3048 = vmatpush1.xpose.msra.mxu0 0.0
        %3049 = vmatprep.subr.mxu0 0.0
        %3050 = vmatpush1.xpose.msra.mxu0 0.0
        %3051 = vmatprep.subr.mxu0 0.0
        %3052 = vmatpush1.xpose.msra.mxu0 0.0
        %3053 = vmatprep.subr.mxu0 0.0
        %3054 = vmatpush1.xpose.msra.mxu0 0.0
        %3055 = vmatprep.subr.mxu0 0.0
        %3056 = vmatpush1.xpose.msra.mxu0 0.0
        %3057 = vmatprep.subr.mxu0 0.0
        %3058 = vmatpush1.xpose.msra.mxu0 0.0
        %3059 = vmatprep.subr.mxu0 0.0
        %3060 = vmatpush1.xpose.msra.mxu0 0.0
        %3061 = vmatprep.subr.mxu0 0.0
        %3062 = vmatpush1.xpose.msra.mxu0 0.0
        %3063 = vmatprep.subr.mxu0 0.0
        %3064 = vmatpush1.xpose.msra.mxu0 0.0
        %3065 = vmatprep.subr.mxu0 0.0
        %3066 = vmatpush1.xpose.msra.mxu0 0.0
        %3067 = vmatprep.subr.mxu0 0.0
        %3068 = vmatpush1.xpose.msra.mxu0 0.0
        %3069 = vmatprep.subr.mxu0 0.0
        %3070 = vmatpush1.xpose.msra.mxu0 0.0
        %3071 = vmatprep.subr.mxu0 0.0
        %3072 = vmatpush1.xpose.msra.mxu0 0.0
        %3073 = vmatprep.subr.mxu0 0.0
        %3074 = vmatpush1.xpose.msra.mxu0 0.0
        %3075 = vmatprep.subr.mxu0 0.0
        %3076 = vmatpush1.xpose.msra.mxu0 0.0
        %3077 = vmatprep.subr.mxu0 0.0
        %3078 = vmatpush1.xpose.msra.mxu0 0.0
        %3079 = vmatprep.subr.mxu0 0.0
        %3080 = vmatpush1.xpose.msra.mxu0 0.0
        %3081 = vmatprep.subr.mxu0 0.0
        %3082 = vmatpush1.xpose.msra.mxu0 0.0
        %3083 = vmatprep.subr.mxu0 0.0
        %3084 = vmatpush1.xpose.msra.mxu0 0.0
        %3085 = vmatprep.subr.mxu0 0.0
        %3086 = vmatpush1.xpose.msra.mxu0 0.0
        %3087 = vmatprep.subr.mxu0 0.0
        %3088 = vmatpush1.xpose.msra.mxu0 0.0
        %3089 = vmatprep.subr.mxu0 0.0
        %3090 = vmatpush1.xpose.msra.mxu0 0.0
        %3091 = vmatprep.subr.mxu0 0.0
        %3092 = vmatpush1.xpose.msra.mxu0 0.0
        %3093 = vmatprep.subr.mxu0 0.0
        %3094 = vmatpush1.xpose.msra.mxu0 0.0
        %3095 = vmatprep.subr.mxu0 0.0
        %3096 = vmatpush1.xpose.msra.mxu0 0.0
        %3097 = vmatprep.subr.mxu0 0.0
        %3098 = vmatpush1.xpose.msra.mxu0 0.0
        %3099 = vmatprep.subr.mxu0 0.0
        %3100 = vmatpush1.xpose.msra.mxu0 0.0
        %3101 = vmatprep.subr.mxu0 0.0
        %3102 = vmatpush1.xpose.msra.mxu0 0.0
        %3103 = vmatprep.subr.mxu0 0.0
        %3104 = vmatpush1.xpose.msra.mxu0 0.0
        %3105 = vmatprep.subr.mxu0 0.0
        %3106 = vmatpush1.xpose.msra.mxu0 0.0
        %3107 = vmatprep.mubr.f32.mxu0 0.0
        %3108 = vmatmul.mubr.f32.gmra.mrb[0].mxu0 %v3038
        %v3109 = vpop.f32.mrb[0].mxu0
        %v3110 = vadd.f32 0.0, %v3109
        %v3111 = vpop.f32.mrb[0].mxu0
        %3112 = vdwg.mxu0
        %v3114 = vsel %vm1223, %v2869, 0
        %v3117 = vsel %vm1223, %v2756, 0
        %3119 = vmatprep.subr.mxu0 0.0
        %3120 = vmatpush1.xpose.msra.mxu0 %v3117
        %3121 = vmatprep.subr.mxu0 0.0
        %3122 = vmatpush1.xpose.msra.mxu0 0.0
        %3123 = vmatprep.subr.mxu0 0.0
        %3124 = vmatpush1.xpose.msra.mxu0 0.0
        %3125 = vmatprep.subr.mxu0 0.0
        %3126 = vmatpush1.xpose.msra.mxu0 0.0
        %3127 = vmatprep.subr.mxu0 0.0
        %3128 = vmatpush1.xpose.msra.mxu0 0.0
        %3129 = vmatprep.subr.mxu0 0.0
        %3130 = vmatpush1.xpose.msra.mxu0 0.0
        %3131 = vmatprep.subr.mxu0 0.0
        %3132 = vmatpush1.xpose.msra.mxu0 0.0
        %3133 = vmatprep.subr.mxu0 0.0
        %3134 = vmatpush1.xpose.msra.mxu0 0.0
        %3135 = vmatprep.subr.mxu0 0.0
        %3136 = vmatpush1.xpose.msra.mxu0 0.0
        %3137 = vmatprep.subr.mxu0 0.0
        %3138 = vmatpush1.xpose.msra.mxu0 0.0
        %3139 = vmatprep.subr.mxu0 0.0
        %3140 = vmatpush1.xpose.msra.mxu0 0.0
        %3141 = vmatprep.subr.mxu0 0.0
        %3142 = vmatpush1.xpose.msra.mxu0 0.0
        %3143 = vmatprep.subr.mxu0 0.0
        %3144 = vmatpush1.xpose.msra.mxu0 0.0
        %3145 = vmatprep.subr.mxu0 0.0
        %3146 = vmatpush1.xpose.msra.mxu0 0.0
        %3147 = vmatprep.subr.mxu0 0.0
        %3148 = vmatpush1.xpose.msra.mxu0 0.0
        %3149 = vmatprep.subr.mxu0 0.0
        %3150 = vmatpush1.xpose.msra.mxu0 0.0
        %3151 = vmatprep.subr.mxu0 0.0
        %3152 = vmatpush1.xpose.msra.mxu0 0.0
        %3153 = vmatprep.subr.mxu0 0.0
        %3154 = vmatpush1.xpose.msra.mxu0 0.0
        %3155 = vmatprep.subr.mxu0 0.0
        %3156 = vmatpush1.xpose.msra.mxu0 0.0
        %3157 = vmatprep.subr.mxu0 0.0
        %3158 = vmatpush1.xpose.msra.mxu0 0.0
        %3159 = vmatprep.subr.mxu0 0.0
        %3160 = vmatpush1.xpose.msra.mxu0 0.0
        %3161 = vmatprep.subr.mxu0 0.0
        %3162 = vmatpush1.xpose.msra.mxu0 0.0
        %3163 = vmatprep.subr.mxu0 0.0
        %3164 = vmatpush1.xpose.msra.mxu0 0.0
        %3165 = vmatprep.subr.mxu0 0.0
        %3166 = vmatpush1.xpose.msra.mxu0 0.0
        %3167 = vmatprep.subr.mxu0 0.0
        %3168 = vmatpush1.xpose.msra.mxu0 0.0
        %3169 = vmatprep.subr.mxu0 0.0
        %3170 = vmatpush1.xpose.msra.mxu0 0.0
        %3171 = vmatprep.subr.mxu0 0.0
        %3172 = vmatpush1.xpose.msra.mxu0 0.0
        %3173 = vmatprep.subr.mxu0 0.0
        %3174 = vmatpush1.xpose.msra.mxu0 0.0
        %3175 = vmatprep.subr.mxu0 0.0
        %3176 = vmatpush1.xpose.msra.mxu0 0.0
        %3177 = vmatprep.subr.mxu0 0.0
        %3178 = vmatpush1.xpose.msra.mxu0 0.0
        %3179 = vmatprep.subr.mxu0 0.0
        %3180 = vmatpush1.xpose.msra.mxu0 0.0
        %3181 = vmatprep.subr.mxu0 0.0
        %3182 = vmatpush1.xpose.msra.mxu0 0.0
        %3183 = vmatprep.mubr.f32.mxu0 0.0
        %3184 = vmatmul.mubr.f32.gmra.mrb[0].mxu0 %v3114
        %v3185 = vpop.f32.mrb[0].mxu0
        %v3186 = vadd.f32 0.0, %v3185
        %v3187 = vpop.f32.mrb[0].mxu0
        %3188 = vdwg.mxu0
        %3189 = vxpose.xlu0.b32.start [1/16] %v2958, 128
        %3190 = vxpose.xlu0.b32.cont [2/16] 0.0, 128
        %3191 = vxpose.xlu0.b32.cont [3/16] 0.0, 128
        %3192 = vxpose.xlu0.b32.cont [4/16] 0.0, 128
        %3193 = vxpose.xlu0.b32.cont [5/16] 0.0, 128
        %3194 = vxpose.xlu0.b32.cont [6/16] 0.0, 128
        %3195 = vxpose.xlu0.b32.cont [7/16] 0.0, 128
        %3196 = vxpose.xlu0.b32.cont [8/16] 0.0, 128
        %3197 = vxpose.xlu0.b32.cont [9/16] 0.0, 128
        %3198 = vxpose.xlu0.b32.cont [10/16] 0.0, 128
        %3199 = vxpose.xlu0.b32.cont [11/16] 0.0, 128
        %3200 = vxpose.xlu0.b32.cont [12/16] 0.0, 128
        %3201 = vxpose.xlu0.b32.cont [13/16] 0.0, 128
        %3202 = vxpose.xlu0.b32.cont [14/16] 0.0, 128
        %3203 = vxpose.xlu0.b32.cont [15/16] 0.0, 128
        %3204 = vxpose.xlu0.b32.end [16/16] 0.0, 128
        %v3205 = vpop.trf.xlu0
        %v3206 = vpop.trf.xlu0
        %v3207 = vpop.trf.xlu0
        %v3208 = vpop.trf.xlu0
        %v3209 = vpop.trf.xlu0
        %v3210 = vpop.trf.xlu0
        %v3211 = vpop.trf.xlu0
        %v3212 = vpop.trf.xlu0
        %v3213 = vpop.trf.xlu0
        %v3214 = vpop.trf.xlu0
        %v3215 = vpop.trf.xlu0
        %v3216 = vpop.trf.xlu0
        %v3217 = vpop.trf.xlu0
        %v3218 = vpop.trf.xlu0
        %v3219 = vpop.trf.xlu0
        %v3220 = vpop.trf.xlu0
        %3221 = vxpose.xlu0.b32.start [1/16] %v3034, 128
        %3222 = vxpose.xlu0.b32.cont [2/16] 0.0, 128
        %3223 = vxpose.xlu0.b32.cont [3/16] 0.0, 128
        %3224 = vxpose.xlu0.b32.cont [4/16] 0.0, 128
        %3225 = vxpose.xlu0.b32.cont [5/16] 0.0, 128
        %3226 = vxpose.xlu0.b32.cont [6/16] 0.0, 128
        %3227 = vxpose.xlu0.b32.cont [7/16] 0.0, 128
        %3228 = vxpose.xlu0.b32.cont [8/16] 0.0, 128
        %3229 = vxpose.xlu0.b32.cont [9/16] 0.0, 128
        %3230 = vxpose.xlu0.b32.cont [10/16] 0.0, 128
        %3231 = vxpose.xlu0.b32.cont [11/16] 0.0, 128
        %3232 = vxpose.xlu0.b32.cont [12/16] 0.0, 128
        %3233 = vxpose.xlu0.b32.cont [13/16] 0.0, 128
        %3234 = vxpose.xlu0.b32.cont [14/16] 0.0, 128
        %3235 = vxpose.xlu0.b32.cont [15/16] 0.0, 128
        %3236 = vxpose.xlu0.b32.end [16/16] 0.0, 128
        %v3237 = vpop.trf.xlu0
        %v3238 = vpop.trf.xlu0
        %v3239 = vpop.trf.xlu0
        %v3240 = vpop.trf.xlu0
        %v3241 = vpop.trf.xlu0
        %v3242 = vpop.trf.xlu0
        %v3243 = vpop.trf.xlu0
        %v3244 = vpop.trf.xlu0
        %v3245 = vpop.trf.xlu0
        %v3246 = vpop.trf.xlu0
        %v3247 = vpop.trf.xlu0
        %v3248 = vpop.trf.xlu0
        %v3249 = vpop.trf.xlu0
        %v3250 = vpop.trf.xlu0
        %v3251 = vpop.trf.xlu0
        %v3252 = vpop.trf.xlu0
        %3253 = vxpose.xlu0.b32.start [1/16] %v3110, 128
        %3254 = vxpose.xlu0.b32.cont [2/16] 0.0, 128
        %3255 = vxpose.xlu0.b32.cont [3/16] 0.0, 128
        %3256 = vxpose.xlu0.b32.cont [4/16] 0.0, 128
        %3257 = vxpose.xlu0.b32.cont [5/16] 0.0, 128
        %3258 = vxpose.xlu0.b32.cont [6/16] 0.0, 128
        %3259 = vxpose.xlu0.b32.cont [7/16] 0.0, 128
        %3260 = vxpose.xlu0.b32.cont [8/16] 0.0, 128
        %3261 = vxpose.xlu0.b32.cont [9/16] 0.0, 128
        %3262 = vxpose.xlu0.b32.cont [10/16] 0.0, 128
        %3263 = vxpose.xlu0.b32.cont [11/16] 0.0, 128
        %3264 = vxpose.xlu0.b32.cont [12/16] 0.0, 128
        %3265 = vxpose.xlu0.b32.cont [13/16] 0.0, 128
        %3266 = vxpose.xlu0.b32.cont [14/16] 0.0, 128
        %3267 = vxpose.xlu0.b32.cont [15/16] 0.0, 128
        %3268 = vxpose.xlu0.b32.end [16/16] 0.0, 128
        %v3269 = vpop.trf.xlu0
        %v3270 = vpop.trf.xlu0
        %v3271 = vpop.trf.xlu0
        %v3272 = vpop.trf.xlu0
        %v3273 = vpop.trf.xlu0
        %v3274 = vpop.trf.xlu0
        %v3275 = vpop.trf.xlu0
        %v3276 = vpop.trf.xlu0
        %v3277 = vpop.trf.xlu0
        %v3278 = vpop.trf.xlu0
        %v3279 = vpop.trf.xlu0
        %v3280 = vpop.trf.xlu0
        %v3281 = vpop.trf.xlu0
        %v3282 = vpop.trf.xlu0
        %v3283 = vpop.trf.xlu0
        %v3284 = vpop.trf.xlu0
        %3285 = vxpose.xlu0.b32.start [1/16] %v3186, 128
        %3286 = vxpose.xlu0.b32.cont [2/16] 0.0, 128
        %3287 = vxpose.xlu0.b32.cont [3/16] 0.0, 128
        %3288 = vxpose.xlu0.b32.cont [4/16] 0.0, 128
        %3289 = vxpose.xlu0.b32.cont [5/16] 0.0, 128
        %3290 = vxpose.xlu0.b32.cont [6/16] 0.0, 128
        %3291 = vxpose.xlu0.b32.cont [7/16] 0.0, 128
        %3292 = vxpose.xlu0.b32.cont [8/16] 0.0, 128
        %3293 = vxpose.xlu0.b32.cont [9/16] 0.0, 128
        %3294 = vxpose.xlu0.b32.cont [10/16] 0.0, 128
        %3295 = vxpose.xlu0.b32.cont [11/16] 0.0, 128
        %3296 = vxpose.xlu0.b32.cont [12/16] 0.0, 128
        %3297 = vxpose.xlu0.b32.cont [13/16] 0.0, 128
        %3298 = vxpose.xlu0.b32.cont [14/16] 0.0, 128
        %3299 = vxpose.xlu0.b32.cont [15/16] 0.0, 128
        %3300 = vxpose.xlu0.b32.end [16/16] 0.0, 128
        %v3301 = vpop.trf.xlu0
        %v3302 = vpop.trf.xlu0
        %v3303 = vpop.trf.xlu0
        %v3304 = vpop.trf.xlu0
        %v3305 = vpop.trf.xlu0
        %v3306 = vpop.trf.xlu0
        %v3307 = vpop.trf.xlu0
        %v3308 = vpop.trf.xlu0
        %v3309 = vpop.trf.xlu0
        %v3310 = vpop.trf.xlu0
        %v3311 = vpop.trf.xlu0
        %v3312 = vpop.trf.xlu0
        %v3313 = vpop.trf.xlu0
        %v3314 = vpop.trf.xlu0
        %v3315 = vpop.trf.xlu0
        %v3316 = vpop.trf.xlu0
        %v3317 = vcombine.low %v3205, %v3269
        %v3318 = vcombine.high %v3205, %v3269
        %v3320 = vunpack.c.l.s4 1983009808
        %v3321 = vunpack.c.0.s8 %v3320
        %v3322 = vlaneseq
        %v3323 = vshrl.u32 %v3322, 7
        %v3324 = vsub.s32 %v3321, %v3323
        %v3325 = vrot.slane %v3317, %v3324
        %v3327 = vunpack.c.l.s4 1983009808
        %v3328 = vunpack.c.0.s8 %v3327
        %v3329 = vlaneseq
        %v3330 = vshrl.u32 %v3329, 7
        %v3331 = vsub.s32 %v3328, %v3330
        %v3332 = vrot.slane %v3318, %v3331
        %v3333 = vcombine.low %v3237, %v3301
        %v3334 = vcombine.high %v3237, %v3301
        %v3336 = vunpack.c.l.s4 1983009808
        %v3337 = vunpack.c.0.s8 %v3336
        %v3338 = vlaneseq
        %v3339 = vshrl.u32 %v3338, 7
        %v3340 = vsub.s32 %v3337, %v3339
        %v3341 = vrot.slane %v3333, %v3340
        %v3343 = vunpack.c.l.s4 1983009808
        %v3344 = vunpack.c.0.s8 %v3343
        %v3345 = vlaneseq
        %v3346 = vshrl.u32 %v3345, 7
        %v3347 = vsub.s32 %v3344, %v3346
        %v3348 = vrot.slane %v3334, %v3347
        %v3349 = vcombine.low %v3325, %v3341
        %v3350 = vcombine.high %v3325, %v3341
        %v3352 = vunpack.c.l.s4 1934713408
        %v3353 = vunpack.c.0.s8 %v3352
        %v3354 = vlaneseq
        %v3355 = vshrl.u32 %v3354, 7
        %v3356 = vsub.s32 %v3353, %v3355
        %v3357 = vrot.slane %v3349, %v3356
        %v3359 = vunpack.c.l.s4 1934713408
        %v3360 = vunpack.c.0.s8 %v3359
        %v3361 = vlaneseq
        %v3362 = vshrl.u32 %v3361, 7
        %v3363 = vsub.s32 %v3360, %v3362
        %v3364 = vrot.slane %v3350, %v3363
        %v3365 = vcombine.low %v3332, %v3348
        %v3366 = vcombine.high %v3332, %v3348
        %v3368 = vunpack.c.l.s4 1934713408
        %v3369 = vunpack.c.0.s8 %v3368
        %v3370 = vlaneseq
        %v3371 = vshrl.u32 %v3370, 7
        %v3372 = vsub.s32 %v3369, %v3371
        %v3373 = vrot.slane %v3365, %v3372
        %v3375 = vunpack.c.l.s4 1934713408
        %v3376 = vunpack.c.0.s8 %v3375
        %v3377 = vlaneseq
        %v3378 = vshrl.u32 %v3377, 7
        %v3379 = vsub.s32 %v3376, %v3378
        %v3380 = vrot.slane %v3366, %v3379
        %v3381 = vcombine.high %v3357, 0.0
        %v3382 = vcombine.high %v3364, 0.0
        %v3383 = vcombine.high %v3373, 0.0
        %v3384 = vcombine.high %v3380, 0.0
        %v3385 = vcombine.low %v3357, %v3364
        %v3387 = vunpack.c.l.s4 1983009808
        %v3388 = vunpack.c.0.s8 %v3387
        %v3389 = vlaneseq
        %v3390 = vshrl.u32 %v3389, 7
        %v3391 = vsub.s32 %v3388, %v3390
        %v3392 = vrot.slane %v3385, %v3391
        %v3393 = vcombine.low %v3381, %v3382
        %v3395 = vunpack.c.l.s4 1983009808
        %v3396 = vunpack.c.0.s8 %v3395
        %v3397 = vlaneseq
        %v3398 = vshrl.u32 %v3397, 7
        %v3399 = vsub.s32 %v3396, %v3398
        %v3400 = vrot.slane %v3393, %v3399
        %v3401 = vcombine.low %v3373, %v3380
        %v3403 = vunpack.c.l.s4 1983009808
        %v3404 = vunpack.c.0.s8 %v3403
        %v3405 = vlaneseq
        %v3406 = vshrl.u32 %v3405, 7
        %v3407 = vsub.s32 %v3404, %v3406
        %v3408 = vrot.slane %v3401, %v3407
        %v3409 = vcombine.low %v3383, %v3384
        %v3411 = vunpack.c.l.s4 1983009808
        %v3412 = vunpack.c.0.s8 %v3411
        %v3413 = vlaneseq
        %v3414 = vshrl.u32 %v3413, 7
        %v3415 = vsub.s32 %v3412, %v3414
        %v3416 = vrot.slane %v3409, %v3415
        %v3417 = vcombine.low %v3392, %v3400
        %v3418 = vcombine.high %v3392, %v3400
        %v3420 = vunpack.c.l.s4 1934713408
        %v3421 = vunpack.c.0.s8 %v3420
        %v3422 = vlaneseq
        %v3423 = vshrl.u32 %v3422, 7
        %v3424 = vsub.s32 %v3421, %v3423
        %v3425 = vrot.slane %v3417, %v3424
        %v3427 = vunpack.c.l.s4 1934713408
        %v3428 = vunpack.c.0.s8 %v3427
        %v3429 = vlaneseq
        %v3430 = vshrl.u32 %v3429, 7
        %v3431 = vsub.s32 %v3428, %v3430
        %v3432 = vrot.slane %v3418, %v3431
        %v3433 = vcombine.low %v3408, %v3416
        %v3434 = vcombine.high %v3408, %v3416
        %v3436 = vunpack.c.l.s4 1934713408
        %v3437 = vunpack.c.0.s8 %v3436
        %v3438 = vlaneseq
        %v3439 = vshrl.u32 %v3438, 7
        %v3440 = vsub.s32 %v3437, %v3439
        %v3441 = vrot.slane %v3433, %v3440
        %v3443 = vunpack.c.l.s4 1934713408
        %v3444 = vunpack.c.0.s8 %v3443
        %v3445 = vlaneseq
        %v3446 = vshrl.u32 %v3445, 7
        %v3447 = vsub.s32 %v3444, %v3446
        %v3448 = vrot.slane %v3434, %v3447
        %v3449 = vcombine.low %v3425, %v3441
        %v3450 = vcombine.high %v3425, %v3441
        %v3451 = vcombine.low %v3432, %v3448
        %v3452 = vcombine.high %v3432, %v3448
        %3454 = vrot.lane.b32.xlu0 %v3450, 8
        %v3455 = vpop.permute.xlu0 %3454
        %3458 = vrot.lane.b32.xlu0 %v3451, 16
        %v3459 = vpop.permute.xlu0 %3458
        %3462 = vrot.lane.b32.xlu0 %v3452, 24
        %v3463 = vpop.permute.xlu0 %3462
        %v3465 = vsel %vm1223, %v3449, %v3455
        %v3466 = vsel %vm2265, %v3465, %v3459
        %v3467 = vsel %vm2267, %v3466, %v3463
        %3468 = vst.msk [vmem:[#allocation3 + $0x8] sm:$0xff] %vm812, %v3467
        %v3469 = vld [vmem:[#allocation3] sm:$0xff]
        %v3470 = vld [vmem:[#allocation3 + $0x8] sm:$0xff]
        %v3471 = vld [vmem:[%s758] sm:$0xff]
        %v3472 = vld [vmem:[%s758 + $0x8] sm:$0xff]
        %v3473 = vld [vmem:[%s758 + $0x10] sm:$0xff]
        %v3474 = vld [vmem:[%s758 + $0x18] sm:$0xff]
        %v3475 = vld [vmem:[%s761] sm:$0x1]
        %v3477 = vlaneseq
        %v3478 = vshrl.u32 %v3477, 7
        %v3479 = vsub.s32 0, %v3478
        %v3480 = vrot.slane %v3475, %v3479
        %v3483 = vsel %vm812, %v3469, 0
        %v3486 = vsel %vm812, %v3470, 0
        %3488 = vmatprep.subr.mxu0 0.0
        %3489 = vmatpush1.msra.mxu0 %v3471
        %3490 = vmatprep.subr.mxu0 0.0
        %3491 = vmatpush1.msra.mxu0 %v3472
        %3492 = vmatprep.subr.mxu0 0.0
        %3493 = vmatpush1.msra.mxu0 %v3473
        %3494 = vmatprep.subr.mxu0 0.0
        %3495 = vmatpush1.msra.mxu0 %v3474
        %3496 = vmatprep.subr.mxu0 0.0
        %3497 = vmatpush1.msra.mxu0 0.0
        %3498 = vmatprep.subr.mxu0 0.0
        %3499 = vmatpush1.msra.mxu0 0.0
        %3500 = vmatprep.subr.mxu0 0.0
        %3501 = vmatpush1.msra.mxu0 0.0
        %3502 = vmatprep.subr.mxu0 0.0
        %3503 = vmatpush1.msra.mxu0 0.0
        %3504 = vmatprep.subr.mxu0 0.0
        %3505 = vmatpush1.msra.mxu0 0.0
        %3506 = vmatprep.subr.mxu0 0.0
        %3507 = vmatpush1.msra.mxu0 0.0
        %3508 = vmatprep.subr.mxu0 0.0
        %3509 = vmatpush1.msra.mxu0 0.0
        %3510 = vmatprep.subr.mxu0 0.0
        %3511 = vmatpush1.msra.mxu0 0.0
        %3512 = vmatprep.subr.mxu0 0.0
        %3513 = vmatpush1.msra.mxu0 0.0
        %3514 = vmatprep.subr.mxu0 0.0
        %3515 = vmatpush1.msra.mxu0 0.0
        %3516 = vmatprep.subr.mxu0 0.0
        %3517 = vmatpush1.msra.mxu0 0.0
        %3518 = vmatprep.subr.mxu0 0.0
        %3519 = vmatpush1.msra.mxu0 0.0
        %3520 = vmatprep.subr.mxu0 0.0
        %3521 = vmatpush1.msra.mxu0 0.0
        %3522 = vmatprep.subr.mxu0 0.0
        %3523 = vmatpush1.msra.mxu0 0.0
        %3524 = vmatprep.subr.mxu0 0.0
        %3525 = vmatpush1.msra.mxu0 0.0
        %3526 = vmatprep.subr.mxu0 0.0
        %3527 = vmatpush1.msra.mxu0 0.0
        %3528 = vmatprep.subr.mxu0 0.0
        %3529 = vmatpush1.msra.mxu0 0.0
        %3530 = vmatprep.subr.mxu0 0.0
        %3531 = vmatpush1.msra.mxu0 0.0
        %3532 = vmatprep.subr.mxu0 0.0
        %3533 = vmatpush1.msra.mxu0 0.0
        %3534 = vmatprep.subr.mxu0 0.0
        %3535 = vmatpush1.msra.mxu0 0.0
        %3536 = vmatprep.subr.mxu0 0.0
        %3537 = vmatpush1.msra.mxu0 0.0
        %3538 = vmatprep.subr.mxu0 0.0
        %3539 = vmatpush1.msra.mxu0 0.0
        %3540 = vmatprep.subr.mxu0 0.0
        %3541 = vmatpush1.msra.mxu0 0.0
        %3542 = vmatprep.subr.mxu0 0.0
        %3543 = vmatpush1.msra.mxu0 0.0
        %3544 = vmatprep.subr.mxu0 0.0
        %3545 = vmatpush1.msra.mxu0 0.0
        %3546 = vmatprep.subr.mxu0 0.0
        %3547 = vmatpush1.msra.mxu0 0.0
        %3548 = vmatprep.subr.mxu0 0.0
        %3549 = vmatpush1.msra.mxu0 0.0
        %3550 = vmatprep.subr.mxu0 0.0
        %3551 = vmatpush1.msra.mxu0 0.0
        %3552 = vmatprep.mubr.f32.mxu0 0.0
        %3553 = vmatmul.mubr.f32.gmra.mrb[0].mxu0 %v3483
        %v3554 = vpop.f32.mrb[0].mxu0
        %v3555 = vadd.f32 %v3480, %v3554
        %v3556 = vpop.f32.mrb[0].mxu0
        %3557 = vmatprep.mubr.f32.mxu0 0.0
        %3558 = vmatmul.mubr.f32.gmra.mrb[0].mxu0 %v3486
        %v3559 = vpop.f32.mrb[0].mxu0
        %v3560 = vadd.f32 %v3480, %v3559
        %v3561 = vpop.f32.mrb[0].mxu0
        %3562 = vdwg.mxu0
        %v3563 = vadd.f32 %v799, %v3555
        %v3564 = vadd.f32 %v800, %v3560
        %v3565 = vld [vmem:[%s764] sm:$0x1]
        %v3566 = vld [vmem:[%s767] sm:$0x1]
        %v3567 = vsel %vm812, %v3563, 0.0
        %3568 = vadd.xlane.f32.xlu0 %v3567
        %v3569 = vpop.xlane.xlu0 %3568
        %v3570 = vsel %vm812, %v3564, 0.0
        %3571 = vadd.xlane.f32.xlu0 %v3570
        %v3572 = vpop.xlane.xlu0 %3571
        %v3573 = vrcp.pop 32.0
        %v3574 = vmul.f32 %v3569, %v3573
        %v3575 = vmul.f32 %v3572, %v3573
        %v3576 = vsub.f32 %v3563, %v3574
        %v3577 = vsub.f32 %v3564, %v3575
        %v3578 = vmul.f32 %v3576, %v3576
        %v3579 = vmul.f32 %v3577, %v3577
        %v3580 = vsel %vm812, %v3578, 0.0
        %3581 = vadd.xlane.f32.xlu0 %v3580
        %v3582 = vpop.xlane.xlu0 %3581
        %v3583 = vsel %vm812, %v3579, 0.0
        %3584 = vadd.xlane.f32.xlu0 %v3583
        %v3585 = vpop.xlane.xlu0 %3584
        %v3586 = vmul.f32 %v3582, %v3573
        %v3587 = vmul.f32 %v3585, %v3573
        %v3588 = vadd.f32 %v3586, 1e-05
        %v3589 = vadd.f32 %v3587, 1e-05
        %v3590 = vrsqrt.pop %v3588
        %v3591 = vrsqrt.pop %v3589
        %v3592 = vmul.f32 %v3576, %v3590
        %v3593 = vmul.f32 %v3577, %v3591
        %v3595 = vlaneseq
        %v3596 = vshrl.u32 %v3595, 7
        %v3597 = vsub.s32 0, %v3596
        %v3598 = vrot.slane %v3565, %v3597
        %v3600 = vmul.f32 %v3592, %v3598
        %v3601 = vmul.f32 %v3593, %v3598
        %v3603 = vlaneseq
        %v3604 = vshrl.u32 %v3603, 7
        %v3605 = vsub.s32 0, %v3604
        %v3606 = vrot.slane %v3566, %v3605
        %v3608 = vadd.f32 %v3600, %v3606
        %v3609 = vadd.f32 %v3601, %v3606
        %v3610 = vld [vmem:[%s772] sm:$0xff]
        %v3611 = vld [vmem:[%s772 + $0x8] sm:$0xff]
        %v3612 = vld [vmem:[%s772 + $0x10] sm:$0xff]
        %v3613 = vld [vmem:[%s772 + $0x18] sm:$0xff]
        %v3614 = vld [vmem:[%s775] sm:$0x1]
        %v3616 = vlaneseq
        %v3617 = vshrl.u32 %v3616, 7
        %v3618 = vsub.s32 0, %v3617
        %v3619 = vrot.slane %v3614, %v3618
        %v3622 = vsel %vm812, %v3608, 0
        %v3625 = vsel %vm812, %v3609, 0
        %3627 = vmatprep.subr.mxu0 0.0
        %3628 = vmatpush1.msra.mxu0 %v3610
        %3629 = vmatprep.subr.mxu0 0.0
        %3630 = vmatpush1.msra.mxu0 %v3611
        %3631 = vmatprep.subr.mxu0 0.0
        %3632 = vmatpush1.msra.mxu0 %v3612
        %3633 = vmatprep.subr.mxu0 0.0
        %3634 = vmatpush1.msra.mxu0 %v3613
        %3635 = vmatprep.subr.mxu0 0.0
        %3636 = vmatpush1.msra.mxu0 0.0
        %3637 = vmatprep.subr.mxu0 0.0
        %3638 = vmatpush1.msra.mxu0 0.0
        %3639 = vmatprep.subr.mxu0 0.0
        %3640 = vmatpush1.msra.mxu0 0.0
        %3641 = vmatprep.subr.mxu0 0.0
        %3642 = vmatpush1.msra.mxu0 0.0
        %3643 = vmatprep.subr.mxu0 0.0
        %3644 = vmatpush1.msra.mxu0 0.0
        %3645 = vmatprep.subr.mxu0 0.0
        %3646 = vmatpush1.msra.mxu0 0.0
        %3647 = vmatprep.subr.mxu0 0.0
        %3648 = vmatpush1.msra.mxu0 0.0
        %3649 = vmatprep.subr.mxu0 0.0
        %3650 = vmatpush1.msra.mxu0 0.0
        %3651 = vmatprep.subr.mxu0 0.0
        %3652 = vmatpush1.msra.mxu0 0.0
        %3653 = vmatprep.subr.mxu0 0.0
        %3654 = vmatpush1.msra.mxu0 0.0
        %3655 = vmatprep.subr.mxu0 0.0
        %3656 = vmatpush1.msra.mxu0 0.0
        %3657 = vmatprep.subr.mxu0 0.0
        %3658 = vmatpush1.msra.mxu0 0.0
        %3659 = vmatprep.subr.mxu0 0.0
        %3660 = vmatpush1.msra.mxu0 0.0
        %3661 = vmatprep.subr.mxu0 0.0
        %3662 = vmatpush1.msra.mxu0 0.0
        %3663 = vmatprep.subr.mxu0 0.0
        %3664 = vmatpush1.msra.mxu0 0.0
        %3665 = vmatprep.subr.mxu0 0.0
        %3666 = vmatpush1.msra.mxu0 0.0
        %3667 = vmatprep.subr.mxu0 0.0
        %3668 = vmatpush1.msra.mxu0 0.0
        %3669 = vmatprep.subr.mxu0 0.0
        %3670 = vmatpush1.msra.mxu0 0.0
        %3671 = vmatprep.subr.mxu0 0.0
        %3672 = vmatpush1.msra.mxu0 0.0
        %3673 = vmatprep.subr.mxu0 0.0
        %3674 = vmatpush1.msra.mxu0 0.0
        %3675 = vmatprep.subr.mxu0 0.0
        %3676 = vmatpush1.msra.mxu0 0.0
        %3677 = vmatprep.subr.mxu0 0.0
        %3678 = vmatpush1.msra.mxu0 0.0
        %3679 = vmatprep.subr.mxu0 0.0
        %3680 = vmatpush1.msra.mxu0 0.0
        %3681 = vmatprep.subr.mxu0 0.0
        %3682 = vmatpush1.msra.mxu0 0.0
        %3683 = vmatprep.subr.mxu0 0.0
        %3684 = vmatpush1.msra.mxu0 0.0
        %3685 = vmatprep.subr.mxu0 0.0
        %3686 = vmatpush1.msra.mxu0 0.0
        %3687 = vmatprep.subr.mxu0 0.0
        %3688 = vmatpush1.msra.mxu0 0.0
        %3689 = vmatprep.subr.mxu0 0.0
        %3690 = vmatpush1.msra.mxu0 0.0
        %3691 = vmatprep.mubr.f32.mxu0 0.0
        %3692 = vmatmul.mubr.f32.gmra.mrb[0].mxu0 %v3622
        %v3693 = vpop.f32.mrb[0].mxu0
        %v3694 = vadd.f32 %v3619, %v3693
        %v3695 = vpop.f32.mrb[0].mxu0
        %3696 = vmatprep.mubr.f32.mxu0 0.0
        %3697 = vmatmul.mubr.f32.gmra.mrb[0].mxu0 %v3625
        %v3698 = vpop.f32.mrb[0].mxu0
        %v3699 = vadd.f32 %v3619, %v3698
        %v3700 = vpop.f32.mrb[0].mxu0
        %3701 = vdwg.mxu0
        %v3702 = vmax.f32 %v3694, 0.0
        %v3703 = vmax.f32 %v3699, 0.0
        %v3704 = vld [vmem:[%s780] sm:$0xff]
        %v3705 = vld [vmem:[%s780 + $0x8] sm:$0xff]
        %v3706 = vld [vmem:[%s780 + $0x10] sm:$0xff]
        %v3707 = vld [vmem:[%s780 + $0x18] sm:$0xff]
        %v3708 = vld [vmem:[%s780 + $0x20] sm:$0xff]
        %v3709 = vld [vmem:[%s780 + $0x28] sm:$0xff]
        %v3710 = vld [vmem:[%s780 + $0x30] sm:$0xff]
        %v3711 = vld [vmem:[%s780 + $0x38] sm:$0xff]
        %v3712 = vld [vmem:[%s780 + $0x40] sm:$0xff]
        %v3713 = vld [vmem:[%s780 + $0x48] sm:$0xff]
        %v3714 = vld [vmem:[%s780 + $0x50] sm:$0xff]
        %v3715 = vld [vmem:[%s780 + $0x58] sm:$0xff]
        %v3716 = vld [vmem:[%s780 + $0x60] sm:$0xff]
        %v3717 = vld [vmem:[%s780 + $0x68] sm:$0xff]
        %v3718 = vld [vmem:[%s780 + $0x70] sm:$0xff]
        %v3719 = vld [vmem:[%s780 + $0x78] sm:$0xff]
        %v3720 = vld [vmem:[%s783] sm:$0x1]
        %v3722 = vlaneseq
        %v3723 = vshrl.u32 %v3722, 7
        %v3724 = vsub.s32 0, %v3723
        %v3725 = vrot.slane %v3720, %v3724
        %3727 = vmatprep.subr.mxu0 0.0
        %3728 = vmatpush1.msra.mxu0 %v3704
        %3729 = vmatprep.subr.mxu0 0.0
        %3730 = vmatpush1.msra.mxu0 %v3705
        %3731 = vmatprep.subr.mxu0 0.0
        %3732 = vmatpush1.msra.mxu0 %v3706
        %3733 = vmatprep.subr.mxu0 0.0
        %3734 = vmatpush1.msra.mxu0 %v3707
        %3735 = vmatprep.subr.mxu0 0.0
        %3736 = vmatpush1.msra.mxu0 %v3708
        %3737 = vmatprep.subr.mxu0 0.0
        %3738 = vmatpush1.msra.mxu0 %v3709
        %3739 = vmatprep.subr.mxu0 0.0
        %3740 = vmatpush1.msra.mxu0 %v3710
        %3741 = vmatprep.subr.mxu0 0.0
        %3742 = vmatpush1.msra.mxu0 %v3711
        %3743 = vmatprep.subr.mxu0 0.0
        %3744 = vmatpush1.msra.mxu0 %v3712
        %3745 = vmatprep.subr.mxu0 0.0
        %3746 = vmatpush1.msra.mxu0 %v3713
        %3747 = vmatprep.subr.mxu0 0.0
        %3748 = vmatpush1.msra.mxu0 %v3714
        %3749 = vmatprep.subr.mxu0 0.0
        %3750 = vmatpush1.msra.mxu0 %v3715
        %3751 = vmatprep.subr.mxu0 0.0
        %3752 = vmatpush1.msra.mxu0 %v3716
        %3753 = vmatprep.subr.mxu0 0.0
        %3754 = vmatpush1.msra.mxu0 %v3717
        %3755 = vmatprep.subr.mxu0 0.0
        %3756 = vmatpush1.msra.mxu0 %v3718
        %3757 = vmatprep.subr.mxu0 0.0
        %3758 = vmatpush1.msra.mxu0 %v3719
        %3759 = vmatprep.subr.mxu0 0.0
        %3760 = vmatpush1.msra.mxu0 0.0
        %3761 = vmatprep.subr.mxu0 0.0
        %3762 = vmatpush1.msra.mxu0 0.0
        %3763 = vmatprep.subr.mxu0 0.0
        %3764 = vmatpush1.msra.mxu0 0.0
        %3765 = vmatprep.subr.mxu0 0.0
        %3766 = vmatpush1.msra.mxu0 0.0
        %3767 = vmatprep.subr.mxu0 0.0
        %3768 = vmatpush1.msra.mxu0 0.0
        %3769 = vmatprep.subr.mxu0 0.0
        %3770 = vmatpush1.msra.mxu0 0.0
        %3771 = vmatprep.subr.mxu0 0.0
        %3772 = vmatpush1.msra.mxu0 0.0
        %3773 = vmatprep.subr.mxu0 0.0
        %3774 = vmatpush1.msra.mxu0 0.0
        %3775 = vmatprep.subr.mxu0 0.0
        %3776 = vmatpush1.msra.mxu0 0.0
        %3777 = vmatprep.subr.mxu0 0.0
        %3778 = vmatpush1.msra.mxu0 0.0
        %3779 = vmatprep.subr.mxu0 0.0
        %3780 = vmatpush1.msra.mxu0 0.0
        %3781 = vmatprep.subr.mxu0 0.0
        %3782 = vmatpush1.msra.mxu0 0.0
        %3783 = vmatprep.subr.mxu0 0.0
        %3784 = vmatpush1.msra.mxu0 0.0
        %3785 = vmatprep.subr.mxu0 0.0
        %3786 = vmatpush1.msra.mxu0 0.0
        %3787 = vmatprep.subr.mxu0 0.0
        %3788 = vmatpush1.msra.mxu0 0.0
        %3789 = vmatprep.subr.mxu0 0.0
        %3790 = vmatpush1.msra.mxu0 0.0
        %3791 = vmatprep.mubr.f32.mxu0 0.0
        %3792 = vmatmul.mubr.f32.gmra.mrb[0].mxu0 %v3702
        %v3793 = vpop.f32.mrb[0].mxu0
        %v3794 = vadd.f32 %v3725, %v3793
        %v3795 = vpop.f32.mrb[0].mxu0
        %3796 = vmatprep.mubr.f32.mxu0 0.0
        %3797 = vmatmul.mubr.f32.gmra.mrb[0].mxu0 %v3703
        %v3798 = vpop.f32.mrb[0].mxu0
        %v3799 = vadd.f32 %v3725, %v3798
        %v3800 = vpop.f32.mrb[0].mxu0
        %3801 = vdwg.mxu0
        %v3802 = vadd.f32 %v3608, %v3794
        %v3803 = vadd.f32 %v3609, %v3799
        %v3804 = vld [vmem:[%s786] sm:$0x1]
        %v3805 = vld [vmem:[%s789] sm:$0x1]
        %v3806 = vsel %vm812, %v3802, 0.0
        %3807 = vadd.xlane.f32.xlu0 %v3806
        %v3808 = vpop.xlane.xlu0 %3807
        %v3809 = vsel %vm812, %v3803, 0.0
        %3810 = vadd.xlane.f32.xlu0 %v3809
        %v3811 = vpop.xlane.xlu0 %3810
        %v3812 = vmul.f32 %v3808, %v3573
        %v3813 = vmul.f32 %v3811, %v3573
        %v3814 = vsub.f32 %v3802, %v3812
        %v3815 = vsub.f32 %v3803, %v3813
        %v3816 = vmul.f32 %v3814, %v3814
        %v3817 = vmul.f32 %v3815, %v3815
        %v3818 = vsel %vm812, %v3816, 0.0
        %3819 = vadd.xlane.f32.xlu0 %v3818
        %v3820 = vpop.xlane.xlu0 %3819
        %v3821 = vsel %vm812, %v3817, 0.0
        %3822 = vadd.xlane.f32.xlu0 %v3821
        %v3823 = vpop.xlane.xlu0 %3822
        %v3824 = vmul.f32 %v3820, %v3573
        %v3825 = vmul.f32 %v3823, %v3573
        %v3826 = vadd.f32 %v3824, 1e-05
        %v3827 = vadd.f32 %v3825, 1e-05
        %v3828 = vrsqrt.pop %v3826
        %v3829 = vrsqrt.pop %v3827
        %v3830 = vmul.f32 %v3814, %v3828
        %v3831 = vmul.f32 %v3815, %v3829
        %v3833 = vlaneseq
        %v3834 = vshrl.u32 %v3833, 7
        %v3835 = vsub.s32 0, %v3834
        %v3836 = vrot.slane %v3804, %v3835
        %v3838 = vmul.f32 %v3830, %v3836
        %v3839 = vmul.f32 %v3831, %v3836
        %v3841 = vlaneseq
        %v3842 = vshrl.u32 %v3841, 7
        %v3843 = vsub.s32 0, %v3842
        %v3844 = vrot.slane %v3805, %v3843
        %v3846 = vadd.f32 %v3838, %v3844
        %v3847 = vadd.f32 %v3839, %v3844
        %3848 = vst.msk [vmem:[#allocation2] sm:$0xff] %vm812, %v3846
        %3849 = vst.msk [vmem:[#allocation2 + $0x8] sm:$0xff] %vm812, %v3847
        %p3850 = scmp.eq.s32.totalorder %s30, 1
        // Predicated region
        $region97: #{tpu_custom_call.1} parent=87 // pred_check
          %p3851 = pneg %p3850
        $region98: #{tpu_custom_call.1} parent=87 // pred_check_branch
          %3853 = sbr.rel (%p3851) target = $region100
        $region99: #{tpu_custom_call.1} parent=87 // pred_region
          %3854 = vst.msk [vmem:[#allocation7] sm:$0xff] %vm812, %v3846
          %3855 = vst.msk [vmem:[#allocation7 + $0x8] sm:$0xff] %vm812, %v3847
        $region100: #{tpu_custom_call.1} parent=87 // pred_fallthru
          _
        // Predicated region
        $region101: #{tpu_custom_call.1} parent=87 // pred_check
          %p3856 = pneg %p480
        $region102: #{tpu_custom_call.1} parent=87 // pred_check_branch
          %3858 = sbr.rel (%p3856) target = $region104
        $region103: #{tpu_custom_call.1} parent=87 // pred_region
          %s3860 = ssub.s32 256, 256
          %3861 = vsyncadd [#allocation6], %s3860
          %s3862 = sshll.u32 [#allocation7], 4
          %s3863 = int_to_ptr.vmem [resolvable:$true] %s3862
          %3868 = dma.vmem_to_hbm [thread:$0]  %s3863, 256, %s17, [#allocation6], 128, 128, 8
        $region104: #{tpu_custom_call.1} parent=87 // pred_fallthru
          _
        // Predicated region
        $region105: #{tpu_custom_call.1} parent=87 // pred_check
          %p3869 = pneg %p480
        $region106: #{tpu_custom_call.1} parent=87 // pred_check_branch
          %3871 = sbr.rel (%p3869) target = $region108
        $region107: #{tpu_custom_call.1} parent=87 // pred_region
          %3872 = dma.done [#allocation6], 256
        $region108: #{tpu_custom_call.1} parent=87 // pred_fallthru
          _
      $region88: #{tpu_custom_call.1} parent=5 // pred_fallthru
        _
      %p3873 = scmp.le.s32.totalorder 2, %s25
      // Predicated region
      $region109: #{tpu_custom_call.1} parent=5 // pred_check
        %p3874 = pneg %p3873
      $region110: #{tpu_custom_call.1} parent=5 // pred_check_branch
        %3876 = sbr.rel (%p3874) target = $region112
      $region111: #{tpu_custom_call.1} parent=5 // pred_region
        %s3877 = ssub.s32 %s25, 2
      $region112: #{tpu_custom_call.1} parent=5 // pred_fallthru
        _
    $region6: #{tpu_custom_call.1} parent=1 // loop_footer
      %s29 = sadd.s32 1, %s25
    $region7: #{tpu_custom_call.1} parent=1 // loop_footer_branch
      %24 = sbr.rel target = $region3
    $region8: #{tpu_custom_call.1} parent=1 // loop_exit
      _
    %3878 = vsyncpa [#allocation5], 1
    %s3879 = scalar_lea.sflag [#allocation5], 1
    %3880 = vsyncpa %s3879, 1
    %3881 = vsyncpa [#allocation6], 1
    %s3882 = scalar_lea.sflag [#allocation6], 1
    %3883 = vsyncpa %s3882, 1

</llo_original>
